<compile_context>
chip_gen: v7x
topology: tpu7x:2x2x1
jax: 0.10.0
libtpu: 0.0.40
codegen_flags: <defaults>
</compile_context>

<pallas_src>
import jax
import jax.numpy as jnp
import numpy as np
from jax.experimental import pallas as pl
from jax.experimental.pallas import tpu as pltpu

EPS = 1e-5  # nn.LayerNorm default


def _patch_expand_kernel(x_ref, w_ref, g_ref, b_ref, sr_ref, sb_ref, o_ref):
    # x_ref : (th, W, dim)     token-row tile (bf16 or f32)
    # w_ref : (2, dim, 2c)     expand weight split into its p1 halves (2c == dim)
    # g_ref : (1, 2c), b_ref: (1, 2c)   gamma/beta tiled over the two segments (f32)
    # sr_ref: (2c, 2), sb_ref: (2, 2c)  segment indicator matrix / its transpose (f32)
    # o_ref : (th, 2, W, 2c)   o[h, p1, w, p2*c + j]  (row-major == final output)
    th, W, dim = x_ref.shape
    two_c = o_ref.shape[-1]
    c = two_c // 2
    n = th * W
    inv_c = 1.0 / c

    x = x_ref[...].reshape(n, dim)          # merge leading (token) dims; lanes unchanged
    gamma = g_ref[...]                      # (1, 2c)
    beta = b_ref[...]                       # (1, 2c)
    seg_r = sr_ref[...]                     # (2c, 2)
    seg_b = sb_ref[...]                     # (2, 2c)

    halves = []
    for p1 in range(2):
        # Bias-free expand Linear on the MXU (bf16 in, f32 accumulate).
        y = jnp.dot(x, w_ref[p1], preferred_element_type=jnp.float32)            # (n, 2c)
        # Per-segment LayerNorm stats via MXU reduce / broadcast matmuls (f32).
        mean = jnp.dot(y, seg_r, preferred_element_type=jnp.float32) * inv_c     # (n, 2)
        mean_b = jnp.dot(mean, seg_b, preferred_element_type=jnp.float32)        # (n, 2c)
        d = y - mean_b
        var = jnp.dot(d * d, seg_r, preferred_element_type=jnp.float32) * inv_c  # (n, 2)
        inv_std = jax.lax.rsqrt(var + EPS)
        inv_std_b = jnp.dot(inv_std, seg_b, preferred_element_type=jnp.float32)  # (n, 2c)
        z = d * inv_std_b * gamma + beta
        halves.append(z.reshape(th, W, two_c)[:, None])                          # (th,1,W,2c)

    # Single full-block store of the pixel-shuffled, normalized tile.
    o_ref[...] = jnp.concatenate(halves, axis=1).astype(o_ref.dtype)             # (th,2,W,2c)


def _const_spec(shape, single_buffer):
    zeros = (0,) * len(shape)
    index_map = lambda i: zeros
    if single_buffer:
        # Constant block index -> 1 buffer is enough; saves VMEM (v7x budget).
        return pl.BlockSpec(shape, index_map, pipeline_mode=pl.Buffered(1))
    return pl.BlockSpec(shape, index_map)


def patch_expand(x, w_expand, gamma, beta, *,
                 max_tile_tokens=1024,
                 vmem_budget_bytes=48 * 1024 * 1024,
                 use_bf16_matmul=True,
                 out_dtype=None):
    """PatchExpand forward (dim_scale=2).

    x:          (B, H, W, dim) channels-last
    w_expand:   (dim, 2*dim)   == PyTorch nn.Linear(dim, 2*dim, bias=False).weight.T
    gamma,beta: (dim//2,)      LayerNorm affine parameters
    returns:    (B, 2H, 2W, dim//2)
    """
    B, H, W, dim = x.shape
    assert dim % 2 == 0, "PatchExpand needs an even dim"
    c = dim // 2
    two_c = dim                                # channels per p1 half == 2*c == dim
    out_dtype = x.dtype if out_dtype is None else out_dtype
    compute_dtype = jnp.bfloat16 if use_bf16_matmul else x.dtype

    # ---- operand prep (tiny vs. the main tensors; a real model would store w3 directly) ----
    w3 = jnp.transpose(w_expand.reshape(dim, 2, two_c), (1, 0, 2)).astype(compute_dtype)
    x_rows = x.astype(compute_dtype).reshape(B * H, W, dim)           # free row-major reshape
    g2 = jnp.tile(gamma.astype(jnp.float32).reshape(1, c), (1, 2))    # (1, 2c)
    b2 = jnp.tile(beta.astype(jnp.float32).reshape(1, c), (1, 2))     # (1, 2c)
    seg_r = (jnp.arange(two_c)[:, None] // c ==
             jnp.arange(2)[None, :]).astype(jnp.float32)              # (2c, 2)
    seg_b = seg_r.T                                                   # (2, 2c)

    # ---- tile-size selection under an explicit VMEM budget (v7x: 64 MiB/TC) ----
    m_rows = B * H
    bx = np.dtype(compute_dtype).itemsize
    bo = np.dtype(out_dtype).itemsize

    def footprint(th):
        x_blk = 2 * th * W * dim * bx            # input tile, double-buffered
        o_blk = 2 * th * 2 * W * two_c * bo      # output tile, double-buffered
        w_res = 2 * 2 * dim * two_c * bx         # weight, worst case 2 buffers
        tmp = 6 * th * W * two_c * 4             # in-kernel f32 temporaries
        misc = 64 * two_c * 4
        return x_blk + o_blk + w_res + tmp + misc

    divisors = [d for d in range(1, m_rows + 1) if m_rows % d == 0]
    cands = [d for d in divisors
             if d * W <= max_tile_tokens and footprint(d) <= vmem_budget_bytes]
    th = max(cands) if cands else 1
    if m_rows // th < 2:                         # keep >= 2 grid steps for megacore
        smaller = [d for d in cands if d < th]
        if smaller:
            th = max(smaller)
    grid = (m_rows // th,)

    vmem_limit = int(min(max(vmem_budget_bytes, int(footprint(th) * 1.2)),
                         128 * 1024 * 1024))

    def run(single_buffer_consts):
        in_specs = [
            pl.BlockSpec((th, W, dim), lambda i: (i, 0, 0)),
            _const_spec((2, dim, two_c), single_buffer_consts),
            _const_spec((1, two_c), single_buffer_consts),
            _const_spec((1, two_c), single_buffer_consts),
            _const_spec((two_c, 2), single_buffer_consts),
            _const_spec((2, two_c), single_buffer_consts),
        ]
        out_specs = pl.BlockSpec((th, 2, W, two_c), lambda i: (i, 0, 0, 0))
        return pl.pallas_call(
            _patch_expand_kernel,
            out_shape=jax.ShapeDtypeStruct((m_rows, 2, W, two_c), out_dtype),
            grid_spec=pltpu.PrefetchScalarGridSpec(
                num_scalar_prefetch=0,
                grid=grid,
                in_specs=in_specs,
                out_specs=out_specs),
            compiler_params=pltpu.CompilerParams(
                dimension_semantics=("parallel",),
                vmem_limit_bytes=vmem_limit),
        )(x_rows, w3, g2, b2, seg_r, seg_b)

    try:
        y = run(single_buffer_consts=True)
    except Exception:
        # pipeline_mode=pl.Buffered(1) unsupported by this JAX build: fall back to
        # default double buffering for the (small) constant-index operands.
        y = run(single_buffer_consts=False)

    # (B*H, 2, W, 2c) -> (B, 2H, 2W, c): pure row-major reshape (free under jit).
    return y.reshape(B, 2 * H, 2 * W, c)


def _reference(x, w_expand, gamma, beta, use_bf16_matmul=True):
    B, H, W, dim = x.shape
    c = dim // 2
    cd = jnp.bfloat16 if use_bf16_matmul else x.dtype
    y = jnp.dot(x.astype(cd).reshape(-1, dim), w_expand.astype(cd),
                preferred_element_type=jnp.float32)
    y = y.reshape(B, H, W, 2, 2, c)
    y = jnp.transpose(y, (0, 1, 3, 2, 4, 5)).reshape(B, 2 * H, 2 * W, c)
    mean = jnp.mean(y, axis=-1, keepdims=True)
    var = jnp.mean((y - mean) ** 2, axis=-1, keepdims=True)
    out = (y - mean) * jax.lax.rsqrt(var + EPS) * gamma + beta
    return out.astype(x.dtype)


if __name__ == "__main__":
    B, H, W, dim = 2, 8, 8, 64          # B*H = 16 token-rows, c = 32
    key = jax.random.PRNGKey(0)
    kx, kw, kg, kb = jax.random.split(key, 4)

    x = jax.random.normal(kx, (B, H, W, dim), dtype=jnp.float32)
    # nn.Linear(dim, 2*dim, bias=False): weight (2*dim, dim); we store it transposed.
    w_expand = (jax.random.normal(kw, (dim, 2 * dim), dtype=jnp.float32)
                * (1.0 / jnp.sqrt(dim)))
    gamma = 1.0 + 0.1 * jax.random.normal(kg, (dim // 2,), dtype=jnp.float32)
    beta = 0.05 * jax.random.normal(kb, (dim // 2,), dtype=jnp.float32)

    out = patch_expand(x, w_expand, gamma, beta)
    out = jax.block_until_ready(out)

    ref = _reference(x, w_expand, gamma, beta)
    assert out.shape == (B, 2 * H, 2 * W, dim // 2), out.shape
    err = float(jnp.max(jnp.abs(out - ref)))
    assert err < 1e-3, err
    print("KERNEL_OK")
</pallas_src>

<mosaic_0001>
module attributes {stable_mosaic.version = 11 : i64} {
  func.func @_patch_expand_kernel(%arg0: i32, %arg1: memref<8x8x64xbf16, #tpu.memory_space<vmem>>, %arg2: memref<2x64x64xbf16, #tpu.memory_space<vmem>>, %arg3: memref<1x64xf32, #tpu.memory_space<vmem>>, %arg4: memref<1x64xf32, #tpu.memory_space<vmem>>, %arg5: memref<64x2xf32, #tpu.memory_space<vmem>>, %arg6: memref<2x64xf32, #tpu.memory_space<vmem>>, %arg7: memref<8x2x8x64xf32, #tpu.memory_space<vmem>>) attributes {dimension_semantics = [#tpu.dimension_semantics<parallel>], iteration_bounds = array<i64: 2>, scalar_prefetch = 0 : i64, scratch_operands = 0 : i64, tpu.core_type = #tpu.core_type<tc>, window_params = [{transform_indices = @transform_0, window_bounds = array<i64: 8, 8, 64>}, {pipeline_mode = #tpu.pipeline_mode<synchronous>, transform_indices = @transform_1, window_bounds = array<i64: 2, 64, 64>}, {pipeline_mode = #tpu.pipeline_mode<synchronous>, transform_indices = @transform_2, window_bounds = array<i64: 1, 64>}, {pipeline_mode = #tpu.pipeline_mode<synchronous>, transform_indices = @transform_3, window_bounds = array<i64: 1, 64>}, {pipeline_mode = #tpu.pipeline_mode<synchronous>, transform_indices = @transform_4, window_bounds = array<i64: 64, 2>}, {pipeline_mode = #tpu.pipeline_mode<synchronous>, transform_indices = @transform_5, window_bounds = array<i64: 2, 64>}, {transform_indices = @transform_6, window_bounds = array<i64: 8, 2, 8, 64>}]} {
    %c0 = arith.constant 0 : index
    %c0_0 = arith.constant 0 : index
    %c0_1 = arith.constant 0 : index
    %0 = vector.load %arg1[%c0, %c0_0, %c0_1] : memref<8x8x64xbf16, #tpu.memory_space<vmem>>, vector<8x8x64xbf16>
    %1 = vector.shape_cast %0 : vector<8x8x64xbf16> to vector<64x64xbf16>
    %c0_2 = arith.constant 0 : index
    %c0_3 = arith.constant 0 : index
    %2 = vector.load %arg3[%c0_2, %c0_3] : memref<1x64xf32, #tpu.memory_space<vmem>>, vector<1x64xf32>
    %c0_4 = arith.constant 0 : index
    %c0_5 = arith.constant 0 : index
    %3 = vector.load %arg4[%c0_4, %c0_5] : memref<1x64xf32, #tpu.memory_space<vmem>>, vector<1x64xf32>
    %c0_6 = arith.constant 0 : index
    %c0_7 = arith.constant 0 : index
    %4 = vector.load %arg5[%c0_6, %c0_7] : memref<64x2xf32, #tpu.memory_space<vmem>>, vector<64x2xf32>
    %c0_8 = arith.constant 0 : index
    %c0_9 = arith.constant 0 : index
    %5 = vector.load %arg6[%c0_8, %c0_9] : memref<2x64xf32, #tpu.memory_space<vmem>>, vector<2x64xf32>
    %c0_10 = arith.constant 0 : index
    %c0_11 = arith.constant 0 : index
    %c0_12 = arith.constant 0 : index
    %6 = vector.load %arg2[%c0_10, %c0_11, %c0_12] : memref<2x64x64xbf16, #tpu.memory_space<vmem>>, vector<1x64x64xbf16>
    %7 = vector.shape_cast %6 : vector<1x64x64xbf16> to vector<64x64xbf16>
    %cst = arith.constant dense<0.000000e+00> : vector<64x64xf32>
    %8 = tpu.matmul %1, %7, %cst {dimension_numbers = #tpu.dot_dimension_numbers<[1], [0], [0], [1], [0, 0, 1, 1], [], []>} : vector<64x64xbf16>, vector<64x64xbf16>, vector<64x64xf32> -> vector<64x64xf32>
    %cst_13 = arith.constant dense<0.000000e+00> : vector<64x2xf32>
    %9 = tpu.matmul %8, %4, %cst_13 {dimension_numbers = #tpu.dot_dimension_numbers<[1], [0], [0], [1], [0, 0, 1, 1], [], []>} : vector<64x64xf32>, vector<64x2xf32>, vector<64x2xf32> -> vector<64x2xf32>
    %cst_14 = arith.constant 3.125000e-02 : f32
    %10 = vector.broadcast %cst_14 : f32 to vector<64x2xf32>
    %11 = arith.mulf %9, %10 : vector<64x2xf32>
    %cst_15 = arith.constant dense<0.000000e+00> : vector<64x64xf32>
    %12 = tpu.matmul %11, %5, %cst_15 {dimension_numbers = #tpu.dot_dimension_numbers<[1], [0], [0], [1], [0, 0, 1, 1], [], []>} : vector<64x2xf32>, vector<2x64xf32>, vector<64x64xf32> -> vector<64x64xf32>
    %13 = arith.subf %8, %12 : vector<64x64xf32>
    %14 = arith.mulf %13, %13 : vector<64x64xf32>
    %cst_16 = arith.constant dense<0.000000e+00> : vector<64x2xf32>
    %15 = tpu.matmul %14, %4, %cst_16 {dimension_numbers = #tpu.dot_dimension_numbers<[1], [0], [0], [1], [0, 0, 1, 1], [], []>} : vector<64x64xf32>, vector<64x2xf32>, vector<64x2xf32> -> vector<64x2xf32>
    %cst_17 = arith.constant 3.125000e-02 : f32
    %16 = vector.broadcast %cst_17 : f32 to vector<64x2xf32>
    %17 = arith.mulf %15, %16 : vector<64x2xf32>
    %cst_18 = arith.constant 9.99999974E-6 : f32
    %18 = vector.broadcast %cst_18 : f32 to vector<64x2xf32>
    %19 = arith.addf %17, %18 : vector<64x2xf32>
    %20 = math.rsqrt %19 : vector<64x2xf32>
    %cst_19 = arith.constant dense<0.000000e+00> : vector<64x64xf32>
    %21 = tpu.matmul %20, %5, %cst_19 {dimension_numbers = #tpu.dot_dimension_numbers<[1], [0], [0], [1], [0, 0, 1, 1], [], []>} : vector<64x2xf32>, vector<2x64xf32>, vector<64x64xf32> -> vector<64x64xf32>
    %22 = arith.mulf %13, %21 : vector<64x64xf32>
    %23 = vector.broadcast %2 : vector<1x64xf32> to vector<64x64xf32>
    %24 = arith.mulf %22, %23 : vector<64x64xf32>
    %25 = vector.broadcast %3 : vector<1x64xf32> to vector<64x64xf32>
    %26 = arith.addf %24, %25 : vector<64x64xf32>
    %27 = vector.shape_cast %26 : vector<64x64xf32> to vector<8x8x64xf32>
    %28 = vector.shape_cast %27 : vector<8x8x64xf32> to vector<8x1x8x64xf32>
    %c1 = arith.constant 1 : index
    %c0_20 = arith.constant 0 : index
    %c0_21 = arith.constant 0 : index
    %29 = vector.load %arg2[%c1, %c0_20, %c0_21] : memref<2x64x64xbf16, #tpu.memory_space<vmem>>, vector<1x64x64xbf16>
    %30 = vector.shape_cast %29 : vector<1x64x64xbf16> to vector<64x64xbf16>
    %cst_22 = arith.constant dense<0.000000e+00> : vector<64x64xf32>
    %31 = tpu.matmul %1, %30, %cst_22 {dimension_numbers = #tpu.dot_dimension_numbers<[1], [0], [0], [1], [0, 0, 1, 1], [], []>} : vector<64x64xbf16>, vector<64x64xbf16>, vector<64x64xf32> -> vector<64x64xf32>
    %cst_23 = arith.constant dense<0.000000e+00> : vector<64x2xf32>
    %32 = tpu.matmul %31, %4, %cst_23 {dimension_numbers = #tpu.dot_dimension_numbers<[1], [0], [0], [1], [0, 0, 1, 1], [], []>} : vector<64x64xf32>, vector<64x2xf32>, vector<64x2xf32> -> vector<64x2xf32>
    %cst_24 = arith.constant 3.125000e-02 : f32
    %33 = vector.broadcast %cst_24 : f32 to vector<64x2xf32>
    %34 = arith.mulf %32, %33 : vector<64x2xf32>
    %cst_25 = arith.constant dense<0.000000e+00> : vector<64x64xf32>
    %35 = tpu.matmul %34, %5, %cst_25 {dimension_numbers = #tpu.dot_dimension_numbers<[1], [0], [0], [1], [0, 0, 1, 1], [], []>} : vector<64x2xf32>, vector<2x64xf32>, vector<64x64xf32> -> vector<64x64xf32>
    %36 = arith.subf %31, %35 : vector<64x64xf32>
    %37 = arith.mulf %36, %36 : vector<64x64xf32>
    %cst_26 = arith.constant dense<0.000000e+00> : vector<64x2xf32>
    %38 = tpu.matmul %37, %4, %cst_26 {dimension_numbers = #tpu.dot_dimension_numbers<[1], [0], [0], [1], [0, 0, 1, 1], [], []>} : vector<64x64xf32>, vector<64x2xf32>, vector<64x2xf32> -> vector<64x2xf32>
    %cst_27 = arith.constant 3.125000e-02 : f32
    %39 = vector.broadcast %cst_27 : f32 to vector<64x2xf32>
    %40 = arith.mulf %38, %39 : vector<64x2xf32>
    %cst_28 = arith.constant 9.99999974E-6 : f32
    %41 = vector.broadcast %cst_28 : f32 to vector<64x2xf32>
    %42 = arith.addf %40, %41 : vector<64x2xf32>
    %43 = math.rsqrt %42 : vector<64x2xf32>
    %cst_29 = arith.constant dense<0.000000e+00> : vector<64x64xf32>
    %44 = tpu.matmul %43, %5, %cst_29 {dimension_numbers = #tpu.dot_dimension_numbers<[1], [0], [0], [1], [0, 0, 1, 1], [], []>} : vector<64x2xf32>, vector<2x64xf32>, vector<64x64xf32> -> vector<64x64xf32>
    %45 = arith.mulf %36, %44 : vector<64x64xf32>
    %46 = vector.broadcast %2 : vector<1x64xf32> to vector<64x64xf32>
    %47 = arith.mulf %45, %46 : vector<64x64xf32>
    %48 = vector.broadcast %3 : vector<1x64xf32> to vector<64x64xf32>
    %49 = arith.addf %47, %48 : vector<64x64xf32>
    %50 = vector.shape_cast %49 : vector<64x64xf32> to vector<8x8x64xf32>
    %51 = vector.shape_cast %50 : vector<8x8x64xf32> to vector<8x1x8x64xf32>
    %52 = tpu.concatenate %28, %51 in 1 : vector<8x1x8x64xf32>, vector<8x1x8x64xf32> -> vector<8x2x8x64xf32>
    %c0_30 = arith.constant 0 : index
    %c0_31 = arith.constant 0 : index
    %c0_32 = arith.constant 0 : index
    %c0_33 = arith.constant 0 : index
    %53 = vector.load %arg7[%c0_30, %c0_31, %c0_32, %c0_33] : memref<8x2x8x64xf32, #tpu.memory_space<vmem>>, vector<8x2x8x64xf32>
    tpu.vector_store %arg7[%c0_30, %c0_31, %c0_32, %c0_33], %52 {strides = array<i32>} : memref<8x2x8x64xf32, #tpu.memory_space<vmem>>, vector<8x2x8x64xf32>,
    return
  }
  func.func @transform_0(%arg0: i32) -> (i32, i32, i32) {
    %c0_i32 = arith.constant 0 : i32
    %c0_i32_0 = arith.constant 0 : i32
    %c0_i32_1 = arith.constant 0 : i32
    return %arg0, %c0_i32, %c0_i32_0 : i32, i32, i32
  }
  func.func @transform_1(%arg0: i32) -> (i32, i32, i32) {
    %c0_i32 = arith.constant 0 : i32
    %c0_i32_0 = arith.constant 0 : i32
    %c0_i32_1 = arith.constant 0 : i32
    %c0_i32_2 = arith.constant 0 : i32
    return %c0_i32, %c0_i32_0, %c0_i32_1 : i32, i32, i32
  }
  func.func @transform_2(%arg0: i32) -> (i32, i32) {
    %c0_i32 = arith.constant 0 : i32
    %c0_i32_0 = arith.constant 0 : i32
    %c0_i32_1 = arith.constant 0 : i32
    return %c0_i32, %c0_i32_0 : i32, i32
  }
  func.func @transform_3(%arg0: i32) -> (i32, i32) {
    %c0_i32 = arith.constant 0 : i32
    %c0_i32_0 = arith.constant 0 : i32
    %c0_i32_1 = arith.constant 0 : i32
    return %c0_i32, %c0_i32_0 : i32, i32
  }
  func.func @transform_4(%arg0: i32) -> (i32, i32) {
    %c0_i32 = arith.constant 0 : i32
    %c0_i32_0 = arith.constant 0 : i32
    %c0_i32_1 = arith.constant 0 : i32
    return %c0_i32, %c0_i32_0 : i32, i32
  }
  func.func @transform_5(%arg0: i32) -> (i32, i32) {
    %c0_i32 = arith.constant 0 : i32
    %c0_i32_0 = arith.constant 0 : i32
    %c0_i32_1 = arith.constant 0 : i32
    return %c0_i32, %c0_i32_0 : i32, i32
  }
  func.func @transform_6(%arg0: i32) -> (i32, i32, i32, i32) {
    %c0_i32 = arith.constant 0 : i32
    %c0_i32_0 = arith.constant 0 : i32
    %c0_i32_1 = arith.constant 0 : i32
    %c0_i32_2 = arith.constant 0 : i32
    return %arg0, %c0_i32, %c0_i32_0, %c0_i32_1 : i32, i32, i32, i32
  }
}

module attributes {stable_mosaic.version = 11 : i64} {
  func.func @_patch_expand_kernel(%arg0: i32, %arg1: memref<8x8x64xbf16, #tpu.memory_space<vmem>>, %arg2: memref<2x64x64xbf16, #tpu.memory_space<vmem>>, %arg3: memref<1x64xf32, #tpu.memory_space<vmem>>, %arg4: memref<1x64xf32, #tpu.memory_space<vmem>>, %arg5: memref<64x2xf32, #tpu.memory_space<vmem>>, %arg6: memref<2x64xf32, #tpu.memory_space<vmem>>, %arg7: memref<8x2x8x64xf32, #tpu.memory_space<vmem>>) attributes {dimension_semantics = [#tpu.dimension_semantics<parallel>], iteration_bounds = array<i64: 2>, scalar_prefetch = 0 : i64, scratch_operands = 0 : i64, tpu.core_type = #tpu.core_type<tc>, window_params = [{transform_indices = @transform_0, window_bounds = array<i64: 8, 8, 64>}, {pipeline_mode = #tpu.pipeline_mode<synchronous>, transform_indices = @transform_1, window_bounds = array<i64: 2, 64, 64>}, {pipeline_mode = #tpu.pipeline_mode<synchronous>, transform_indices = @transform_2, window_bounds = array<i64: 1, 64>}, {pipeline_mode = #tpu.pipeline_mode<synchronous>, transform_indices = @transform_3, window_bounds = array<i64: 1, 64>}, {pipeline_mode = #tpu.pipeline_mode<synchronous>, transform_indices = @transform_4, window_bounds = array<i64: 64, 2>}, {pipeline_mode = #tpu.pipeline_mode<synchronous>, transform_indices = @transform_5, window_bounds = array<i64: 2, 64>}, {transform_indices = @transform_6, window_bounds = array<i64: 8, 2, 8, 64>}]} {
    %c0 = arith.constant 0 : index
    %c0_0 = arith.constant 0 : index
    %c0_1 = arith.constant 0 : index
    %0 = vector.load %arg1[%c0, %c0_0, %c0_1] : memref<8x8x64xbf16, #tpu.memory_space<vmem>>, vector<8x8x64xbf16>
    %1 = vector.shape_cast %0 : vector<8x8x64xbf16> to vector<64x64xbf16>
    %c0_2 = arith.constant 0 : index
    %c0_3 = arith.constant 0 : index
    %2 = vector.load %arg3[%c0_2, %c0_3] : memref<1x64xf32, #tpu.memory_space<vmem>>, vector<1x64xf32>
    %c0_4 = arith.constant 0 : index
    %c0_5 = arith.constant 0 : index
    %3 = vector.load %arg4[%c0_4, %c0_5] : memref<1x64xf32, #tpu.memory_space<vmem>>, vector<1x64xf32>
    %c0_6 = arith.constant 0 : index
    %c0_7 = arith.constant 0 : index
    %4 = vector.load %arg5[%c0_6, %c0_7] : memref<64x2xf32, #tpu.memory_space<vmem>>, vector<64x2xf32>
    %c0_8 = arith.constant 0 : index
    %c0_9 = arith.constant 0 : index
    %5 = vector.load %arg6[%c0_8, %c0_9] : memref<2x64xf32, #tpu.memory_space<vmem>>, vector<2x64xf32>
    %c0_10 = arith.constant 0 : index
    %c0_11 = arith.constant 0 : index
    %c0_12 = arith.constant 0 : index
    %6 = vector.load %arg2[%c0_10, %c0_11, %c0_12] : memref<2x64x64xbf16, #tpu.memory_space<vmem>>, vector<1x64x64xbf16>
    %7 = vector.shape_cast %6 : vector<1x64x64xbf16> to vector<64x64xbf16>
    %cst = arith.constant dense<0.000000e+00> : vector<64x64xf32>
    %8 = tpu.matmul %1, %7, %cst {dimension_numbers = #tpu.dot_dimension_numbers<[1], [0], [0], [1], [0, 0, 1, 1], [], []>} : vector<64x64xbf16>, vector<64x64xbf16>, vector<64x64xf32> -> vector<64x64xf32>
    %cst_13 = arith.constant dense<0.000000e+00> : vector<64x2xf32>
    %9 = tpu.matmul %8, %4, %cst_13 {dimension_numbers = #tpu.dot_dimension_numbers<[1], [0], [0], [1], [0, 0, 1, 1], [], []>} : vector<64x64xf32>, vector<64x2xf32>, vector<64x2xf32> -> vector<64x2xf32>
    %cst_14 = arith.constant 3.125000e-02 : f32
    %10 = vector.broadcast %cst_14 : f32 to vector<64x2xf32>
    %11 = arith.mulf %9, %10 : vector<64x2xf32>
    %cst_15 = arith.constant dense<0.000000e+00> : vector<64x64xf32>
    %12 = tpu.matmul %11, %5, %cst_15 {dimension_numbers = #tpu.dot_dimension_numbers<[1], [0], [0], [1], [0, 0, 1, 1], [], []>} : vector<64x2xf32>, vector<2x64xf32>, vector<64x64xf32> -> vector<64x64xf32>
    %13 = arith.subf %8, %12 : vector<64x64xf32>
    %14 = arith.mulf %13, %13 : vector<64x64xf32>
    %cst_16 = arith.constant dense<0.000000e+00> : vector<64x2xf32>
    %15 = tpu.matmul %14, %4, %cst_16 {dimension_numbers = #tpu.dot_dimension_numbers<[1], [0], [0], [1], [0, 0, 1, 1], [], []>} : vector<64x64xf32>, vector<64x2xf32>, vector<64x2xf32> -> vector<64x2xf32>
    %cst_17 = arith.constant 3.125000e-02 : f32
    %16 = vector.broadcast %cst_17 : f32 to vector<64x2xf32>
    %17 = arith.mulf %15, %16 : vector<64x2xf32>
    %cst_18 = arith.constant 9.99999974E-6 : f32
    %18 = vector.broadcast %cst_18 : f32 to vector<64x2xf32>
    %19 = arith.addf %17, %18 : vector<64x2xf32>
    %20 = math.rsqrt %19 : vector<64x2xf32>
    %cst_19 = arith.constant dense<0.000000e+00> : vector<64x64xf32>
    %21 = tpu.matmul %20, %5, %cst_19 {dimension_numbers = #tpu.dot_dimension_numbers<[1], [0], [0], [1], [0, 0, 1, 1], [], []>} : vector<64x2xf32>, vector<2x64xf32>, vector<64x64xf32> -> vector<64x64xf32>
    %22 = arith.mulf %13, %21 : vector<64x64xf32>
    %23 = vector.broadcast %2 : vector<1x64xf32> to vector<64x64xf32>
    %24 = arith.mulf %22, %23 : vector<64x64xf32>
    %25 = vector.broadcast %3 : vector<1x64xf32> to vector<64x64xf32>
    %26 = arith.addf %24, %25 : vector<64x64xf32>
    %27 = vector.shape_cast %26 : vector<64x64xf32> to vector<8x8x64xf32>
    %28 = vector.shape_cast %27 : vector<8x8x64xf32> to vector<8x1x8x64xf32>
    %c1 = arith.constant 1 : index
    %c0_20 = arith.constant 0 : index
    %c0_21 = arith.constant 0 : index
    %29 = vector.load %arg2[%c1, %c0_20, %c0_21] : memref<2x64x64xbf16, #tpu.memory_space<vmem>>, vector<1x64x64xbf16>
    %30 = vector.shape_cast %29 : vector<1x64x64xbf16> to vector<64x64xbf16>
    %cst_22 = arith.constant dense<0.000000e+00> : vector<64x64xf32>
    %31 = tpu.matmul %1, %30, %cst_22 {dimension_numbers = #tpu.dot_dimension_numbers<[1], [0], [0], [1], [0, 0, 1, 1], [], []>} : vector<64x64xbf16>, vector<64x64xbf16>, vector<64x64xf32> -> vector<64x64xf32>
    %cst_23 = arith.constant dense<0.000000e+00> : vector<64x2xf32>
    %32 = tpu.matmul %31, %4, %cst_23 {dimension_numbers = #tpu.dot_dimension_numbers<[1], [0], [0], [1], [0, 0, 1, 1], [], []>} : vector<64x64xf32>, vector<64x2xf32>, vector<64x2xf32> -> vector<64x2xf32>
    %cst_24 = arith.constant 3.125000e-02 : f32
    %33 = vector.broadcast %cst_24 : f32 to vector<64x2xf32>
    %34 = arith.mulf %32, %33 : vector<64x2xf32>
    %cst_25 = arith.constant dense<0.000000e+00> : vector<64x64xf32>
    %35 = tpu.matmul %34, %5, %cst_25 {dimension_numbers = #tpu.dot_dimension_numbers<[1], [0], [0], [1], [0, 0, 1, 1], [], []>} : vector<64x2xf32>, vector<2x64xf32>, vector<64x64xf32> -> vector<64x64xf32>
    %36 = arith.subf %31, %35 : vector<64x64xf32>
    %37 = arith.mulf %36, %36 : vector<64x64xf32>
    %cst_26 = arith.constant dense<0.000000e+00> : vector<64x2xf32>
    %38 = tpu.matmul %37, %4, %cst_26 {dimension_numbers = #tpu.dot_dimension_numbers<[1], [0], [0], [1], [0, 0, 1, 1], [], []>} : vector<64x64xf32>, vector<64x2xf32>, vector<64x2xf32> -> vector<64x2xf32>
    %cst_27 = arith.constant 3.125000e-02 : f32
    %39 = vector.broadcast %cst_27 : f32 to vector<64x2xf32>
    %40 = arith.mulf %38, %39 : vector<64x2xf32>
    %cst_28 = arith.constant 9.99999974E-6 : f32
    %41 = vector.broadcast %cst_28 : f32 to vector<64x2xf32>
    %42 = arith.addf %40, %41 : vector<64x2xf32>
    %43 = math.rsqrt %42 : vector<64x2xf32>
    %cst_29 = arith.constant dense<0.000000e+00> : vector<64x64xf32>
    %44 = tpu.matmul %43, %5, %cst_29 {dimension_numbers = #tpu.dot_dimension_numbers<[1], [0], [0], [1], [0, 0, 1, 1], [], []>} : vector<64x2xf32>, vector<2x64xf32>, vector<64x64xf32> -> vector<64x64xf32>
    %45 = arith.mulf %36, %44 : vector<64x64xf32>
    %46 = vector.broadcast %2 : vector<1x64xf32> to vector<64x64xf32>
    %47 = arith.mulf %45, %46 : vector<64x64xf32>
    %48 = vector.broadcast %3 : vector<1x64xf32> to vector<64x64xf32>
    %49 = arith.addf %47, %48 : vector<64x64xf32>
    %50 = vector.shape_cast %49 : vector<64x64xf32> to vector<8x8x64xf32>
    %51 = vector.shape_cast %50 : vector<8x8x64xf32> to vector<8x1x8x64xf32>
    %52 = tpu.concatenate %28, %51 in 1 : vector<8x1x8x64xf32>, vector<8x1x8x64xf32> -> vector<8x2x8x64xf32>
    %c0_30 = arith.constant 0 : index
    %c0_31 = arith.constant 0 : index
    %c0_32 = arith.constant 0 : index
    %c0_33 = arith.constant 0 : index
    %53 = vector.load %arg7[%c0_30, %c0_31, %c0_32, %c0_33] : memref<8x2x8x64xf32, #tpu.memory_space<vmem>>, vector<8x2x8x64xf32>
    tpu.vector_store %arg7[%c0_30, %c0_31, %c0_32, %c0_33], %52 {strides = array<i32>} : memref<8x2x8x64xf32, #tpu.memory_space<vmem>>, vector<8x2x8x64xf32>,
    return
  }
  func.func @transform_0(%arg0: i32) -> (i32, i32, i32) {
    %c0_i32 = arith.constant 0 : i32
    %c0_i32_0 = arith.constant 0 : i32
    %c0_i32_1 = arith.constant 0 : i32
    return %arg0, %c0_i32, %c0_i32_0 : i32, i32, i32
  }
  func.func @transform_1(%arg0: i32) -> (i32, i32, i32) {
    %c0_i32 = arith.constant 0 : i32
    %c0_i32_0 = arith.constant 0 : i32
    %c0_i32_1 = arith.constant 0 : i32
    %c0_i32_2 = arith.constant 0 : i32
    return %c0_i32, %c0_i32_0, %c0_i32_1 : i32, i32, i32
  }
  func.func @transform_2(%arg0: i32) -> (i32, i32) {
    %c0_i32 = arith.constant 0 : i32
    %c0_i32_0 = arith.constant 0 : i32
    %c0_i32_1 = arith.constant 0 : i32
    return %c0_i32, %c0_i32_0 : i32, i32
  }
  func.func @transform_3(%arg0: i32) -> (i32, i32) {
    %c0_i32 = arith.constant 0 : i32
    %c0_i32_0 = arith.constant 0 : i32
    %c0_i32_1 = arith.constant 0 : i32
    return %c0_i32, %c0_i32_0 : i32, i32
  }
  func.func @transform_4(%arg0: i32) -> (i32, i32) {
    %c0_i32 = arith.constant 0 : i32
    %c0_i32_0 = arith.constant 0 : i32
    %c0_i32_1 = arith.constant 0 : i32
    return %c0_i32, %c0_i32_0 : i32, i32
  }
  func.func @transform_5(%arg0: i32) -> (i32, i32) {
    %c0_i32 = arith.constant 0 : i32
    %c0_i32_0 = arith.constant 0 : i32
    %c0_i32_1 = arith.constant 0 : i32
    return %c0_i32, %c0_i32_0 : i32, i32
  }
  func.func @transform_6(%arg0: i32) -> (i32, i32, i32, i32) {
    %c0_i32 = arith.constant 0 : i32
    %c0_i32_0 = arith.constant 0 : i32
    %c0_i32_1 = arith.constant 0 : i32
    %c0_i32_2 = arith.constant 0 : i32
    return %arg0, %c0_i32, %c0_i32_0, %c0_i32_1 : i32, i32, i32, i32
  }
}

</mosaic_0001>

<llo_original>
// kernel: tpu_custom_call.1
$region0: #{tpu_custom_call.1}
  #allocation0 [shape = 'u32[]', space=smem, size = 0x4, offset = 0x4, fixed_abs, tag = 'smem constant byte address 0x4 - core index']
  #allocation1 [shape = 'u32[144,128]{1,0:T(1,128)}', space=vmem, size = 0x12000, scoped, tag = 'internal scratch']
  %s0 = inlined_call_operand.vmem [shape: bf16[16,8,64], index: 0, kind: input, shape index: {}]
  %s1 = inlined_call_operand.hbm [shape: bf16[2,64,64], index: 1, kind: input, shape index: {}]
  %s2 = inlined_call_operand.vmem [shape: f32[1,64], index: 2, kind: input, shape index: {}]
  %s3 = inlined_call_operand.vmem [shape: f32[1,64], index: 3, kind: input, shape index: {}]
  %s4 = inlined_call_operand.vmem [shape: f32[64,2], index: 4, kind: input, shape index: {}]
  %s5 = inlined_call_operand.vmem [shape: f32[2,64], index: 5, kind: input, shape index: {}]
  %s6 = inlined_call_operand.hbm [shape: f32[16,2,8,64], index: 6, kind: output, shape index: {}]
  %s7 = sld [smem:[#allocation0]]
  $region61: #{tpu_custom_call.1} parent=0
    _
  %s9 = ssub.s32 1, %s7
  %s10 = scalar_select 0, %s9, %s7
  $region1: #{tpu_custom_call.1} parent=0
    #allocation2 [shape = 'u8[32768]{0}', space=vmem, size = 0x8000, scoped, tag = 'input window, operand 1, single buffered']
    #allocation3 [shape = 's32[2]{0}', space=sflag, size = 0x8, scoped, tag = 'scoped memory for tpu_custom_call.1']
    #allocation4 [shape = 's32[2]{0}', space=sflag, size = 0x8, scoped, tag = 'scoped memory for tpu_custom_call.1']
    #allocation5 [shape = 'u8[131072]{0}', space=vmem, size = 0x20000, scoped, tag = 'output window, operand 0']
    %11 = vsyncpa [#allocation3], 0
    %12 = vsyncpa [#allocation4], 0
    %s13 = scalar_lea.sflag [#allocation4], 1
    %14 = vsyncpa %s13, 0
    loop: start=0, step=1, limit=4
    $region2: #{tpu_custom_call.1} parent=1 // loop_pre_header
      _
    $region3: #{tpu_custom_call.1} parent=1 // loop_header
      %s16 = sphi 0, %s20
      %p17 = scmp.ge.s32.totalorder %s16, 4
      %s26 = sphi 0, %s28
      %s29 = sphi 0, %s26
      %s30 = sphi 0, %s29
      %s46 = sphi 0, %s30
      %s50 = sphi 0, %s50
      %s52 = sphi 0, %s50
      %s53 = sphi 0, %s52
      %s67 = sphi 0, %s53
      %s71 = sphi 0, %s71
      %s73 = sphi 0, %s71
      %s74 = sphi 0, %s73
      %s88 = sphi 0, %s74
      %s92 = sphi 0, %s92
      %s94 = sphi 0, %s92
      %s95 = sphi 0, %s94
      %s109 = sphi 0, %s95
      %s113 = sphi 0, %s113
      %s115 = sphi 0, %s113
      %s116 = sphi 0, %s115
      %s130 = sphi 0, %s116
      %s134 = sphi 0, %s134
      %s136 = sphi 0, %s134
      %s137 = sphi 0, %s136
      %s151 = sphi 0, %s137
      %s157 = sphi 0, %s159
      %s160 = sphi 0, %s157
      %s161 = sphi 0, %s160
      %s177 = sphi 0, %s161
    $region4: #{tpu_custom_call.1} parent=1 // loop_header_branch
      %19 = sbr.rel (%p17) target = $region8
    $region5: #{tpu_custom_call.1} parent=1 // loop_body
      %s21 = ssub.s32 %s16, 1
      %s22 = ssub.s32 %s16, 2
      %s23 = sadd.s32 %s16, 1
      %s24 = ssub.s32 %s16, %s23
      %p25 = scmp.eq.s32.totalorder %s24, 0
      %s27 = sadd.s32 %s26, 1
      %s28 = scalar_select %p25, %s26, %s27
      %p31 = pneg %p25
      %p32 = scmp.eq.s32.totalorder %s16, 1
      %p33 = por %p31, %p32
      %p34 = scmp.ne.s32.totalorder %s26, %s29
      %p35 = scmp.eq.s32.totalorder %s16, 0
      %p36 = por %p34, %p35
      %p37 = scmp.ne.s32.totalorder %s26, %s29
      %p38 = scmp.eq.s32.totalorder %s21, 1
      %p39 = por %p37, %p38
      %p40 = scmp.ne.s32.totalorder %s29, %s30
      %p41 = scmp.eq.s32.totalorder %s21, 0
      %p42 = por %p40, %p41
      %p43 = scmp.ne.s32.totalorder %s29, %s30
      %p44 = scmp.eq.s32.totalorder %s22, 1
      %p45 = por %p43, %p44
      %p47 = scmp.ne.s32.totalorder %s30, %s46
      %p48 = scmp.eq.s32.totalorder %s22, 0
      %p49 = por %p47, %p48
      %s51 = sadd.s32 %s50, 1
      %p54 = scmp.eq.s32.totalorder %s16, 1
      %p55 = scmp.ne.s32.totalorder %s50, %s52
      %p56 = scmp.eq.s32.totalorder %s16, 0
      %p57 = por %p55, %p56
      %p58 = scmp.ne.s32.totalorder %s50, %s52
      %p59 = scmp.eq.s32.totalorder %s21, 1
      %p60 = por %p58, %p59
      %p61 = scmp.ne.s32.totalorder %s52, %s53
      %p62 = scmp.eq.s32.totalorder %s21, 0
      %p63 = por %p61, %p62
      %p64 = scmp.ne.s32.totalorder %s52, %s53
      %p65 = scmp.eq.s32.totalorder %s22, 1
      %p66 = por %p64, %p65
      %p68 = scmp.ne.s32.totalorder %s53, %s67
      %p69 = scmp.eq.s32.totalorder %s22, 0
      %p70 = por %p68, %p69
      %s72 = sadd.s32 %s71, 1
      %p75 = scmp.eq.s32.totalorder %s16, 1
      %p76 = scmp.ne.s32.totalorder %s71, %s73
      %p77 = scmp.eq.s32.totalorder %s16, 0
      %p78 = por %p76, %p77
      %p79 = scmp.ne.s32.totalorder %s71, %s73
      %p80 = scmp.eq.s32.totalorder %s21, 1
      %p81 = por %p79, %p80
      %p82 = scmp.ne.s32.totalorder %s73, %s74
      %p83 = scmp.eq.s32.totalorder %s21, 0
      %p84 = por %p82, %p83
      %p85 = scmp.ne.s32.totalorder %s73, %s74
      %p86 = scmp.eq.s32.totalorder %s22, 1
      %p87 = por %p85, %p86
      %p89 = scmp.ne.s32.totalorder %s74, %s88
      %p90 = scmp.eq.s32.totalorder %s22, 0
      %p91 = por %p89, %p90
      %s93 = sadd.s32 %s92, 1
      %p96 = scmp.eq.s32.totalorder %s16, 1
      %p97 = scmp.ne.s32.totalorder %s92, %s94
      %p98 = scmp.eq.s32.totalorder %s16, 0
      %p99 = por %p97, %p98
      %p100 = scmp.ne.s32.totalorder %s92, %s94
      %p101 = scmp.eq.s32.totalorder %s21, 1
      %p102 = por %p100, %p101
      %p103 = scmp.ne.s32.totalorder %s94, %s95
      %p104 = scmp.eq.s32.totalorder %s21, 0
      %p105 = por %p103, %p104
      %p106 = scmp.ne.s32.totalorder %s94, %s95
      %p107 = scmp.eq.s32.totalorder %s22, 1
      %p108 = por %p106, %p107
      %p110 = scmp.ne.s32.totalorder %s95, %s109
      %p111 = scmp.eq.s32.totalorder %s22, 0
      %p112 = por %p110, %p111
      %s114 = sadd.s32 %s113, 1
      %p117 = scmp.eq.s32.totalorder %s16, 1
      %p118 = scmp.ne.s32.totalorder %s113, %s115
      %p119 = scmp.eq.s32.totalorder %s16, 0
      %p120 = por %p118, %p119
      %p121 = scmp.ne.s32.totalorder %s113, %s115
      %p122 = scmp.eq.s32.totalorder %s21, 1
      %p123 = por %p121, %p122
      %p124 = scmp.ne.s32.totalorder %s115, %s116
      %p125 = scmp.eq.s32.totalorder %s21, 0
      %p126 = por %p124, %p125
      %p127 = scmp.ne.s32.totalorder %s115, %s116
      %p128 = scmp.eq.s32.totalorder %s22, 1
      %p129 = por %p127, %p128
      %p131 = scmp.ne.s32.totalorder %s116, %s130
      %p132 = scmp.eq.s32.totalorder %s22, 0
      %p133 = por %p131, %p132
      %s135 = sadd.s32 %s134, 1
      %p138 = scmp.eq.s32.totalorder %s16, 1
      %p139 = scmp.ne.s32.totalorder %s134, %s136
      %p140 = scmp.eq.s32.totalorder %s16, 0
      %p141 = por %p139, %p140
      %p142 = scmp.ne.s32.totalorder %s134, %s136
      %p143 = scmp.eq.s32.totalorder %s21, 1
      %p144 = por %p142, %p143
      %p145 = scmp.ne.s32.totalorder %s136, %s137
      %p146 = scmp.eq.s32.totalorder %s21, 0
      %p147 = por %p145, %p146
      %p148 = scmp.ne.s32.totalorder %s136, %s137
      %p149 = scmp.eq.s32.totalorder %s22, 1
      %p150 = por %p148, %p149
      %p152 = scmp.ne.s32.totalorder %s137, %s151
      %p153 = scmp.eq.s32.totalorder %s22, 0
      %p154 = por %p152, %p153
      %s155 = ssub.s32 %s16, %s23
      %p156 = scmp.eq.s32.totalorder %s155, 0
      %s158 = sadd.s32 %s157, 1
      %s159 = scalar_select %p156, %s157, %s158
      %p162 = pneg %p156
      %p163 = scmp.eq.s32.totalorder %s16, 1
      %p164 = por %p162, %p163
      %p165 = scmp.ne.s32.totalorder %s157, %s160
      %p166 = scmp.eq.s32.totalorder %s16, 0
      %p167 = por %p165, %p166
      %p168 = scmp.ne.s32.totalorder %s157, %s160
      %p169 = scmp.eq.s32.totalorder %s21, 1
      %p170 = por %p168, %p169
      %p171 = scmp.ne.s32.totalorder %s160, %s161
      %p172 = scmp.eq.s32.totalorder %s21, 0
      %p173 = por %p171, %p172
      %p174 = scmp.ne.s32.totalorder %s160, %s161
      %p175 = scmp.eq.s32.totalorder %s22, 1
      %p176 = por %p174, %p175
      %p178 = scmp.ne.s32.totalorder %s161, %s177
      %p179 = scmp.eq.s32.totalorder %s22, 0
      %p180 = por %p178, %p179
      %p181 = scmp.le.s32.totalorder 1, %s16
      %p182 = scmp.lt.s32.totalorder %s16, 3
      %p183 = pnand %p181, %p182
      %p184 = pneg %p183
      // Predicated region
      $region9: #{tpu_custom_call.1} parent=5 // pred_check
        _
      $region10: #{tpu_custom_call.1} parent=5 // pred_check_branch
        %186 = sbr.rel (%p183) target = $region12
      $region11: #{tpu_custom_call.1} parent=5 // pred_region
        %s187 = ssub.s32 %s16, 1
        // Predicated region
        $region13: #{tpu_custom_call.1} parent=11 // pred_check
          %p188 = pneg %p63
        $region14: #{tpu_custom_call.1} parent=11 // pred_check_branch
          %190 = sbr.rel (%p188) target = $region16
        $region15: #{tpu_custom_call.1} parent=11 // pred_region
          %s192 = ssub.s32 1024, 1024
          %193 = vsyncadd [#allocation3], %s192
          %s194 = sshll.u32 [#allocation2], 4
          %s195 = int_to_ptr.vmem [resolvable:$true] %s194
          %200 = dma.hbm_to_vmem [thread:$0]  %s1, 1024, %s195, [#allocation3], 64, 64, 4
        $region16: #{tpu_custom_call.1} parent=11 // pred_fallthru
          _
        // Predicated region
        $region17: #{tpu_custom_call.1} parent=11 // pred_check
          %p201 = pneg %p84
        $region18: #{tpu_custom_call.1} parent=11 // pred_check_branch
          %203 = sbr.rel (%p201) target = $region20
        $region19: #{tpu_custom_call.1} parent=11 // pred_region
          _
        $region20: #{tpu_custom_call.1} parent=11 // pred_fallthru
          _
        // Predicated region
        $region21: #{tpu_custom_call.1} parent=11 // pred_check
          %p204 = pneg %p105
        $region22: #{tpu_custom_call.1} parent=11 // pred_check_branch
          %206 = sbr.rel (%p204) target = $region24
        $region23: #{tpu_custom_call.1} parent=11 // pred_region
          _
        $region24: #{tpu_custom_call.1} parent=11 // pred_fallthru
          _
        // Predicated region
        $region25: #{tpu_custom_call.1} parent=11 // pred_check
          %p207 = pneg %p126
        $region26: #{tpu_custom_call.1} parent=11 // pred_check_branch
          %209 = sbr.rel (%p207) target = $region28
        $region27: #{tpu_custom_call.1} parent=11 // pred_region
          _
        $region28: #{tpu_custom_call.1} parent=11 // pred_fallthru
          _
        // Predicated region
        $region29: #{tpu_custom_call.1} parent=11 // pred_check
          %p210 = pneg %p147
        $region30: #{tpu_custom_call.1} parent=11 // pred_check_branch
          %212 = sbr.rel (%p210) target = $region32
        $region31: #{tpu_custom_call.1} parent=11 // pred_region
          _
        $region32: #{tpu_custom_call.1} parent=11 // pred_fallthru
          _
      $region12: #{tpu_custom_call.1} parent=5 // pred_fallthru
        _
      %p213 = scmp.lt.s32.totalorder %s16, 2
      // Predicated region
      $region33: #{tpu_custom_call.1} parent=5 // pred_check
        %p214 = pneg %p213
      $region34: #{tpu_custom_call.1} parent=5 // pred_check_branch
        %216 = sbr.rel (%p214) target = $region36
      $region35: #{tpu_custom_call.1} parent=5 // pred_region
        // Predicated region
        $region37: #{tpu_custom_call.1} parent=35 // pred_check
          %p217 = pneg %p36
        $region38: #{tpu_custom_call.1} parent=35 // pred_check_branch
          %219 = sbr.rel (%p217) target = $region40
        $region39: #{tpu_custom_call.1} parent=35 // pred_region
          %s220 = smul.u32 8, %s16
          %p221 = scmp.lt.s32.totalorder %s220, 15
          %s222 = scalar_select %p221, %s220, 15
          %s223 = smul.addr %s222, 4
          %s224 = scalar_lea.vmem %s0, %s223
          %s225 = smul.u32 8, %s16
        $region40: #{tpu_custom_call.1} parent=35 // pred_fallthru
          _
      $region36: #{tpu_custom_call.1} parent=5 // pred_fallthru
        _
      %p226 = scmp.le.s32.totalorder 1, %s16
      %p227 = scmp.lt.s32.totalorder %s16, 3
      %p228 = pnand %p226, %p227
      %p229 = pneg %p228
      // Predicated region
      $region41: #{tpu_custom_call.1} parent=5 // pred_check
        _
      $region42: #{tpu_custom_call.1} parent=5 // pred_check_branch
        %231 = sbr.rel (%p228) target = $region44
      $region43: #{tpu_custom_call.1} parent=5 // pred_region
        %s232 = ssub.s32 %s16, 1
        // Predicated region
        $region45: #{tpu_custom_call.1} parent=43 // pred_check
          %p233 = pneg %p63
        $region46: #{tpu_custom_call.1} parent=43 // pred_check_branch
          %235 = sbr.rel (%p233) target = $region48
        $region47: #{tpu_custom_call.1} parent=43 // pred_region
          %236 = dma.done [#allocation3], 1024
        $region48: #{tpu_custom_call.1} parent=43 // pred_fallthru
          _
        %s237 = smul.u32 8, %s21
        %p238 = scmp.lt.s32.totalorder %s237, 15
        %s239 = scalar_select %p238, %s237, 15
        %s240 = smul.addr %s239, 4
        %s241 = scalar_lea.vmem %s0, %s240
        %p242 = pneg %p42
        %p243 = pneg %p39
        %p244 = pneg %p63
        %p245 = pneg %p60
        %p246 = pneg %p84
        %p247 = pneg %p81
        %p248 = pneg %p105
        %p249 = pneg %p102
        %p250 = pneg %p126
        %p251 = pneg %p123
        %p252 = pneg %p147
        %p253 = pneg %p144
        %p254 = pneg %p173
        %p255 = pneg %p170
        %s256 = sand.u32 %s160, 1
        %s257 = scalar_lea.sflag [#allocation4], %s256
        %s258 = sand.u32 %s160, 1
        %s259 = smul.addr %s258, 128
        %s260 = scalar_lea.vmem [#allocation5], %s259
        %s261 = smul.u32 8, %s21
        %p262 = scmp.lt.s32.totalorder %s261, 15
        %s263 = scalar_select %p262, %s261, 15
        %s264 = smul.addr %s263, 4
        %s265 = scalar_lea.vmem %s0, %s264
        %s266 = smul.u32 8, %s21
        %s267 = smul.u32 8, %s21
        %v269 = vld [vmem:[%s265] sm:$0xf]
        %v270 = vld [vmem:[%s265 + $0x4] sm:$0xf]
        %v271 = vld [vmem:[%s265 + $0x8] sm:$0xf]
        %v272 = vld [vmem:[%s265 + $0xc] sm:$0xf]
        %v273 = vld [vmem:[%s265 + $0x10] sm:$0xf]
        %v274 = vld [vmem:[%s265 + $0x14] sm:$0xf]
        %v275 = vld [vmem:[%s265 + $0x18] sm:$0xf]
        %v276 = vld [vmem:[%s265 + $0x1c] sm:$0xf]
        %v277 = vld [vmem:[%s2] sm:$0x1]
        %v278 = vld [vmem:[%s3] sm:$0x1]
        %v279 = vld [vmem:[%s4] sm:$0xff]
        %v280 = vld [vmem:[%s4 + $0x8] sm:$0xff]
        %v281 = vld [vmem:[%s4 + $0x10] sm:$0xff]
        %v282 = vld [vmem:[%s4 + $0x18] sm:$0xff]
        %v283 = vld [vmem:[%s4 + $0x20] sm:$0xff]
        %v284 = vld [vmem:[%s4 + $0x28] sm:$0xff]
        %v285 = vld [vmem:[%s4 + $0x30] sm:$0xff]
        %v286 = vld [vmem:[%s4 + $0x38] sm:$0xff]
        %v287 = vld [vmem:[%s5] sm:$0x3]
        %v288 = vld [vmem:[#allocation2] sm:$0xf]
        %v289 = vld [vmem:[#allocation2 + $0x4] sm:$0xf]
        %v290 = vld [vmem:[#allocation2 + $0x8] sm:$0xf]
        %v291 = vld [vmem:[#allocation2 + $0xc] sm:$0xf]
        %v292 = vld [vmem:[#allocation2 + $0x10] sm:$0xf]
        %v293 = vld [vmem:[#allocation2 + $0x14] sm:$0xf]
        %v294 = vld [vmem:[#allocation2 + $0x18] sm:$0xf]
        %v295 = vld [vmem:[#allocation2 + $0x1c] sm:$0xf]
        %v304 = vunpack.c.l.b16 %v269
        %v305 = vunpack.c.l.b16 %v270
        %v306 = vunpack.c.l.b16 %v271
        %v307 = vunpack.c.l.b16 %v272
        %v308 = vunpack.c.l.b16 %v273
        %v309 = vunpack.c.l.b16 %v274
        %v310 = vunpack.c.l.b16 %v275
        %v311 = vunpack.c.l.b16 %v276
        %v312 = vpack.c.b16 %v305, %v304
        %v313 = vpack.c.b16 %v307, %v306
        %v314 = vpack.c.b16 %v309, %v308
        %v315 = vpack.c.b16 %v311, %v310
        %v324 = vunpack.c.l.b16 %v288
        %v325 = vunpack.c.l.b16 %v289
        %v326 = vunpack.c.l.b16 %v290
        %v327 = vunpack.c.l.b16 %v291
        %v328 = vunpack.c.l.b16 %v292
        %v329 = vunpack.c.l.b16 %v293
        %v330 = vunpack.c.l.b16 %v294
        %v331 = vunpack.c.l.b16 %v295
        %v332 = vpack.c.b16 %v325, %v324
        %v333 = vpack.c.b16 %v327, %v326
        %v334 = vpack.c.b16 %v329, %v328
        %v335 = vpack.c.b16 %v331, %v330
        %vm340 = vcmask 523264
        %v342 = vsel %vm340, %v312, 0
        %v345 = vsel %vm340, %v313, 0
        %v348 = vsel %vm340, %v314, 0
        %v351 = vsel %vm340, %v315, 0
        %353 = vmatprep.subr.bf16.mxu0 0
        %354 = vmatpush1.bf16.msra.mxu0 %v332
        %355 = vmatprep.subr.bf16.mxu0 0
        %356 = vmatpush1.bf16.msra.mxu0 %v333
        %357 = vmatprep.subr.bf16.mxu0 0
        %358 = vmatpush1.bf16.msra.mxu0 %v334
        %359 = vmatprep.subr.bf16.mxu0 0
        %360 = vmatpush1.bf16.msra.mxu0 %v335
        %361 = vmatprep.subr.bf16.mxu0 0
        %362 = vmatpush1.bf16.msra.mxu0 0
        %363 = vmatprep.subr.bf16.mxu0 0
        %364 = vmatpush1.bf16.msra.mxu0 0
        %365 = vmatprep.subr.bf16.mxu0 0
        %366 = vmatpush1.bf16.msra.mxu0 0
        %367 = vmatprep.subr.bf16.mxu0 0
        %368 = vmatpush1.bf16.msra.mxu0 0
        %369 = vmatprep.subr.bf16.mxu0 0
        %370 = vmatpush1.bf16.msra.mxu0 0
        %371 = vmatprep.subr.bf16.mxu0 0
        %372 = vmatpush1.bf16.msra.mxu0 0
        %373 = vmatprep.subr.bf16.mxu0 0
        %374 = vmatpush1.bf16.msra.mxu0 0
        %375 = vmatprep.subr.bf16.mxu0 0
        %376 = vmatpush1.bf16.msra.mxu0 0
        %377 = vmatprep.subr.bf16.mxu0 0
        %378 = vmatpush1.bf16.msra.mxu0 0
        %379 = vmatprep.subr.bf16.mxu0 0
        %380 = vmatpush1.bf16.msra.mxu0 0
        %381 = vmatprep.subr.bf16.mxu0 0
        %382 = vmatpush1.bf16.msra.mxu0 0
        %383 = vmatprep.subr.bf16.mxu0 0
        %384 = vmatpush1.bf16.msra.mxu0 0
        %385 = vmatprep.mubr.bf16.mxu0 0
        %386 = vmatmul.mubr.bf16.gmra.mrb[0].mxu0 %v342
        %v387 = vpop.f32.mrb[0].mxu0
        %v388 = vadd.f32 0.0, %v387
        %v389 = vpop.f32.mrb[0].mxu0
        %v390 = vpop.f32.mrb[0].mxu0
        %v391 = vadd.f32 0.0, %v390
        %v392 = vpop.f32.mrb[0].mxu0
        %393 = vmatprep.mubr.bf16.mxu0 0
        %394 = vmatmul.mubr.bf16.gmra.mrb[0].mxu0 %v345
        %v395 = vpop.f32.mrb[0].mxu0
        %v396 = vadd.f32 0.0, %v395
        %v397 = vpop.f32.mrb[0].mxu0
        %v398 = vpop.f32.mrb[0].mxu0
        %v399 = vadd.f32 0.0, %v398
        %v400 = vpop.f32.mrb[0].mxu0
        %401 = vmatprep.mubr.bf16.mxu0 0
        %402 = vmatmul.mubr.bf16.gmra.mrb[0].mxu0 %v348
        %v403 = vpop.f32.mrb[0].mxu0
        %v404 = vadd.f32 0.0, %v403
        %v405 = vpop.f32.mrb[0].mxu0
        %v406 = vpop.f32.mrb[0].mxu0
        %v407 = vadd.f32 0.0, %v406
        %v408 = vpop.f32.mrb[0].mxu0
        %409 = vmatprep.mubr.bf16.mxu0 0
        %410 = vmatmul.mubr.bf16.gmra.mrb[0].mxu0 %v351
        %v411 = vpop.f32.mrb[0].mxu0
        %v412 = vadd.f32 0.0, %v411
        %v413 = vpop.f32.mrb[0].mxu0
        %v414 = vpop.f32.mrb[0].mxu0
        %v415 = vadd.f32 0.0, %v414
        %v416 = vpop.f32.mrb[0].mxu0
        %417 = vdwg.mxu0
        %v419 = vsel %vm340, %v388, 0
        %v422 = vsel %vm340, %v391, 0
        %v425 = vsel %vm340, %v396, 0
        %v428 = vsel %vm340, %v399, 0
        %v431 = vsel %vm340, %v404, 0
        %v434 = vsel %vm340, %v407, 0
        %v437 = vsel %vm340, %v412, 0
        %v440 = vsel %vm340, %v415, 0
        %442 = vmatprep.subr.mxu0 0.0
        %443 = vmatpush1.msra.mxu0 %v279
        %444 = vmatprep.subr.mxu0 0.0
        %445 = vmatpush1.msra.mxu0 %v280
        %446 = vmatprep.subr.mxu0 0.0
        %447 = vmatpush1.msra.mxu0 %v281
        %448 = vmatprep.subr.mxu0 0.0
        %449 = vmatpush1.msra.mxu0 %v282
        %450 = vmatprep.subr.mxu0 0.0
        %451 = vmatpush1.msra.mxu0 %v283
        %452 = vmatprep.subr.mxu0 0.0
        %453 = vmatpush1.msra.mxu0 %v284
        %454 = vmatprep.subr.mxu0 0.0
        %455 = vmatpush1.msra.mxu0 %v285
        %456 = vmatprep.subr.mxu0 0.0
        %457 = vmatpush1.msra.mxu0 %v286
        %458 = vmatprep.subr.mxu0 0.0
        %459 = vmatpush1.msra.mxu0 0.0
        %460 = vmatprep.subr.mxu0 0.0
        %461 = vmatpush1.msra.mxu0 0.0
        %462 = vmatprep.subr.mxu0 0.0
        %463 = vmatpush1.msra.mxu0 0.0
        %464 = vmatprep.subr.mxu0 0.0
        %465 = vmatpush1.msra.mxu0 0.0
        %466 = vmatprep.subr.mxu0 0.0
        %467 = vmatpush1.msra.mxu0 0.0
        %468 = vmatprep.subr.mxu0 0.0
        %469 = vmatpush1.msra.mxu0 0.0
        %470 = vmatprep.subr.mxu0 0.0
        %471 = vmatpush1.msra.mxu0 0.0
        %472 = vmatprep.subr.mxu0 0.0
        %473 = vmatpush1.msra.mxu0 0.0
        %474 = vmatprep.subr.mxu0 0.0
        %475 = vmatpush1.msra.mxu0 0.0
        %476 = vmatprep.subr.mxu0 0.0
        %477 = vmatpush1.msra.mxu0 0.0
        %478 = vmatprep.subr.mxu0 0.0
        %479 = vmatpush1.msra.mxu0 0.0
        %480 = vmatprep.subr.mxu0 0.0
        %481 = vmatpush1.msra.mxu0 0.0
        %482 = vmatprep.subr.mxu0 0.0
        %483 = vmatpush1.msra.mxu0 0.0
        %484 = vmatprep.subr.mxu0 0.0
        %485 = vmatpush1.msra.mxu0 0.0
        %486 = vmatprep.subr.mxu0 0.0
        %487 = vmatpush1.msra.mxu0 0.0
        %488 = vmatprep.subr.mxu0 0.0
        %489 = vmatpush1.msra.mxu0 0.0
        %490 = vmatprep.subr.mxu0 0.0
        %491 = vmatpush1.msra.mxu0 0.0
        %492 = vmatprep.subr.mxu0 0.0
        %493 = vmatpush1.msra.mxu0 0.0
        %494 = vmatprep.subr.mxu0 0.0
        %495 = vmatpush1.msra.mxu0 0.0
        %496 = vmatprep.subr.mxu0 0.0
        %497 = vmatpush1.msra.mxu0 0.0
        %498 = vmatprep.subr.mxu0 0.0
        %499 = vmatpush1.msra.mxu0 0.0
        %500 = vmatprep.subr.mxu0 0.0
        %501 = vmatpush1.msra.mxu0 0.0
        %502 = vmatprep.subr.mxu0 0.0
        %503 = vmatpush1.msra.mxu0 0.0
        %504 = vmatprep.subr.mxu0 0.0
        %505 = vmatpush1.msra.mxu0 0.0
        %506 = vmatprep.mubr.f32.mxu0 0.0
        %507 = vmatmul.mubr.f32.gmra.mrb[0].mxu0 %v419
        %v508 = vpop.f32.mrb[0].mxu0
        %v509 = vadd.f32 0.0, %v508
        %v510 = vpop.f32.mrb[0].mxu0
        %511 = vmatprep.mubr.f32.mxu0 0.0
        %512 = vmatmul.mubr.f32.gmra.mrb[0].mxu0 %v422
        %v513 = vpop.f32.mrb[0].mxu0
        %v514 = vadd.f32 0.0, %v513
        %v515 = vpop.f32.mrb[0].mxu0
        %516 = vmatprep.mubr.f32.mxu0 0.0
        %517 = vmatmul.mubr.f32.gmra.mrb[0].mxu0 %v425
        %v518 = vpop.f32.mrb[0].mxu0
        %v519 = vadd.f32 0.0, %v518
        %v520 = vpop.f32.mrb[0].mxu0
        %521 = vmatprep.mubr.f32.mxu0 0.0
        %522 = vmatmul.mubr.f32.gmra.mrb[0].mxu0 %v428
        %v523 = vpop.f32.mrb[0].mxu0
        %v524 = vadd.f32 0.0, %v523
        %v525 = vpop.f32.mrb[0].mxu0
        %526 = vmatprep.mubr.f32.mxu0 0.0
        %527 = vmatmul.mubr.f32.gmra.mrb[0].mxu0 %v431
        %v528 = vpop.f32.mrb[0].mxu0
        %v529 = vadd.f32 0.0, %v528
        %v530 = vpop.f32.mrb[0].mxu0
        %531 = vmatprep.mubr.f32.mxu0 0.0
        %532 = vmatmul.mubr.f32.gmra.mrb[0].mxu0 %v434
        %v533 = vpop.f32.mrb[0].mxu0
        %v534 = vadd.f32 0.0, %v533
        %v535 = vpop.f32.mrb[0].mxu0
        %536 = vmatprep.mubr.f32.mxu0 0.0
        %537 = vmatmul.mubr.f32.gmra.mrb[0].mxu0 %v437
        %v538 = vpop.f32.mrb[0].mxu0
        %v539 = vadd.f32 0.0, %v538
        %v540 = vpop.f32.mrb[0].mxu0
        %541 = vmatprep.mubr.f32.mxu0 0.0
        %542 = vmatmul.mubr.f32.gmra.mrb[0].mxu0 %v440
        %v543 = vpop.f32.mrb[0].mxu0
        %v544 = vadd.f32 0.0, %v543
        %v545 = vpop.f32.mrb[0].mxu0
        %546 = vdwg.mxu0
        %v547 = vmul.f32 %v509, 0.03125
        %v548 = vmul.f32 %v514, 0.03125
        %v549 = vmul.f32 %v519, 0.03125
        %v550 = vmul.f32 %v524, 0.03125
        %v551 = vmul.f32 %v529, 0.03125
        %v552 = vmul.f32 %v534, 0.03125
        %v553 = vmul.f32 %v539, 0.03125
        %v554 = vmul.f32 %v544, 0.03125
        %vm555 = vcmask 15360
        %v557 = vsel %vm555, %v547, 0
        %v560 = vsel %vm555, %v548, 0
        %v563 = vsel %vm555, %v549, 0
        %v566 = vsel %vm555, %v550, 0
        %v569 = vsel %vm555, %v551, 0
        %v572 = vsel %vm555, %v552, 0
        %v575 = vsel %vm555, %v553, 0
        %v578 = vsel %vm555, %v554, 0
        %vm580 = vcmask 1041408
        %v582 = vsel %vm580, %v287, 0
        %584 = vmatprep.subr.mxu0 0.0
        %585 = vmatpush1.msra.mxu0 %v582
        %586 = vmatprep.subr.mxu0 0.0
        %587 = vmatpush1.msra.mxu0 0.0
        %588 = vmatprep.subr.mxu0 0.0
        %589 = vmatpush1.msra.mxu0 0.0
        %590 = vmatprep.subr.mxu0 0.0
        %591 = vmatpush1.msra.mxu0 0.0
        %592 = vmatprep.subr.mxu0 0.0
        %593 = vmatpush1.msra.mxu0 0.0
        %594 = vmatprep.subr.mxu0 0.0
        %595 = vmatpush1.msra.mxu0 0.0
        %596 = vmatprep.subr.mxu0 0.0
        %597 = vmatpush1.msra.mxu0 0.0
        %598 = vmatprep.subr.mxu0 0.0
        %599 = vmatpush1.msra.mxu0 0.0
        %600 = vmatprep.subr.mxu0 0.0
        %601 = vmatpush1.msra.mxu0 0.0
        %602 = vmatprep.subr.mxu0 0.0
        %603 = vmatpush1.msra.mxu0 0.0
        %604 = vmatprep.subr.mxu0 0.0
        %605 = vmatpush1.msra.mxu0 0.0
        %606 = vmatprep.subr.mxu0 0.0
        %607 = vmatpush1.msra.mxu0 0.0
        %608 = vmatprep.subr.mxu0 0.0
        %609 = vmatpush1.msra.mxu0 0.0
        %610 = vmatprep.subr.mxu0 0.0
        %611 = vmatpush1.msra.mxu0 0.0
        %612 = vmatprep.subr.mxu0 0.0
        %613 = vmatpush1.msra.mxu0 0.0
        %614 = vmatprep.subr.mxu0 0.0
        %615 = vmatpush1.msra.mxu0 0.0
        %616 = vmatprep.subr.mxu0 0.0
        %617 = vmatpush1.msra.mxu0 0.0
        %618 = vmatprep.subr.mxu0 0.0
        %619 = vmatpush1.msra.mxu0 0.0
        %620 = vmatprep.subr.mxu0 0.0
        %621 = vmatpush1.msra.mxu0 0.0
        %622 = vmatprep.subr.mxu0 0.0
        %623 = vmatpush1.msra.mxu0 0.0
        %624 = vmatprep.subr.mxu0 0.0
        %625 = vmatpush1.msra.mxu0 0.0
        %626 = vmatprep.subr.mxu0 0.0
        %627 = vmatpush1.msra.mxu0 0.0
        %628 = vmatprep.subr.mxu0 0.0
        %629 = vmatpush1.msra.mxu0 0.0
        %630 = vmatprep.subr.mxu0 0.0
        %631 = vmatpush1.msra.mxu0 0.0
        %632 = vmatprep.subr.mxu0 0.0
        %633 = vmatpush1.msra.mxu0 0.0
        %634 = vmatprep.subr.mxu0 0.0
        %635 = vmatpush1.msra.mxu0 0.0
        %636 = vmatprep.subr.mxu0 0.0
        %637 = vmatpush1.msra.mxu0 0.0
        %638 = vmatprep.subr.mxu0 0.0
        %639 = vmatpush1.msra.mxu0 0.0
        %640 = vmatprep.subr.mxu0 0.0
        %641 = vmatpush1.msra.mxu0 0.0
        %642 = vmatprep.subr.mxu0 0.0
        %643 = vmatpush1.msra.mxu0 0.0
        %644 = vmatprep.subr.mxu0 0.0
        %645 = vmatpush1.msra.mxu0 0.0
        %646 = vmatprep.subr.mxu0 0.0
        %647 = vmatpush1.msra.mxu0 0.0
        %648 = vmatprep.mubr.f32.mxu0 0.0
        %649 = vmatmul.mubr.f32.gmra.mrb[0].mxu0 %v557
        %v650 = vpop.f32.mrb[0].mxu0
        %v651 = vadd.f32 0.0, %v650
        %v652 = vpop.f32.mrb[0].mxu0
        %653 = vmatprep.mubr.f32.mxu0 0.0
        %654 = vmatmul.mubr.f32.gmra.mrb[0].mxu0 %v560
        %v655 = vpop.f32.mrb[0].mxu0
        %v656 = vadd.f32 0.0, %v655
        %v657 = vpop.f32.mrb[0].mxu0
        %658 = vmatprep.mubr.f32.mxu0 0.0
        %659 = vmatmul.mubr.f32.gmra.mrb[0].mxu0 %v563
        %v660 = vpop.f32.mrb[0].mxu0
        %v661 = vadd.f32 0.0, %v660
        %v662 = vpop.f32.mrb[0].mxu0
        %663 = vmatprep.mubr.f32.mxu0 0.0
        %664 = vmatmul.mubr.f32.gmra.mrb[0].mxu0 %v566
        %v665 = vpop.f32.mrb[0].mxu0
        %v666 = vadd.f32 0.0, %v665
        %v667 = vpop.f32.mrb[0].mxu0
        %668 = vmatprep.mubr.f32.mxu0 0.0
        %669 = vmatmul.mubr.f32.gmra.mrb[0].mxu0 %v569
        %v670 = vpop.f32.mrb[0].mxu0
        %v671 = vadd.f32 0.0, %v670
        %v672 = vpop.f32.mrb[0].mxu0
        %673 = vmatprep.mubr.f32.mxu0 0.0
        %674 = vmatmul.mubr.f32.gmra.mrb[0].mxu0 %v572
        %v675 = vpop.f32.mrb[0].mxu0
        %v676 = vadd.f32 0.0, %v675
        %v677 = vpop.f32.mrb[0].mxu0
        %678 = vmatprep.mubr.f32.mxu0 0.0
        %679 = vmatmul.mubr.f32.gmra.mrb[0].mxu0 %v575
        %v680 = vpop.f32.mrb[0].mxu0
        %v681 = vadd.f32 0.0, %v680
        %v682 = vpop.f32.mrb[0].mxu0
        %683 = vmatprep.mubr.f32.mxu0 0.0
        %684 = vmatmul.mubr.f32.gmra.mrb[0].mxu0 %v578
        %v685 = vpop.f32.mrb[0].mxu0
        %v686 = vadd.f32 0.0, %v685
        %v687 = vpop.f32.mrb[0].mxu0
        %688 = vdwg.mxu0
        %v689 = vsub.f32 %v388, %v651
        %v690 = vsub.f32 %v391, %v656
        %v691 = vsub.f32 %v396, %v661
        %v692 = vsub.f32 %v399, %v666
        %v693 = vsub.f32 %v404, %v671
        %v694 = vsub.f32 %v407, %v676
        %v695 = vsub.f32 %v412, %v681
        %v696 = vsub.f32 %v415, %v686
        %v697 = vmul.f32 %v689, %v689
        %v698 = vmul.f32 %v690, %v690
        %v699 = vmul.f32 %v691, %v691
        %v700 = vmul.f32 %v692, %v692
        %v701 = vmul.f32 %v693, %v693
        %v702 = vmul.f32 %v694, %v694
        %v703 = vmul.f32 %v695, %v695
        %v704 = vmul.f32 %v696, %v696
        %v706 = vsel %vm340, %v697, 0
        %v709 = vsel %vm340, %v698, 0
        %v712 = vsel %vm340, %v699, 0
        %v715 = vsel %vm340, %v700, 0
        %v718 = vsel %vm340, %v701, 0
        %v721 = vsel %vm340, %v702, 0
        %v724 = vsel %vm340, %v703, 0
        %v727 = vsel %vm340, %v704, 0
        %729 = vmatprep.subr.mxu0 0.0
        %730 = vmatpush1.msra.mxu0 %v279
        %731 = vmatprep.subr.mxu0 0.0
        %732 = vmatpush1.msra.mxu0 %v280
        %733 = vmatprep.subr.mxu0 0.0
        %734 = vmatpush1.msra.mxu0 %v281
        %735 = vmatprep.subr.mxu0 0.0
        %736 = vmatpush1.msra.mxu0 %v282
        %737 = vmatprep.subr.mxu0 0.0
        %738 = vmatpush1.msra.mxu0 %v283
        %739 = vmatprep.subr.mxu0 0.0
        %740 = vmatpush1.msra.mxu0 %v284
        %741 = vmatprep.subr.mxu0 0.0
        %742 = vmatpush1.msra.mxu0 %v285
        %743 = vmatprep.subr.mxu0 0.0
        %744 = vmatpush1.msra.mxu0 %v286
        %745 = vmatprep.subr.mxu0 0.0
        %746 = vmatpush1.msra.mxu0 0.0
        %747 = vmatprep.subr.mxu0 0.0
        %748 = vmatpush1.msra.mxu0 0.0
        %749 = vmatprep.subr.mxu0 0.0
        %750 = vmatpush1.msra.mxu0 0.0
        %751 = vmatprep.subr.mxu0 0.0
        %752 = vmatpush1.msra.mxu0 0.0
        %753 = vmatprep.subr.mxu0 0.0
        %754 = vmatpush1.msra.mxu0 0.0
        %755 = vmatprep.subr.mxu0 0.0
        %756 = vmatpush1.msra.mxu0 0.0
        %757 = vmatprep.subr.mxu0 0.0
        %758 = vmatpush1.msra.mxu0 0.0
        %759 = vmatprep.subr.mxu0 0.0
        %760 = vmatpush1.msra.mxu0 0.0
        %761 = vmatprep.subr.mxu0 0.0
        %762 = vmatpush1.msra.mxu0 0.0
        %763 = vmatprep.subr.mxu0 0.0
        %764 = vmatpush1.msra.mxu0 0.0
        %765 = vmatprep.subr.mxu0 0.0
        %766 = vmatpush1.msra.mxu0 0.0
        %767 = vmatprep.subr.mxu0 0.0
        %768 = vmatpush1.msra.mxu0 0.0
        %769 = vmatprep.subr.mxu0 0.0
        %770 = vmatpush1.msra.mxu0 0.0
        %771 = vmatprep.subr.mxu0 0.0
        %772 = vmatpush1.msra.mxu0 0.0
        %773 = vmatprep.subr.mxu0 0.0
        %774 = vmatpush1.msra.mxu0 0.0
        %775 = vmatprep.subr.mxu0 0.0
        %776 = vmatpush1.msra.mxu0 0.0
        %777 = vmatprep.subr.mxu0 0.0
        %778 = vmatpush1.msra.mxu0 0.0
        %779 = vmatprep.subr.mxu0 0.0
        %780 = vmatpush1.msra.mxu0 0.0
        %781 = vmatprep.subr.mxu0 0.0
        %782 = vmatpush1.msra.mxu0 0.0
        %783 = vmatprep.subr.mxu0 0.0
        %784 = vmatpush1.msra.mxu0 0.0
        %785 = vmatprep.subr.mxu0 0.0
        %786 = vmatpush1.msra.mxu0 0.0
        %787 = vmatprep.subr.mxu0 0.0
        %788 = vmatpush1.msra.mxu0 0.0
        %789 = vmatprep.subr.mxu0 0.0
        %790 = vmatpush1.msra.mxu0 0.0
        %791 = vmatprep.subr.mxu0 0.0
        %792 = vmatpush1.msra.mxu0 0.0
        %793 = vmatprep.mubr.f32.mxu0 0.0
        %794 = vmatmul.mubr.f32.gmra.mrb[0].mxu0 %v706
        %v795 = vpop.f32.mrb[0].mxu0
        %v796 = vadd.f32 0.0, %v795
        %v797 = vpop.f32.mrb[0].mxu0
        %798 = vmatprep.mubr.f32.mxu0 0.0
        %799 = vmatmul.mubr.f32.gmra.mrb[0].mxu0 %v709
        %v800 = vpop.f32.mrb[0].mxu0
        %v801 = vadd.f32 0.0, %v800
        %v802 = vpop.f32.mrb[0].mxu0
        %803 = vmatprep.mubr.f32.mxu0 0.0
        %804 = vmatmul.mubr.f32.gmra.mrb[0].mxu0 %v712
        %v805 = vpop.f32.mrb[0].mxu0
        %v806 = vadd.f32 0.0, %v805
        %v807 = vpop.f32.mrb[0].mxu0
        %808 = vmatprep.mubr.f32.mxu0 0.0
        %809 = vmatmul.mubr.f32.gmra.mrb[0].mxu0 %v715
        %v810 = vpop.f32.mrb[0].mxu0
        %v811 = vadd.f32 0.0, %v810
        %v812 = vpop.f32.mrb[0].mxu0
        %813 = vmatprep.mubr.f32.mxu0 0.0
        %814 = vmatmul.mubr.f32.gmra.mrb[0].mxu0 %v718
        %v815 = vpop.f32.mrb[0].mxu0
        %v816 = vadd.f32 0.0, %v815
        %v817 = vpop.f32.mrb[0].mxu0
        %818 = vmatprep.mubr.f32.mxu0 0.0
        %819 = vmatmul.mubr.f32.gmra.mrb[0].mxu0 %v721
        %v820 = vpop.f32.mrb[0].mxu0
        %v821 = vadd.f32 0.0, %v820
        %v822 = vpop.f32.mrb[0].mxu0
        %823 = vmatprep.mubr.f32.mxu0 0.0
        %824 = vmatmul.mubr.f32.gmra.mrb[0].mxu0 %v724
        %v825 = vpop.f32.mrb[0].mxu0
        %v826 = vadd.f32 0.0, %v825
        %v827 = vpop.f32.mrb[0].mxu0
        %828 = vmatprep.mubr.f32.mxu0 0.0
        %829 = vmatmul.mubr.f32.gmra.mrb[0].mxu0 %v727
        %v830 = vpop.f32.mrb[0].mxu0
        %v831 = vadd.f32 0.0, %v830
        %v832 = vpop.f32.mrb[0].mxu0
        %833 = vdwg.mxu0
        %v834 = vmul.f32 %v796, 0.03125
        %v835 = vmul.f32 %v801, 0.03125
        %v836 = vmul.f32 %v806, 0.03125
        %v837 = vmul.f32 %v811, 0.03125
        %v838 = vmul.f32 %v816, 0.03125
        %v839 = vmul.f32 %v821, 0.03125
        %v840 = vmul.f32 %v826, 0.03125
        %v841 = vmul.f32 %v831, 0.03125
        %v842 = vadd.f32 %v834, 1e-05
        %v843 = vadd.f32 %v835, 1e-05
        %v844 = vadd.f32 %v836, 1e-05
        %v845 = vadd.f32 %v837, 1e-05
        %v846 = vadd.f32 %v838, 1e-05
        %v847 = vadd.f32 %v839, 1e-05
        %v848 = vadd.f32 %v840, 1e-05
        %v849 = vadd.f32 %v841, 1e-05
        %v850 = vrsqrt.pop %v842
        %v851 = vrsqrt.pop %v843
        %v852 = vrsqrt.pop %v844
        %v853 = vrsqrt.pop %v845
        %v854 = vrsqrt.pop %v846
        %v855 = vrsqrt.pop %v847
        %v856 = vrsqrt.pop %v848
        %v857 = vrsqrt.pop %v849
        %v859 = vsel %vm555, %v850, 0
        %v862 = vsel %vm555, %v851, 0
        %v865 = vsel %vm555, %v852, 0
        %v868 = vsel %vm555, %v853, 0
        %v871 = vsel %vm555, %v854, 0
        %v874 = vsel %vm555, %v855, 0
        %v877 = vsel %vm555, %v856, 0
        %v880 = vsel %vm555, %v857, 0
        %882 = vmatprep.subr.mxu0 0.0
        %883 = vmatpush1.msra.mxu0 %v582
        %884 = vmatprep.subr.mxu0 0.0
        %885 = vmatpush1.msra.mxu0 0.0
        %886 = vmatprep.subr.mxu0 0.0
        %887 = vmatpush1.msra.mxu0 0.0
        %888 = vmatprep.subr.mxu0 0.0
        %889 = vmatpush1.msra.mxu0 0.0
        %890 = vmatprep.subr.mxu0 0.0
        %891 = vmatpush1.msra.mxu0 0.0
        %892 = vmatprep.subr.mxu0 0.0
        %893 = vmatpush1.msra.mxu0 0.0
        %894 = vmatprep.subr.mxu0 0.0
        %895 = vmatpush1.msra.mxu0 0.0
        %896 = vmatprep.subr.mxu0 0.0
        %897 = vmatpush1.msra.mxu0 0.0
        %898 = vmatprep.subr.mxu0 0.0
        %899 = vmatpush1.msra.mxu0 0.0
        %900 = vmatprep.subr.mxu0 0.0
        %901 = vmatpush1.msra.mxu0 0.0
        %902 = vmatprep.subr.mxu0 0.0
        %903 = vmatpush1.msra.mxu0 0.0
        %904 = vmatprep.subr.mxu0 0.0
        %905 = vmatpush1.msra.mxu0 0.0
        %906 = vmatprep.subr.mxu0 0.0
        %907 = vmatpush1.msra.mxu0 0.0
        %908 = vmatprep.subr.mxu0 0.0
        %909 = vmatpush1.msra.mxu0 0.0
        %910 = vmatprep.subr.mxu0 0.0
        %911 = vmatpush1.msra.mxu0 0.0
        %912 = vmatprep.subr.mxu0 0.0
        %913 = vmatpush1.msra.mxu0 0.0
        %914 = vmatprep.subr.mxu0 0.0
        %915 = vmatpush1.msra.mxu0 0.0
        %916 = vmatprep.subr.mxu0 0.0
        %917 = vmatpush1.msra.mxu0 0.0
        %918 = vmatprep.subr.mxu0 0.0
        %919 = vmatpush1.msra.mxu0 0.0
        %920 = vmatprep.subr.mxu0 0.0
        %921 = vmatpush1.msra.mxu0 0.0
        %922 = vmatprep.subr.mxu0 0.0
        %923 = vmatpush1.msra.mxu0 0.0
        %924 = vmatprep.subr.mxu0 0.0
        %925 = vmatpush1.msra.mxu0 0.0
        %926 = vmatprep.subr.mxu0 0.0
        %927 = vmatpush1.msra.mxu0 0.0
        %928 = vmatprep.subr.mxu0 0.0
        %929 = vmatpush1.msra.mxu0 0.0
        %930 = vmatprep.subr.mxu0 0.0
        %931 = vmatpush1.msra.mxu0 0.0
        %932 = vmatprep.subr.mxu0 0.0
        %933 = vmatpush1.msra.mxu0 0.0
        %934 = vmatprep.subr.mxu0 0.0
        %935 = vmatpush1.msra.mxu0 0.0
        %936 = vmatprep.subr.mxu0 0.0
        %937 = vmatpush1.msra.mxu0 0.0
        %938 = vmatprep.subr.mxu0 0.0
        %939 = vmatpush1.msra.mxu0 0.0
        %940 = vmatprep.subr.mxu0 0.0
        %941 = vmatpush1.msra.mxu0 0.0
        %942 = vmatprep.subr.mxu0 0.0
        %943 = vmatpush1.msra.mxu0 0.0
        %944 = vmatprep.subr.mxu0 0.0
        %945 = vmatpush1.msra.mxu0 0.0
        %946 = vmatprep.mubr.f32.mxu0 0.0
        %947 = vmatmul.mubr.f32.gmra.mrb[0].mxu0 %v859
        %v948 = vpop.f32.mrb[0].mxu0
        %v949 = vadd.f32 0.0, %v948
        %v950 = vpop.f32.mrb[0].mxu0
        %951 = vmatprep.mubr.f32.mxu0 0.0
        %952 = vmatmul.mubr.f32.gmra.mrb[0].mxu0 %v862
        %v953 = vpop.f32.mrb[0].mxu0
        %v954 = vadd.f32 0.0, %v953
        %v955 = vpop.f32.mrb[0].mxu0
        %956 = vmatprep.mubr.f32.mxu0 0.0
        %957 = vmatmul.mubr.f32.gmra.mrb[0].mxu0 %v865
        %v958 = vpop.f32.mrb[0].mxu0
        %v959 = vadd.f32 0.0, %v958
        %v960 = vpop.f32.mrb[0].mxu0
        %961 = vmatprep.mubr.f32.mxu0 0.0
        %962 = vmatmul.mubr.f32.gmra.mrb[0].mxu0 %v868
        %v963 = vpop.f32.mrb[0].mxu0
        %v964 = vadd.f32 0.0, %v963
        %v965 = vpop.f32.mrb[0].mxu0
        %966 = vmatprep.mubr.f32.mxu0 0.0
        %967 = vmatmul.mubr.f32.gmra.mrb[0].mxu0 %v871
        %v968 = vpop.f32.mrb[0].mxu0
        %v969 = vadd.f32 0.0, %v968
        %v970 = vpop.f32.mrb[0].mxu0
        %971 = vmatprep.mubr.f32.mxu0 0.0
        %972 = vmatmul.mubr.f32.gmra.mrb[0].mxu0 %v874
        %v973 = vpop.f32.mrb[0].mxu0
        %v974 = vadd.f32 0.0, %v973
        %v975 = vpop.f32.mrb[0].mxu0
        %976 = vmatprep.mubr.f32.mxu0 0.0
        %977 = vmatmul.mubr.f32.gmra.mrb[0].mxu0 %v877
        %v978 = vpop.f32.mrb[0].mxu0
        %v979 = vadd.f32 0.0, %v978
        %v980 = vpop.f32.mrb[0].mxu0
        %981 = vmatprep.mubr.f32.mxu0 0.0
        %982 = vmatmul.mubr.f32.gmra.mrb[0].mxu0 %v880
        %v983 = vpop.f32.mrb[0].mxu0
        %v984 = vadd.f32 0.0, %v983
        %v985 = vpop.f32.mrb[0].mxu0
        %986 = vdwg.mxu0
        %v987 = vmul.f32 %v689, %v949
        %v988 = vmul.f32 %v690, %v954
        %v989 = vmul.f32 %v691, %v959
        %v990 = vmul.f32 %v692, %v964
        %v991 = vmul.f32 %v693, %v969
        %v992 = vmul.f32 %v694, %v974
        %v993 = vmul.f32 %v695, %v979
        %v994 = vmul.f32 %v696, %v984
        %v996 = vlaneseq
        %v997 = vshrl.u32 %v996, 7
        %v998 = vsub.s32 0, %v997
        %v999 = vrot.slane %v277, %v998
        %v1001 = vmul.f32 %v987, %v999
        %v1002 = vmul.f32 %v988, %v999
        %v1003 = vmul.f32 %v989, %v999
        %v1004 = vmul.f32 %v990, %v999
        %v1005 = vmul.f32 %v991, %v999
        %v1006 = vmul.f32 %v992, %v999
        %v1007 = vmul.f32 %v993, %v999
        %v1008 = vmul.f32 %v994, %v999
        %v1010 = vlaneseq
        %v1011 = vshrl.u32 %v1010, 7
        %v1012 = vsub.s32 0, %v1011
        %v1013 = vrot.slane %v278, %v1012
        %v1015 = vadd.f32 %v1001, %v1013
        %v1016 = vadd.f32 %v1002, %v1013
        %v1017 = vadd.f32 %v1003, %v1013
        %v1018 = vadd.f32 %v1004, %v1013
        %v1019 = vadd.f32 %v1005, %v1013
        %v1020 = vadd.f32 %v1006, %v1013
        %v1021 = vadd.f32 %v1007, %v1013
        %v1022 = vadd.f32 %v1008, %v1013
        %s1023 = scalar_lea.vmem [#allocation2], 32
        %v1024 = vld [vmem:[%s1023] sm:$0xf]
        %v1025 = vld [vmem:[%s1023 + $0x4] sm:$0xf]
        %v1026 = vld [vmem:[%s1023 + $0x8] sm:$0xf]
        %v1027 = vld [vmem:[%s1023 + $0xc] sm:$0xf]
        %v1028 = vld [vmem:[%s1023 + $0x10] sm:$0xf]
        %v1029 = vld [vmem:[%s1023 + $0x14] sm:$0xf]
        %v1030 = vld [vmem:[%s1023 + $0x18] sm:$0xf]
        %v1031 = vld [vmem:[%s1023 + $0x1c] sm:$0xf]
        %v1040 = vunpack.c.l.b16 %v1024
        %v1041 = vunpack.c.l.b16 %v1025
        %v1042 = vunpack.c.l.b16 %v1026
        %v1043 = vunpack.c.l.b16 %v1027
        %v1044 = vunpack.c.l.b16 %v1028
        %v1045 = vunpack.c.l.b16 %v1029
        %v1046 = vunpack.c.l.b16 %v1030
        %v1047 = vunpack.c.l.b16 %v1031
        %v1048 = vpack.c.b16 %v1041, %v1040
        %v1049 = vpack.c.b16 %v1043, %v1042
        %v1050 = vpack.c.b16 %v1045, %v1044
        %v1051 = vpack.c.b16 %v1047, %v1046
        %1056 = vmatprep.subr.bf16.mxu0 0
        %1057 = vmatpush1.bf16.msra.mxu0 %v1048
        %1058 = vmatprep.subr.bf16.mxu0 0
        %1059 = vmatpush1.bf16.msra.mxu0 %v1049
        %1060 = vmatprep.subr.bf16.mxu0 0
        %1061 = vmatpush1.bf16.msra.mxu0 %v1050
        %1062 = vmatprep.subr.bf16.mxu0 0
        %1063 = vmatpush1.bf16.msra.mxu0 %v1051
        %1064 = vmatprep.subr.bf16.mxu0 0
        %1065 = vmatpush1.bf16.msra.mxu0 0
        %1066 = vmatprep.subr.bf16.mxu0 0
        %1067 = vmatpush1.bf16.msra.mxu0 0
        %1068 = vmatprep.subr.bf16.mxu0 0
        %1069 = vmatpush1.bf16.msra.mxu0 0
        %1070 = vmatprep.subr.bf16.mxu0 0
        %1071 = vmatpush1.bf16.msra.mxu0 0
        %1072 = vmatprep.subr.bf16.mxu0 0
        %1073 = vmatpush1.bf16.msra.mxu0 0
        %1074 = vmatprep.subr.bf16.mxu0 0
        %1075 = vmatpush1.bf16.msra.mxu0 0
        %1076 = vmatprep.subr.bf16.mxu0 0
        %1077 = vmatpush1.bf16.msra.mxu0 0
        %1078 = vmatprep.subr.bf16.mxu0 0
        %1079 = vmatpush1.bf16.msra.mxu0 0
        %1080 = vmatprep.subr.bf16.mxu0 0
        %1081 = vmatpush1.bf16.msra.mxu0 0
        %1082 = vmatprep.subr.bf16.mxu0 0
        %1083 = vmatpush1.bf16.msra.mxu0 0
        %1084 = vmatprep.subr.bf16.mxu0 0
        %1085 = vmatpush1.bf16.msra.mxu0 0
        %1086 = vmatprep.subr.bf16.mxu0 0
        %1087 = vmatpush1.bf16.msra.mxu0 0
        %1088 = vmatprep.mubr.bf16.mxu0 0
        %1089 = vmatmul.mubr.bf16.gmra.mrb[0].mxu0 %v342
        %v1090 = vpop.f32.mrb[0].mxu0
        %v1091 = vadd.f32 0.0, %v1090
        %v1092 = vpop.f32.mrb[0].mxu0
        %v1093 = vpop.f32.mrb[0].mxu0
        %v1094 = vadd.f32 0.0, %v1093
        %v1095 = vpop.f32.mrb[0].mxu0
        %1096 = vmatprep.mubr.bf16.mxu0 0
        %1097 = vmatmul.mubr.bf16.gmra.mrb[0].mxu0 %v345
        %v1098 = vpop.f32.mrb[0].mxu0
        %v1099 = vadd.f32 0.0, %v1098
        %v1100 = vpop.f32.mrb[0].mxu0
        %v1101 = vpop.f32.mrb[0].mxu0
        %v1102 = vadd.f32 0.0, %v1101
        %v1103 = vpop.f32.mrb[0].mxu0
        %1104 = vmatprep.mubr.bf16.mxu0 0
        %1105 = vmatmul.mubr.bf16.gmra.mrb[0].mxu0 %v348
        %v1106 = vpop.f32.mrb[0].mxu0
        %v1107 = vadd.f32 0.0, %v1106
        %v1108 = vpop.f32.mrb[0].mxu0
        %v1109 = vpop.f32.mrb[0].mxu0
        %v1110 = vadd.f32 0.0, %v1109
        %v1111 = vpop.f32.mrb[0].mxu0
        %1112 = vmatprep.mubr.bf16.mxu0 0
        %1113 = vmatmul.mubr.bf16.gmra.mrb[0].mxu0 %v351
        %v1114 = vpop.f32.mrb[0].mxu0
        %v1115 = vadd.f32 0.0, %v1114
        %v1116 = vpop.f32.mrb[0].mxu0
        %v1117 = vpop.f32.mrb[0].mxu0
        %v1118 = vadd.f32 0.0, %v1117
        %v1119 = vpop.f32.mrb[0].mxu0
        %1120 = vdwg.mxu0
        %v1122 = vsel %vm340, %v1091, 0
        %v1125 = vsel %vm340, %v1094, 0
        %v1128 = vsel %vm340, %v1099, 0
        %v1131 = vsel %vm340, %v1102, 0
        %v1134 = vsel %vm340, %v1107, 0
        %v1137 = vsel %vm340, %v1110, 0
        %v1140 = vsel %vm340, %v1115, 0
        %v1143 = vsel %vm340, %v1118, 0
        %1145 = vmatprep.subr.mxu0 0.0
        %1146 = vmatpush1.msra.mxu0 %v279
        %1147 = vmatprep.subr.mxu0 0.0
        %1148 = vmatpush1.msra.mxu0 %v280
        %1149 = vmatprep.subr.mxu0 0.0
        %1150 = vmatpush1.msra.mxu0 %v281
        %1151 = vmatprep.subr.mxu0 0.0
        %1152 = vmatpush1.msra.mxu0 %v282
        %1153 = vmatprep.subr.mxu0 0.0
        %1154 = vmatpush1.msra.mxu0 %v283
        %1155 = vmatprep.subr.mxu0 0.0
        %1156 = vmatpush1.msra.mxu0 %v284
        %1157 = vmatprep.subr.mxu0 0.0
        %1158 = vmatpush1.msra.mxu0 %v285
        %1159 = vmatprep.subr.mxu0 0.0
        %1160 = vmatpush1.msra.mxu0 %v286
        %1161 = vmatprep.subr.mxu0 0.0
        %1162 = vmatpush1.msra.mxu0 0.0
        %1163 = vmatprep.subr.mxu0 0.0
        %1164 = vmatpush1.msra.mxu0 0.0
        %1165 = vmatprep.subr.mxu0 0.0
        %1166 = vmatpush1.msra.mxu0 0.0
        %1167 = vmatprep.subr.mxu0 0.0
        %1168 = vmatpush1.msra.mxu0 0.0
        %1169 = vmatprep.subr.mxu0 0.0
        %1170 = vmatpush1.msra.mxu0 0.0
        %1171 = vmatprep.subr.mxu0 0.0
        %1172 = vmatpush1.msra.mxu0 0.0
        %1173 = vmatprep.subr.mxu0 0.0
        %1174 = vmatpush1.msra.mxu0 0.0
        %1175 = vmatprep.subr.mxu0 0.0
        %1176 = vmatpush1.msra.mxu0 0.0
        %1177 = vmatprep.subr.mxu0 0.0
        %1178 = vmatpush1.msra.mxu0 0.0
        %1179 = vmatprep.subr.mxu0 0.0
        %1180 = vmatpush1.msra.mxu0 0.0
        %1181 = vmatprep.subr.mxu0 0.0
        %1182 = vmatpush1.msra.mxu0 0.0
        %1183 = vmatprep.subr.mxu0 0.0
        %1184 = vmatpush1.msra.mxu0 0.0
        %1185 = vmatprep.subr.mxu0 0.0
        %1186 = vmatpush1.msra.mxu0 0.0
        %1187 = vmatprep.subr.mxu0 0.0
        %1188 = vmatpush1.msra.mxu0 0.0
        %1189 = vmatprep.subr.mxu0 0.0
        %1190 = vmatpush1.msra.mxu0 0.0
        %1191 = vmatprep.subr.mxu0 0.0
        %1192 = vmatpush1.msra.mxu0 0.0
        %1193 = vmatprep.subr.mxu0 0.0
        %1194 = vmatpush1.msra.mxu0 0.0
        %1195 = vmatprep.subr.mxu0 0.0
        %1196 = vmatpush1.msra.mxu0 0.0
        %1197 = vmatprep.subr.mxu0 0.0
        %1198 = vmatpush1.msra.mxu0 0.0
        %1199 = vmatprep.subr.mxu0 0.0
        %1200 = vmatpush1.msra.mxu0 0.0
        %1201 = vmatprep.subr.mxu0 0.0
        %1202 = vmatpush1.msra.mxu0 0.0
        %1203 = vmatprep.subr.mxu0 0.0
        %1204 = vmatpush1.msra.mxu0 0.0
        %1205 = vmatprep.subr.mxu0 0.0
        %1206 = vmatpush1.msra.mxu0 0.0
        %1207 = vmatprep.subr.mxu0 0.0
        %1208 = vmatpush1.msra.mxu0 0.0
        %1209 = vmatprep.mubr.f32.mxu0 0.0
        %1210 = vmatmul.mubr.f32.gmra.mrb[0].mxu0 %v1122
        %v1211 = vpop.f32.mrb[0].mxu0
        %v1212 = vadd.f32 0.0, %v1211
        %v1213 = vpop.f32.mrb[0].mxu0
        %1214 = vmatprep.mubr.f32.mxu0 0.0
        %1215 = vmatmul.mubr.f32.gmra.mrb[0].mxu0 %v1125
        %v1216 = vpop.f32.mrb[0].mxu0
        %v1217 = vadd.f32 0.0, %v1216
        %v1218 = vpop.f32.mrb[0].mxu0
        %1219 = vmatprep.mubr.f32.mxu0 0.0
        %1220 = vmatmul.mubr.f32.gmra.mrb[0].mxu0 %v1128
        %v1221 = vpop.f32.mrb[0].mxu0
        %v1222 = vadd.f32 0.0, %v1221
        %v1223 = vpop.f32.mrb[0].mxu0
        %1224 = vmatprep.mubr.f32.mxu0 0.0
        %1225 = vmatmul.mubr.f32.gmra.mrb[0].mxu0 %v1131
        %v1226 = vpop.f32.mrb[0].mxu0
        %v1227 = vadd.f32 0.0, %v1226
        %v1228 = vpop.f32.mrb[0].mxu0
        %1229 = vmatprep.mubr.f32.mxu0 0.0
        %1230 = vmatmul.mubr.f32.gmra.mrb[0].mxu0 %v1134
        %v1231 = vpop.f32.mrb[0].mxu0
        %v1232 = vadd.f32 0.0, %v1231
        %v1233 = vpop.f32.mrb[0].mxu0
        %1234 = vmatprep.mubr.f32.mxu0 0.0
        %1235 = vmatmul.mubr.f32.gmra.mrb[0].mxu0 %v1137
        %v1236 = vpop.f32.mrb[0].mxu0
        %v1237 = vadd.f32 0.0, %v1236
        %v1238 = vpop.f32.mrb[0].mxu0
        %1239 = vmatprep.mubr.f32.mxu0 0.0
        %1240 = vmatmul.mubr.f32.gmra.mrb[0].mxu0 %v1140
        %v1241 = vpop.f32.mrb[0].mxu0
        %v1242 = vadd.f32 0.0, %v1241
        %v1243 = vpop.f32.mrb[0].mxu0
        %1244 = vmatprep.mubr.f32.mxu0 0.0
        %1245 = vmatmul.mubr.f32.gmra.mrb[0].mxu0 %v1143
        %v1246 = vpop.f32.mrb[0].mxu0
        %v1247 = vadd.f32 0.0, %v1246
        %v1248 = vpop.f32.mrb[0].mxu0
        %1249 = vdwg.mxu0
        %v1250 = vmul.f32 %v1212, 0.03125
        %v1251 = vmul.f32 %v1217, 0.03125
        %v1252 = vmul.f32 %v1222, 0.03125
        %v1253 = vmul.f32 %v1227, 0.03125
        %v1254 = vmul.f32 %v1232, 0.03125
        %v1255 = vmul.f32 %v1237, 0.03125
        %v1256 = vmul.f32 %v1242, 0.03125
        %v1257 = vmul.f32 %v1247, 0.03125
        %v1259 = vsel %vm555, %v1250, 0
        %v1262 = vsel %vm555, %v1251, 0
        %v1265 = vsel %vm555, %v1252, 0
        %v1268 = vsel %vm555, %v1253, 0
        %v1271 = vsel %vm555, %v1254, 0
        %v1274 = vsel %vm555, %v1255, 0
        %v1277 = vsel %vm555, %v1256, 0
        %v1280 = vsel %vm555, %v1257, 0
        %1282 = vmatprep.subr.mxu0 0.0
        %1283 = vmatpush1.msra.mxu0 %v582
        %1284 = vmatprep.subr.mxu0 0.0
        %1285 = vmatpush1.msra.mxu0 0.0
        %1286 = vmatprep.subr.mxu0 0.0
        %1287 = vmatpush1.msra.mxu0 0.0
        %1288 = vmatprep.subr.mxu0 0.0
        %1289 = vmatpush1.msra.mxu0 0.0
        %1290 = vmatprep.subr.mxu0 0.0
        %1291 = vmatpush1.msra.mxu0 0.0
        %1292 = vmatprep.subr.mxu0 0.0
        %1293 = vmatpush1.msra.mxu0 0.0
        %1294 = vmatprep.subr.mxu0 0.0
        %1295 = vmatpush1.msra.mxu0 0.0
        %1296 = vmatprep.subr.mxu0 0.0
        %1297 = vmatpush1.msra.mxu0 0.0
        %1298 = vmatprep.subr.mxu0 0.0
        %1299 = vmatpush1.msra.mxu0 0.0
        %1300 = vmatprep.subr.mxu0 0.0
        %1301 = vmatpush1.msra.mxu0 0.0
        %1302 = vmatprep.subr.mxu0 0.0
        %1303 = vmatpush1.msra.mxu0 0.0
        %1304 = vmatprep.subr.mxu0 0.0
        %1305 = vmatpush1.msra.mxu0 0.0
        %1306 = vmatprep.subr.mxu0 0.0
        %1307 = vmatpush1.msra.mxu0 0.0
        %1308 = vmatprep.subr.mxu0 0.0
        %1309 = vmatpush1.msra.mxu0 0.0
        %1310 = vmatprep.subr.mxu0 0.0
        %1311 = vmatpush1.msra.mxu0 0.0
        %1312 = vmatprep.subr.mxu0 0.0
        %1313 = vmatpush1.msra.mxu0 0.0
        %1314 = vmatprep.subr.mxu0 0.0
        %1315 = vmatpush1.msra.mxu0 0.0
        %1316 = vmatprep.subr.mxu0 0.0
        %1317 = vmatpush1.msra.mxu0 0.0
        %1318 = vmatprep.subr.mxu0 0.0
        %1319 = vmatpush1.msra.mxu0 0.0
        %1320 = vmatprep.subr.mxu0 0.0
        %1321 = vmatpush1.msra.mxu0 0.0
        %1322 = vmatprep.subr.mxu0 0.0
        %1323 = vmatpush1.msra.mxu0 0.0
        %1324 = vmatprep.subr.mxu0 0.0
        %1325 = vmatpush1.msra.mxu0 0.0
        %1326 = vmatprep.subr.mxu0 0.0
        %1327 = vmatpush1.msra.mxu0 0.0
        %1328 = vmatprep.subr.mxu0 0.0
        %1329 = vmatpush1.msra.mxu0 0.0
        %1330 = vmatprep.subr.mxu0 0.0
        %1331 = vmatpush1.msra.mxu0 0.0
        %1332 = vmatprep.subr.mxu0 0.0
        %1333 = vmatpush1.msra.mxu0 0.0
        %1334 = vmatprep.subr.mxu0 0.0
        %1335 = vmatpush1.msra.mxu0 0.0
        %1336 = vmatprep.subr.mxu0 0.0
        %1337 = vmatpush1.msra.mxu0 0.0
        %1338 = vmatprep.subr.mxu0 0.0
        %1339 = vmatpush1.msra.mxu0 0.0
        %1340 = vmatprep.subr.mxu0 0.0
        %1341 = vmatpush1.msra.mxu0 0.0
        %1342 = vmatprep.subr.mxu0 0.0
        %1343 = vmatpush1.msra.mxu0 0.0
        %1344 = vmatprep.subr.mxu0 0.0
        %1345 = vmatpush1.msra.mxu0 0.0
        %1346 = vmatprep.mubr.f32.mxu0 0.0
        %1347 = vmatmul.mubr.f32.gmra.mrb[0].mxu0 %v1259
        %v1348 = vpop.f32.mrb[0].mxu0
        %v1349 = vadd.f32 0.0, %v1348
        %v1350 = vpop.f32.mrb[0].mxu0
        %1351 = vmatprep.mubr.f32.mxu0 0.0
        %1352 = vmatmul.mubr.f32.gmra.mrb[0].mxu0 %v1262
        %v1353 = vpop.f32.mrb[0].mxu0
        %v1354 = vadd.f32 0.0, %v1353
        %v1355 = vpop.f32.mrb[0].mxu0
        %1356 = vmatprep.mubr.f32.mxu0 0.0
        %1357 = vmatmul.mubr.f32.gmra.mrb[0].mxu0 %v1265
        %v1358 = vpop.f32.mrb[0].mxu0
        %v1359 = vadd.f32 0.0, %v1358
        %v1360 = vpop.f32.mrb[0].mxu0
        %1361 = vmatprep.mubr.f32.mxu0 0.0
        %1362 = vmatmul.mubr.f32.gmra.mrb[0].mxu0 %v1268
        %v1363 = vpop.f32.mrb[0].mxu0
        %v1364 = vadd.f32 0.0, %v1363
        %v1365 = vpop.f32.mrb[0].mxu0
        %1366 = vmatprep.mubr.f32.mxu0 0.0
        %1367 = vmatmul.mubr.f32.gmra.mrb[0].mxu0 %v1271
        %v1368 = vpop.f32.mrb[0].mxu0
        %v1369 = vadd.f32 0.0, %v1368
        %v1370 = vpop.f32.mrb[0].mxu0
        %1371 = vmatprep.mubr.f32.mxu0 0.0
        %1372 = vmatmul.mubr.f32.gmra.mrb[0].mxu0 %v1274
        %v1373 = vpop.f32.mrb[0].mxu0
        %v1374 = vadd.f32 0.0, %v1373
        %v1375 = vpop.f32.mrb[0].mxu0
        %1376 = vmatprep.mubr.f32.mxu0 0.0
        %1377 = vmatmul.mubr.f32.gmra.mrb[0].mxu0 %v1277
        %v1378 = vpop.f32.mrb[0].mxu0
        %v1379 = vadd.f32 0.0, %v1378
        %v1380 = vpop.f32.mrb[0].mxu0
        %1381 = vmatprep.mubr.f32.mxu0 0.0
        %1382 = vmatmul.mubr.f32.gmra.mrb[0].mxu0 %v1280
        %v1383 = vpop.f32.mrb[0].mxu0
        %v1384 = vadd.f32 0.0, %v1383
        %v1385 = vpop.f32.mrb[0].mxu0
        %1386 = vdwg.mxu0
        %v1387 = vsub.f32 %v1091, %v1349
        %v1388 = vsub.f32 %v1094, %v1354
        %v1389 = vsub.f32 %v1099, %v1359
        %v1390 = vsub.f32 %v1102, %v1364
        %v1391 = vsub.f32 %v1107, %v1369
        %v1392 = vsub.f32 %v1110, %v1374
        %v1393 = vsub.f32 %v1115, %v1379
        %v1394 = vsub.f32 %v1118, %v1384
        %v1395 = vmul.f32 %v1387, %v1387
        %v1396 = vmul.f32 %v1388, %v1388
        %v1397 = vmul.f32 %v1389, %v1389
        %v1398 = vmul.f32 %v1390, %v1390
        %v1399 = vmul.f32 %v1391, %v1391
        %v1400 = vmul.f32 %v1392, %v1392
        %v1401 = vmul.f32 %v1393, %v1393
        %v1402 = vmul.f32 %v1394, %v1394
        %v1404 = vsel %vm340, %v1395, 0
        %v1407 = vsel %vm340, %v1396, 0
        %v1410 = vsel %vm340, %v1397, 0
        %v1413 = vsel %vm340, %v1398, 0
        %v1416 = vsel %vm340, %v1399, 0
        %v1419 = vsel %vm340, %v1400, 0
        %v1422 = vsel %vm340, %v1401, 0
        %v1425 = vsel %vm340, %v1402, 0
        %1427 = vmatprep.subr.mxu0 0.0
        %1428 = vmatpush1.msra.mxu0 %v279
        %1429 = vmatprep.subr.mxu0 0.0
        %1430 = vmatpush1.msra.mxu0 %v280
        %1431 = vmatprep.subr.mxu0 0.0
        %1432 = vmatpush1.msra.mxu0 %v281
        %1433 = vmatprep.subr.mxu0 0.0
        %1434 = vmatpush1.msra.mxu0 %v282
        %1435 = vmatprep.subr.mxu0 0.0
        %1436 = vmatpush1.msra.mxu0 %v283
        %1437 = vmatprep.subr.mxu0 0.0
        %1438 = vmatpush1.msra.mxu0 %v284
        %1439 = vmatprep.subr.mxu0 0.0
        %1440 = vmatpush1.msra.mxu0 %v285
        %1441 = vmatprep.subr.mxu0 0.0
        %1442 = vmatpush1.msra.mxu0 %v286
        %1443 = vmatprep.subr.mxu0 0.0
        %1444 = vmatpush1.msra.mxu0 0.0
        %1445 = vmatprep.subr.mxu0 0.0
        %1446 = vmatpush1.msra.mxu0 0.0
        %1447 = vmatprep.subr.mxu0 0.0
        %1448 = vmatpush1.msra.mxu0 0.0
        %1449 = vmatprep.subr.mxu0 0.0
        %1450 = vmatpush1.msra.mxu0 0.0
        %1451 = vmatprep.subr.mxu0 0.0
        %1452 = vmatpush1.msra.mxu0 0.0
        %1453 = vmatprep.subr.mxu0 0.0
        %1454 = vmatpush1.msra.mxu0 0.0
        %1455 = vmatprep.subr.mxu0 0.0
        %1456 = vmatpush1.msra.mxu0 0.0
        %1457 = vmatprep.subr.mxu0 0.0
        %1458 = vmatpush1.msra.mxu0 0.0
        %1459 = vmatprep.subr.mxu0 0.0
        %1460 = vmatpush1.msra.mxu0 0.0
        %1461 = vmatprep.subr.mxu0 0.0
        %1462 = vmatpush1.msra.mxu0 0.0
        %1463 = vmatprep.subr.mxu0 0.0
        %1464 = vmatpush1.msra.mxu0 0.0
        %1465 = vmatprep.subr.mxu0 0.0
        %1466 = vmatpush1.msra.mxu0 0.0
        %1467 = vmatprep.subr.mxu0 0.0
        %1468 = vmatpush1.msra.mxu0 0.0
        %1469 = vmatprep.subr.mxu0 0.0
        %1470 = vmatpush1.msra.mxu0 0.0
        %1471 = vmatprep.subr.mxu0 0.0
        %1472 = vmatpush1.msra.mxu0 0.0
        %1473 = vmatprep.subr.mxu0 0.0
        %1474 = vmatpush1.msra.mxu0 0.0
        %1475 = vmatprep.subr.mxu0 0.0
        %1476 = vmatpush1.msra.mxu0 0.0
        %1477 = vmatprep.subr.mxu0 0.0
        %1478 = vmatpush1.msra.mxu0 0.0
        %1479 = vmatprep.subr.mxu0 0.0
        %1480 = vmatpush1.msra.mxu0 0.0
        %1481 = vmatprep.subr.mxu0 0.0
        %1482 = vmatpush1.msra.mxu0 0.0
        %1483 = vmatprep.subr.mxu0 0.0
        %1484 = vmatpush1.msra.mxu0 0.0
        %1485 = vmatprep.subr.mxu0 0.0
        %1486 = vmatpush1.msra.mxu0 0.0
        %1487 = vmatprep.subr.mxu0 0.0
        %1488 = vmatpush1.msra.mxu0 0.0
        %1489 = vmatprep.subr.mxu0 0.0
        %1490 = vmatpush1.msra.mxu0 0.0
        %1491 = vmatprep.mubr.f32.mxu0 0.0
        %1492 = vmatmul.mubr.f32.gmra.mrb[0].mxu0 %v1404
        %v1493 = vpop.f32.mrb[0].mxu0
        %v1494 = vadd.f32 0.0, %v1493
        %v1495 = vpop.f32.mrb[0].mxu0
        %1496 = vmatprep.mubr.f32.mxu0 0.0
        %1497 = vmatmul.mubr.f32.gmra.mrb[0].mxu0 %v1407
        %v1498 = vpop.f32.mrb[0].mxu0
        %v1499 = vadd.f32 0.0, %v1498
        %v1500 = vpop.f32.mrb[0].mxu0
        %1501 = vmatprep.mubr.f32.mxu0 0.0
        %1502 = vmatmul.mubr.f32.gmra.mrb[0].mxu0 %v1410
        %v1503 = vpop.f32.mrb[0].mxu0
        %v1504 = vadd.f32 0.0, %v1503
        %v1505 = vpop.f32.mrb[0].mxu0
        %1506 = vmatprep.mubr.f32.mxu0 0.0
        %1507 = vmatmul.mubr.f32.gmra.mrb[0].mxu0 %v1413
        %v1508 = vpop.f32.mrb[0].mxu0
        %v1509 = vadd.f32 0.0, %v1508
        %v1510 = vpop.f32.mrb[0].mxu0
        %1511 = vmatprep.mubr.f32.mxu0 0.0
        %1512 = vmatmul.mubr.f32.gmra.mrb[0].mxu0 %v1416
        %v1513 = vpop.f32.mrb[0].mxu0
        %v1514 = vadd.f32 0.0, %v1513
        %v1515 = vpop.f32.mrb[0].mxu0
        %1516 = vmatprep.mubr.f32.mxu0 0.0
        %1517 = vmatmul.mubr.f32.gmra.mrb[0].mxu0 %v1419
        %v1518 = vpop.f32.mrb[0].mxu0
        %v1519 = vadd.f32 0.0, %v1518
        %v1520 = vpop.f32.mrb[0].mxu0
        %1521 = vmatprep.mubr.f32.mxu0 0.0
        %1522 = vmatmul.mubr.f32.gmra.mrb[0].mxu0 %v1422
        %v1523 = vpop.f32.mrb[0].mxu0
        %v1524 = vadd.f32 0.0, %v1523
        %v1525 = vpop.f32.mrb[0].mxu0
        %1526 = vmatprep.mubr.f32.mxu0 0.0
        %1527 = vmatmul.mubr.f32.gmra.mrb[0].mxu0 %v1425
        %v1528 = vpop.f32.mrb[0].mxu0
        %v1529 = vadd.f32 0.0, %v1528
        %v1530 = vpop.f32.mrb[0].mxu0
        %1531 = vdwg.mxu0
        %v1532 = vmul.f32 %v1494, 0.03125
        %v1533 = vmul.f32 %v1499, 0.03125
        %v1534 = vmul.f32 %v1504, 0.03125
        %v1535 = vmul.f32 %v1509, 0.03125
        %v1536 = vmul.f32 %v1514, 0.03125
        %v1537 = vmul.f32 %v1519, 0.03125
        %v1538 = vmul.f32 %v1524, 0.03125
        %v1539 = vmul.f32 %v1529, 0.03125
        %v1540 = vadd.f32 %v1532, 1e-05
        %v1541 = vadd.f32 %v1533, 1e-05
        %v1542 = vadd.f32 %v1534, 1e-05
        %v1543 = vadd.f32 %v1535, 1e-05
        %v1544 = vadd.f32 %v1536, 1e-05
        %v1545 = vadd.f32 %v1537, 1e-05
        %v1546 = vadd.f32 %v1538, 1e-05
        %v1547 = vadd.f32 %v1539, 1e-05
        %v1548 = vrsqrt.pop %v1540
        %v1549 = vrsqrt.pop %v1541
        %v1550 = vrsqrt.pop %v1542
        %v1551 = vrsqrt.pop %v1543
        %v1552 = vrsqrt.pop %v1544
        %v1553 = vrsqrt.pop %v1545
        %v1554 = vrsqrt.pop %v1546
        %v1555 = vrsqrt.pop %v1547
        %v1557 = vsel %vm555, %v1548, 0
        %v1560 = vsel %vm555, %v1549, 0
        %v1563 = vsel %vm555, %v1550, 0
        %v1566 = vsel %vm555, %v1551, 0
        %v1569 = vsel %vm555, %v1552, 0
        %v1572 = vsel %vm555, %v1553, 0
        %v1575 = vsel %vm555, %v1554, 0
        %v1578 = vsel %vm555, %v1555, 0
        %1580 = vmatprep.subr.mxu0 0.0
        %1581 = vmatpush1.msra.mxu0 %v582
        %1582 = vmatprep.subr.mxu0 0.0
        %1583 = vmatpush1.msra.mxu0 0.0
        %1584 = vmatprep.subr.mxu0 0.0
        %1585 = vmatpush1.msra.mxu0 0.0
        %1586 = vmatprep.subr.mxu0 0.0
        %1587 = vmatpush1.msra.mxu0 0.0
        %1588 = vmatprep.subr.mxu0 0.0
        %1589 = vmatpush1.msra.mxu0 0.0
        %1590 = vmatprep.subr.mxu0 0.0
        %1591 = vmatpush1.msra.mxu0 0.0
        %1592 = vmatprep.subr.mxu0 0.0
        %1593 = vmatpush1.msra.mxu0 0.0
        %1594 = vmatprep.subr.mxu0 0.0
        %1595 = vmatpush1.msra.mxu0 0.0
        %1596 = vmatprep.subr.mxu0 0.0
        %1597 = vmatpush1.msra.mxu0 0.0
        %1598 = vmatprep.subr.mxu0 0.0
        %1599 = vmatpush1.msra.mxu0 0.0
        %1600 = vmatprep.subr.mxu0 0.0
        %1601 = vmatpush1.msra.mxu0 0.0
        %1602 = vmatprep.subr.mxu0 0.0
        %1603 = vmatpush1.msra.mxu0 0.0
        %1604 = vmatprep.subr.mxu0 0.0
        %1605 = vmatpush1.msra.mxu0 0.0
        %1606 = vmatprep.subr.mxu0 0.0
        %1607 = vmatpush1.msra.mxu0 0.0
        %1608 = vmatprep.subr.mxu0 0.0
        %1609 = vmatpush1.msra.mxu0 0.0
        %1610 = vmatprep.subr.mxu0 0.0
        %1611 = vmatpush1.msra.mxu0 0.0
        %1612 = vmatprep.subr.mxu0 0.0
        %1613 = vmatpush1.msra.mxu0 0.0
        %1614 = vmatprep.subr.mxu0 0.0
        %1615 = vmatpush1.msra.mxu0 0.0
        %1616 = vmatprep.subr.mxu0 0.0
        %1617 = vmatpush1.msra.mxu0 0.0
        %1618 = vmatprep.subr.mxu0 0.0
        %1619 = vmatpush1.msra.mxu0 0.0
        %1620 = vmatprep.subr.mxu0 0.0
        %1621 = vmatpush1.msra.mxu0 0.0
        %1622 = vmatprep.subr.mxu0 0.0
        %1623 = vmatpush1.msra.mxu0 0.0
        %1624 = vmatprep.subr.mxu0 0.0
        %1625 = vmatpush1.msra.mxu0 0.0
        %1626 = vmatprep.subr.mxu0 0.0
        %1627 = vmatpush1.msra.mxu0 0.0
        %1628 = vmatprep.subr.mxu0 0.0
        %1629 = vmatpush1.msra.mxu0 0.0
        %1630 = vmatprep.subr.mxu0 0.0
        %1631 = vmatpush1.msra.mxu0 0.0
        %1632 = vmatprep.subr.mxu0 0.0
        %1633 = vmatpush1.msra.mxu0 0.0
        %1634 = vmatprep.subr.mxu0 0.0
        %1635 = vmatpush1.msra.mxu0 0.0
        %1636 = vmatprep.subr.mxu0 0.0
        %1637 = vmatpush1.msra.mxu0 0.0
        %1638 = vmatprep.subr.mxu0 0.0
        %1639 = vmatpush1.msra.mxu0 0.0
        %1640 = vmatprep.subr.mxu0 0.0
        %1641 = vmatpush1.msra.mxu0 0.0
        %1642 = vmatprep.subr.mxu0 0.0
        %1643 = vmatpush1.msra.mxu0 0.0
        %1644 = vmatprep.mubr.f32.mxu0 0.0
        %1645 = vmatmul.mubr.f32.gmra.mrb[0].mxu0 %v1557
        %v1646 = vpop.f32.mrb[0].mxu0
        %v1647 = vadd.f32 0.0, %v1646
        %v1648 = vpop.f32.mrb[0].mxu0
        %1649 = vmatprep.mubr.f32.mxu0 0.0
        %1650 = vmatmul.mubr.f32.gmra.mrb[0].mxu0 %v1560
        %v1651 = vpop.f32.mrb[0].mxu0
        %v1652 = vadd.f32 0.0, %v1651
        %v1653 = vpop.f32.mrb[0].mxu0
        %1654 = vmatprep.mubr.f32.mxu0 0.0
        %1655 = vmatmul.mubr.f32.gmra.mrb[0].mxu0 %v1563
        %v1656 = vpop.f32.mrb[0].mxu0
        %v1657 = vadd.f32 0.0, %v1656
        %v1658 = vpop.f32.mrb[0].mxu0
        %1659 = vmatprep.mubr.f32.mxu0 0.0
        %1660 = vmatmul.mubr.f32.gmra.mrb[0].mxu0 %v1566
        %v1661 = vpop.f32.mrb[0].mxu0
        %v1662 = vadd.f32 0.0, %v1661
        %v1663 = vpop.f32.mrb[0].mxu0
        %1664 = vmatprep.mubr.f32.mxu0 0.0
        %1665 = vmatmul.mubr.f32.gmra.mrb[0].mxu0 %v1569
        %v1666 = vpop.f32.mrb[0].mxu0
        %v1667 = vadd.f32 0.0, %v1666
        %v1668 = vpop.f32.mrb[0].mxu0
        %1669 = vmatprep.mubr.f32.mxu0 0.0
        %1670 = vmatmul.mubr.f32.gmra.mrb[0].mxu0 %v1572
        %v1671 = vpop.f32.mrb[0].mxu0
        %v1672 = vadd.f32 0.0, %v1671
        %v1673 = vpop.f32.mrb[0].mxu0
        %1674 = vmatprep.mubr.f32.mxu0 0.0
        %1675 = vmatmul.mubr.f32.gmra.mrb[0].mxu0 %v1575
        %v1676 = vpop.f32.mrb[0].mxu0
        %v1677 = vadd.f32 0.0, %v1676
        %v1678 = vpop.f32.mrb[0].mxu0
        %1679 = vmatprep.mubr.f32.mxu0 0.0
        %1680 = vmatmul.mubr.f32.gmra.mrb[0].mxu0 %v1578
        %v1681 = vpop.f32.mrb[0].mxu0
        %v1682 = vadd.f32 0.0, %v1681
        %v1683 = vpop.f32.mrb[0].mxu0
        %1684 = vdwg.mxu0
        %v1685 = vmul.f32 %v1387, %v1647
        %v1686 = vmul.f32 %v1388, %v1652
        %v1687 = vmul.f32 %v1389, %v1657
        %v1688 = vmul.f32 %v1390, %v1662
        %v1689 = vmul.f32 %v1391, %v1667
        %v1690 = vmul.f32 %v1392, %v1672
        %v1691 = vmul.f32 %v1393, %v1677
        %v1692 = vmul.f32 %v1394, %v1682
        %v1693 = vmul.f32 %v1685, %v999
        %v1694 = vmul.f32 %v1686, %v999
        %v1695 = vmul.f32 %v1687, %v999
        %v1696 = vmul.f32 %v1688, %v999
        %v1697 = vmul.f32 %v1689, %v999
        %v1698 = vmul.f32 %v1690, %v999
        %v1699 = vmul.f32 %v1691, %v999
        %v1700 = vmul.f32 %v1692, %v999
        %v1701 = vadd.f32 %v1693, %v1013
        %v1702 = vadd.f32 %v1694, %v1013
        %v1703 = vadd.f32 %v1695, %v1013
        %v1704 = vadd.f32 %v1696, %v1013
        %v1705 = vadd.f32 %v1697, %v1013
        %v1706 = vadd.f32 %v1698, %v1013
        %v1707 = vadd.f32 %v1699, %v1013
        %v1708 = vadd.f32 %v1700, %v1013
        %1709 = vst.msk [vmem:[%s260] sm:$0xff] %vm340, %v1015
        %1710 = vst.msk [vmem:[%s260 + $0x8] sm:$0xff] %vm340, %v1701
        %1711 = vst.msk [vmem:[%s260 + $0x10] sm:$0xff] %vm340, %v1016
        %1712 = vst.msk [vmem:[%s260 + $0x18] sm:$0xff] %vm340, %v1702
        %1713 = vst.msk [vmem:[%s260 + $0x20] sm:$0xff] %vm340, %v1017
        %1714 = vst.msk [vmem:[%s260 + $0x28] sm:$0xff] %vm340, %v1703
        %1715 = vst.msk [vmem:[%s260 + $0x30] sm:$0xff] %vm340, %v1018
        %1716 = vst.msk [vmem:[%s260 + $0x38] sm:$0xff] %vm340, %v1704
        %1717 = vst.msk [vmem:[%s260 + $0x40] sm:$0xff] %vm340, %v1019
        %1718 = vst.msk [vmem:[%s260 + $0x48] sm:$0xff] %vm340, %v1705
        %1719 = vst.msk [vmem:[%s260 + $0x50] sm:$0xff] %vm340, %v1020
        %1720 = vst.msk [vmem:[%s260 + $0x58] sm:$0xff] %vm340, %v1706
        %1721 = vst.msk [vmem:[%s260 + $0x60] sm:$0xff] %vm340, %v1021
        %1722 = vst.msk [vmem:[%s260 + $0x68] sm:$0xff] %vm340, %v1707
        %1723 = vst.msk [vmem:[%s260 + $0x70] sm:$0xff] %vm340, %v1022
        %1724 = vst.msk [vmem:[%s260 + $0x78] sm:$0xff] %vm340, %v1708
        %s1725 = sand.u32 %s160, 1
        %s1726 = scalar_lea.sflag [#allocation4], %s1725
        %s1727 = sand.u32 %s160, 1
        %s1728 = smul.addr %s1727, 128
        %s1729 = scalar_lea.vmem [#allocation5], %s1728
        // Predicated region
        $region49: #{tpu_custom_call.1} parent=43 // pred_check
          %p1730 = pneg %p170
        $region50: #{tpu_custom_call.1} parent=43 // pred_check_branch
          %1732 = sbr.rel (%p1730) target = $region52
        $region51: #{tpu_custom_call.1} parent=43 // pred_region
          %s1733 = smul.u32 8, %s21
          %s1735 = ssub.s32 2048, 2048
          %1736 = vsyncadd %s1726, %s1735
          %s1737 = smul.addr %s1733, 2
          %s1738 = smul.addr %s1737, 128
          %s1739 = scalar_lea.hbm %s6, %s1738
          %s1740 = sshll.u32 %s1729, 4
          %s1741 = int_to_ptr.vmem [resolvable:$true] %s1740
          %1746 = dma.vmem_to_hbm [thread:$0]  %s1741, 2048, %s1739, %s1726, 128, 128, 8
        $region52: #{tpu_custom_call.1} parent=43 // pred_fallthru
          _
      $region44: #{tpu_custom_call.1} parent=5 // pred_fallthru
        _
      %p1747 = scmp.le.s32.totalorder 2, %s16
      // Predicated region
      $region53: #{tpu_custom_call.1} parent=5 // pred_check
        %p1748 = pneg %p1747
      $region54: #{tpu_custom_call.1} parent=5 // pred_check_branch
        %1750 = sbr.rel (%p1748) target = $region56
      $region55: #{tpu_custom_call.1} parent=5 // pred_region
        %s1751 = ssub.s32 %s16, 2
        // Predicated region
        $region57: #{tpu_custom_call.1} parent=55 // pred_check
          %p1752 = pneg %p176
        $region58: #{tpu_custom_call.1} parent=55 // pred_check_branch
          %1754 = sbr.rel (%p1752) target = $region60
        $region59: #{tpu_custom_call.1} parent=55 // pred_region
          %s1755 = sand.u32 %s161, 1
          %s1756 = scalar_lea.sflag [#allocation4], %s1755
          %s1757 = sand.u32 %s161, 1
          %s1758 = smul.addr %s1757, 128
          %s1759 = scalar_lea.vmem [#allocation5], %s1758
          %1760 = dma.done %s1756, 2048
        $region60: #{tpu_custom_call.1} parent=55 // pred_fallthru
          _
      $region56: #{tpu_custom_call.1} parent=5 // pred_fallthru
        _
    $region6: #{tpu_custom_call.1} parent=1 // loop_footer
      %s20 = sadd.s32 1, %s16
    $region7: #{tpu_custom_call.1} parent=1 // loop_footer_branch
      %15 = sbr.rel target = $region3
    $region8: #{tpu_custom_call.1} parent=1 // loop_exit
      _
    %1761 = vsyncpa [#allocation3], 1
    %s1762 = scalar_lea.sflag [#allocation3], 1
    %1763 = vsyncpa %s1762, 1
    %1764 = vsyncpa [#allocation4], 1
    %s1765 = scalar_lea.sflag [#allocation4], 1
    %1766 = vsyncpa %s1765, 1

// kernel: tpu_custom_call.1
$region0: #{tpu_custom_call.1}
  #allocation0 [shape = 'u32[]', space=smem, size = 0x4, offset = 0x4, fixed_abs, tag = 'smem constant byte address 0x4 - core index']
  #allocation1 [shape = 'u32[144,128]{1,0:T(1,128)}', space=vmem, size = 0x12000, scoped, tag = 'internal scratch']
  %s0 = inlined_call_operand.vmem [shape: bf16[16,8,64], index: 0, kind: input, shape index: {}]
  %s1 = inlined_call_operand.hbm [shape: bf16[2,64,64], index: 1, kind: input, shape index: {}]
  %s2 = inlined_call_operand.vmem [shape: f32[1,64], index: 2, kind: input, shape index: {}]
  %s3 = inlined_call_operand.vmem [shape: f32[1,64], index: 3, kind: input, shape index: {}]
  %s4 = inlined_call_operand.vmem [shape: f32[64,2], index: 4, kind: input, shape index: {}]
  %s5 = inlined_call_operand.vmem [shape: f32[2,64], index: 5, kind: input, shape index: {}]
  %s6 = inlined_call_operand.hbm [shape: f32[16,2,8,64], index: 6, kind: output, shape index: {}]
  %s7 = sld [smem:[#allocation0]]
  $region61: #{tpu_custom_call.1} parent=0
    _
  %s9 = ssub.s32 1, %s7
  %s10 = scalar_select 0, %s9, %s7
  $region1: #{tpu_custom_call.1} parent=0
    #allocation2 [shape = 'u8[32768]{0}', space=vmem, size = 0x8000, scoped, tag = 'input window, operand 1, single buffered']
    #allocation3 [shape = 's32[2]{0}', space=sflag, size = 0x8, scoped, tag = 'scoped memory for tpu_custom_call.1']
    #allocation4 [shape = 's32[2]{0}', space=sflag, size = 0x8, scoped, tag = 'scoped memory for tpu_custom_call.1']
    #allocation5 [shape = 'u8[131072]{0}', space=vmem, size = 0x20000, scoped, tag = 'output window, operand 0']
    %11 = vsyncpa [#allocation3], 0
    %12 = vsyncpa [#allocation4], 0
    %s13 = scalar_lea.sflag [#allocation4], 1
    %14 = vsyncpa %s13, 0
    loop: start=0, step=1, limit=4
    $region2: #{tpu_custom_call.1} parent=1 // loop_pre_header
      _
    $region3: #{tpu_custom_call.1} parent=1 // loop_header
      %s16 = sphi 0, %s20
      %p17 = scmp.ge.s32.totalorder %s16, 4
      %s26 = sphi 0, %s28
      %s29 = sphi 0, %s26
      %s30 = sphi 0, %s29
      %s46 = sphi 0, %s30
      %s50 = sphi 0, %s50
      %s52 = sphi 0, %s50
      %s53 = sphi 0, %s52
      %s67 = sphi 0, %s53
      %s71 = sphi 0, %s71
      %s73 = sphi 0, %s71
      %s74 = sphi 0, %s73
      %s88 = sphi 0, %s74
      %s92 = sphi 0, %s92
      %s94 = sphi 0, %s92
      %s95 = sphi 0, %s94
      %s109 = sphi 0, %s95
      %s113 = sphi 0, %s113
      %s115 = sphi 0, %s113
      %s116 = sphi 0, %s115
      %s130 = sphi 0, %s116
      %s134 = sphi 0, %s134
      %s136 = sphi 0, %s134
      %s137 = sphi 0, %s136
      %s151 = sphi 0, %s137
      %s157 = sphi 0, %s159
      %s160 = sphi 0, %s157
      %s161 = sphi 0, %s160
      %s177 = sphi 0, %s161
    $region4: #{tpu_custom_call.1} parent=1 // loop_header_branch
      %19 = sbr.rel (%p17) target = $region8
    $region5: #{tpu_custom_call.1} parent=1 // loop_body
      %s21 = ssub.s32 %s16, 1
      %s22 = ssub.s32 %s16, 2
      %s23 = sadd.s32 %s16, 1
      %s24 = ssub.s32 %s16, %s23
      %p25 = scmp.eq.s32.totalorder %s24, 0
      %s27 = sadd.s32 %s26, 1
      %s28 = scalar_select %p25, %s26, %s27
      %p31 = pneg %p25
      %p32 = scmp.eq.s32.totalorder %s16, 1
      %p33 = por %p31, %p32
      %p34 = scmp.ne.s32.totalorder %s26, %s29
      %p35 = scmp.eq.s32.totalorder %s16, 0
      %p36 = por %p34, %p35
      %p37 = scmp.ne.s32.totalorder %s26, %s29
      %p38 = scmp.eq.s32.totalorder %s21, 1
      %p39 = por %p37, %p38
      %p40 = scmp.ne.s32.totalorder %s29, %s30
      %p41 = scmp.eq.s32.totalorder %s21, 0
      %p42 = por %p40, %p41
      %p43 = scmp.ne.s32.totalorder %s29, %s30
      %p44 = scmp.eq.s32.totalorder %s22, 1
      %p45 = por %p43, %p44
      %p47 = scmp.ne.s32.totalorder %s30, %s46
      %p48 = scmp.eq.s32.totalorder %s22, 0
      %p49 = por %p47, %p48
      %s51 = sadd.s32 %s50, 1
      %p54 = scmp.eq.s32.totalorder %s16, 1
      %p55 = scmp.ne.s32.totalorder %s50, %s52
      %p56 = scmp.eq.s32.totalorder %s16, 0
      %p57 = por %p55, %p56
      %p58 = scmp.ne.s32.totalorder %s50, %s52
      %p59 = scmp.eq.s32.totalorder %s21, 1
      %p60 = por %p58, %p59
      %p61 = scmp.ne.s32.totalorder %s52, %s53
      %p62 = scmp.eq.s32.totalorder %s21, 0
      %p63 = por %p61, %p62
      %p64 = scmp.ne.s32.totalorder %s52, %s53
      %p65 = scmp.eq.s32.totalorder %s22, 1
      %p66 = por %p64, %p65
      %p68 = scmp.ne.s32.totalorder %s53, %s67
      %p69 = scmp.eq.s32.totalorder %s22, 0
      %p70 = por %p68, %p69
      %s72 = sadd.s32 %s71, 1
      %p75 = scmp.eq.s32.totalorder %s16, 1
      %p76 = scmp.ne.s32.totalorder %s71, %s73
      %p77 = scmp.eq.s32.totalorder %s16, 0
      %p78 = por %p76, %p77
      %p79 = scmp.ne.s32.totalorder %s71, %s73
      %p80 = scmp.eq.s32.totalorder %s21, 1
      %p81 = por %p79, %p80
      %p82 = scmp.ne.s32.totalorder %s73, %s74
      %p83 = scmp.eq.s32.totalorder %s21, 0
      %p84 = por %p82, %p83
      %p85 = scmp.ne.s32.totalorder %s73, %s74
      %p86 = scmp.eq.s32.totalorder %s22, 1
      %p87 = por %p85, %p86
      %p89 = scmp.ne.s32.totalorder %s74, %s88
      %p90 = scmp.eq.s32.totalorder %s22, 0
      %p91 = por %p89, %p90
      %s93 = sadd.s32 %s92, 1
      %p96 = scmp.eq.s32.totalorder %s16, 1
      %p97 = scmp.ne.s32.totalorder %s92, %s94
      %p98 = scmp.eq.s32.totalorder %s16, 0
      %p99 = por %p97, %p98
      %p100 = scmp.ne.s32.totalorder %s92, %s94
      %p101 = scmp.eq.s32.totalorder %s21, 1
      %p102 = por %p100, %p101
      %p103 = scmp.ne.s32.totalorder %s94, %s95
      %p104 = scmp.eq.s32.totalorder %s21, 0
      %p105 = por %p103, %p104
      %p106 = scmp.ne.s32.totalorder %s94, %s95
      %p107 = scmp.eq.s32.totalorder %s22, 1
      %p108 = por %p106, %p107
      %p110 = scmp.ne.s32.totalorder %s95, %s109
      %p111 = scmp.eq.s32.totalorder %s22, 0
      %p112 = por %p110, %p111
      %s114 = sadd.s32 %s113, 1
      %p117 = scmp.eq.s32.totalorder %s16, 1
      %p118 = scmp.ne.s32.totalorder %s113, %s115
      %p119 = scmp.eq.s32.totalorder %s16, 0
      %p120 = por %p118, %p119
      %p121 = scmp.ne.s32.totalorder %s113, %s115
      %p122 = scmp.eq.s32.totalorder %s21, 1
      %p123 = por %p121, %p122
      %p124 = scmp.ne.s32.totalorder %s115, %s116
      %p125 = scmp.eq.s32.totalorder %s21, 0
      %p126 = por %p124, %p125
      %p127 = scmp.ne.s32.totalorder %s115, %s116
      %p128 = scmp.eq.s32.totalorder %s22, 1
      %p129 = por %p127, %p128
      %p131 = scmp.ne.s32.totalorder %s116, %s130
      %p132 = scmp.eq.s32.totalorder %s22, 0
      %p133 = por %p131, %p132
      %s135 = sadd.s32 %s134, 1
      %p138 = scmp.eq.s32.totalorder %s16, 1
      %p139 = scmp.ne.s32.totalorder %s134, %s136
      %p140 = scmp.eq.s32.totalorder %s16, 0
      %p141 = por %p139, %p140
      %p142 = scmp.ne.s32.totalorder %s134, %s136
      %p143 = scmp.eq.s32.totalorder %s21, 1
      %p144 = por %p142, %p143
      %p145 = scmp.ne.s32.totalorder %s136, %s137
      %p146 = scmp.eq.s32.totalorder %s21, 0
      %p147 = por %p145, %p146
      %p148 = scmp.ne.s32.totalorder %s136, %s137
      %p149 = scmp.eq.s32.totalorder %s22, 1
      %p150 = por %p148, %p149
      %p152 = scmp.ne.s32.totalorder %s137, %s151
      %p153 = scmp.eq.s32.totalorder %s22, 0
      %p154 = por %p152, %p153
      %s155 = ssub.s32 %s16, %s23
      %p156 = scmp.eq.s32.totalorder %s155, 0
      %s158 = sadd.s32 %s157, 1
      %s159 = scalar_select %p156, %s157, %s158
      %p162 = pneg %p156
      %p163 = scmp.eq.s32.totalorder %s16, 1
      %p164 = por %p162, %p163
      %p165 = scmp.ne.s32.totalorder %s157, %s160
      %p166 = scmp.eq.s32.totalorder %s16, 0
      %p167 = por %p165, %p166
      %p168 = scmp.ne.s32.totalorder %s157, %s160
      %p169 = scmp.eq.s32.totalorder %s21, 1
      %p170 = por %p168, %p169
      %p171 = scmp.ne.s32.totalorder %s160, %s161
      %p172 = scmp.eq.s32.totalorder %s21, 0
      %p173 = por %p171, %p172
      %p174 = scmp.ne.s32.totalorder %s160, %s161
      %p175 = scmp.eq.s32.totalorder %s22, 1
      %p176 = por %p174, %p175
      %p178 = scmp.ne.s32.totalorder %s161, %s177
      %p179 = scmp.eq.s32.totalorder %s22, 0
      %p180 = por %p178, %p179
      %p181 = scmp.le.s32.totalorder 1, %s16
      %p182 = scmp.lt.s32.totalorder %s16, 3
      %p183 = pnand %p181, %p182
      %p184 = pneg %p183
      // Predicated region
      $region9: #{tpu_custom_call.1} parent=5 // pred_check
        _
      $region10: #{tpu_custom_call.1} parent=5 // pred_check_branch
        %186 = sbr.rel (%p183) target = $region12
      $region11: #{tpu_custom_call.1} parent=5 // pred_region
        %s187 = ssub.s32 %s16, 1
        // Predicated region
        $region13: #{tpu_custom_call.1} parent=11 // pred_check
          %p188 = pneg %p63
        $region14: #{tpu_custom_call.1} parent=11 // pred_check_branch
          %190 = sbr.rel (%p188) target = $region16
        $region15: #{tpu_custom_call.1} parent=11 // pred_region
          %s192 = ssub.s32 1024, 1024
          %193 = vsyncadd [#allocation3], %s192
          %s194 = sshll.u32 [#allocation2], 4
          %s195 = int_to_ptr.vmem [resolvable:$true] %s194
          %200 = dma.hbm_to_vmem [thread:$0]  %s1, 1024, %s195, [#allocation3], 64, 64, 4
        $region16: #{tpu_custom_call.1} parent=11 // pred_fallthru
          _
        // Predicated region
        $region17: #{tpu_custom_call.1} parent=11 // pred_check
          %p201 = pneg %p84
        $region18: #{tpu_custom_call.1} parent=11 // pred_check_branch
          %203 = sbr.rel (%p201) target = $region20
        $region19: #{tpu_custom_call.1} parent=11 // pred_region
          _
        $region20: #{tpu_custom_call.1} parent=11 // pred_fallthru
          _
        // Predicated region
        $region21: #{tpu_custom_call.1} parent=11 // pred_check
          %p204 = pneg %p105
        $region22: #{tpu_custom_call.1} parent=11 // pred_check_branch
          %206 = sbr.rel (%p204) target = $region24
        $region23: #{tpu_custom_call.1} parent=11 // pred_region
          _
        $region24: #{tpu_custom_call.1} parent=11 // pred_fallthru
          _
        // Predicated region
        $region25: #{tpu_custom_call.1} parent=11 // pred_check
          %p207 = pneg %p126
        $region26: #{tpu_custom_call.1} parent=11 // pred_check_branch
          %209 = sbr.rel (%p207) target = $region28
        $region27: #{tpu_custom_call.1} parent=11 // pred_region
          _
        $region28: #{tpu_custom_call.1} parent=11 // pred_fallthru
          _
        // Predicated region
        $region29: #{tpu_custom_call.1} parent=11 // pred_check
          %p210 = pneg %p147
        $region30: #{tpu_custom_call.1} parent=11 // pred_check_branch
          %212 = sbr.rel (%p210) target = $region32
        $region31: #{tpu_custom_call.1} parent=11 // pred_region
          _
        $region32: #{tpu_custom_call.1} parent=11 // pred_fallthru
          _
      $region12: #{tpu_custom_call.1} parent=5 // pred_fallthru
        _
      %p213 = scmp.lt.s32.totalorder %s16, 2
      // Predicated region
      $region33: #{tpu_custom_call.1} parent=5 // pred_check
        %p214 = pneg %p213
      $region34: #{tpu_custom_call.1} parent=5 // pred_check_branch
        %216 = sbr.rel (%p214) target = $region36
      $region35: #{tpu_custom_call.1} parent=5 // pred_region
        // Predicated region
        $region37: #{tpu_custom_call.1} parent=35 // pred_check
          %p217 = pneg %p36
        $region38: #{tpu_custom_call.1} parent=35 // pred_check_branch
          %219 = sbr.rel (%p217) target = $region40
        $region39: #{tpu_custom_call.1} parent=35 // pred_region
          %s220 = smul.u32 8, %s16
          %p221 = scmp.lt.s32.totalorder %s220, 15
          %s222 = scalar_select %p221, %s220, 15
          %s223 = smul.addr %s222, 4
          %s224 = scalar_lea.vmem %s0, %s223
          %s225 = smul.u32 8, %s16
        $region40: #{tpu_custom_call.1} parent=35 // pred_fallthru
          _
      $region36: #{tpu_custom_call.1} parent=5 // pred_fallthru
        _
      %p226 = scmp.le.s32.totalorder 1, %s16
      %p227 = scmp.lt.s32.totalorder %s16, 3
      %p228 = pnand %p226, %p227
      %p229 = pneg %p228
      // Predicated region
      $region41: #{tpu_custom_call.1} parent=5 // pred_check
        _
      $region42: #{tpu_custom_call.1} parent=5 // pred_check_branch
        %231 = sbr.rel (%p228) target = $region44
      $region43: #{tpu_custom_call.1} parent=5 // pred_region
        %s232 = ssub.s32 %s16, 1
        // Predicated region
        $region45: #{tpu_custom_call.1} parent=43 // pred_check
          %p233 = pneg %p63
        $region46: #{tpu_custom_call.1} parent=43 // pred_check_branch
          %235 = sbr.rel (%p233) target = $region48
        $region47: #{tpu_custom_call.1} parent=43 // pred_region
          %236 = dma.done [#allocation3], 1024
        $region48: #{tpu_custom_call.1} parent=43 // pred_fallthru
          _
        %s237 = smul.u32 8, %s21
        %p238 = scmp.lt.s32.totalorder %s237, 15
        %s239 = scalar_select %p238, %s237, 15
        %s240 = smul.addr %s239, 4
        %s241 = scalar_lea.vmem %s0, %s240
        %p242 = pneg %p42
        %p243 = pneg %p39
        %p244 = pneg %p63
        %p245 = pneg %p60
        %p246 = pneg %p84
        %p247 = pneg %p81
        %p248 = pneg %p105
        %p249 = pneg %p102
        %p250 = pneg %p126
        %p251 = pneg %p123
        %p252 = pneg %p147
        %p253 = pneg %p144
        %p254 = pneg %p173
        %p255 = pneg %p170
        %s256 = sand.u32 %s160, 1
        %s257 = scalar_lea.sflag [#allocation4], %s256
        %s258 = sand.u32 %s160, 1
        %s259 = smul.addr %s258, 128
        %s260 = scalar_lea.vmem [#allocation5], %s259
        %s261 = smul.u32 8, %s21
        %p262 = scmp.lt.s32.totalorder %s261, 15
        %s263 = scalar_select %p262, %s261, 15
        %s264 = smul.addr %s263, 4
        %s265 = scalar_lea.vmem %s0, %s264
        %s266 = smul.u32 8, %s21
        %s267 = smul.u32 8, %s21
        %v269 = vld [vmem:[%s265] sm:$0xf]
        %v270 = vld [vmem:[%s265 + $0x4] sm:$0xf]
        %v271 = vld [vmem:[%s265 + $0x8] sm:$0xf]
        %v272 = vld [vmem:[%s265 + $0xc] sm:$0xf]
        %v273 = vld [vmem:[%s265 + $0x10] sm:$0xf]
        %v274 = vld [vmem:[%s265 + $0x14] sm:$0xf]
        %v275 = vld [vmem:[%s265 + $0x18] sm:$0xf]
        %v276 = vld [vmem:[%s265 + $0x1c] sm:$0xf]
        %v277 = vld [vmem:[%s2] sm:$0x1]
        %v278 = vld [vmem:[%s3] sm:$0x1]
        %v279 = vld [vmem:[%s4] sm:$0xff]
        %v280 = vld [vmem:[%s4 + $0x8] sm:$0xff]
        %v281 = vld [vmem:[%s4 + $0x10] sm:$0xff]
        %v282 = vld [vmem:[%s4 + $0x18] sm:$0xff]
        %v283 = vld [vmem:[%s4 + $0x20] sm:$0xff]
        %v284 = vld [vmem:[%s4 + $0x28] sm:$0xff]
        %v285 = vld [vmem:[%s4 + $0x30] sm:$0xff]
        %v286 = vld [vmem:[%s4 + $0x38] sm:$0xff]
        %v287 = vld [vmem:[%s5] sm:$0x3]
        %v288 = vld [vmem:[#allocation2] sm:$0xf]
        %v289 = vld [vmem:[#allocation2 + $0x4] sm:$0xf]
        %v290 = vld [vmem:[#allocation2 + $0x8] sm:$0xf]
        %v291 = vld [vmem:[#allocation2 + $0xc] sm:$0xf]
        %v292 = vld [vmem:[#allocation2 + $0x10] sm:$0xf]
        %v293 = vld [vmem:[#allocation2 + $0x14] sm:$0xf]
        %v294 = vld [vmem:[#allocation2 + $0x18] sm:$0xf]
        %v295 = vld [vmem:[#allocation2 + $0x1c] sm:$0xf]
        %v304 = vunpack.c.l.b16 %v269
        %v305 = vunpack.c.l.b16 %v270
        %v306 = vunpack.c.l.b16 %v271
        %v307 = vunpack.c.l.b16 %v272
        %v308 = vunpack.c.l.b16 %v273
        %v309 = vunpack.c.l.b16 %v274
        %v310 = vunpack.c.l.b16 %v275
        %v311 = vunpack.c.l.b16 %v276
        %v312 = vpack.c.b16 %v305, %v304
        %v313 = vpack.c.b16 %v307, %v306
        %v314 = vpack.c.b16 %v309, %v308
        %v315 = vpack.c.b16 %v311, %v310
        %v324 = vunpack.c.l.b16 %v288
        %v325 = vunpack.c.l.b16 %v289
        %v326 = vunpack.c.l.b16 %v290
        %v327 = vunpack.c.l.b16 %v291
        %v328 = vunpack.c.l.b16 %v292
        %v329 = vunpack.c.l.b16 %v293
        %v330 = vunpack.c.l.b16 %v294
        %v331 = vunpack.c.l.b16 %v295
        %v332 = vpack.c.b16 %v325, %v324
        %v333 = vpack.c.b16 %v327, %v326
        %v334 = vpack.c.b16 %v329, %v328
        %v335 = vpack.c.b16 %v331, %v330
        %vm340 = vcmask 523264
        %v342 = vsel %vm340, %v312, 0
        %v345 = vsel %vm340, %v313, 0
        %v348 = vsel %vm340, %v314, 0
        %v351 = vsel %vm340, %v315, 0
        %353 = vmatprep.subr.bf16.mxu0 0
        %354 = vmatpush1.bf16.msra.mxu0 %v332
        %355 = vmatprep.subr.bf16.mxu0 0
        %356 = vmatpush1.bf16.msra.mxu0 %v333
        %357 = vmatprep.subr.bf16.mxu0 0
        %358 = vmatpush1.bf16.msra.mxu0 %v334
        %359 = vmatprep.subr.bf16.mxu0 0
        %360 = vmatpush1.bf16.msra.mxu0 %v335
        %361 = vmatprep.subr.bf16.mxu0 0
        %362 = vmatpush1.bf16.msra.mxu0 0
        %363 = vmatprep.subr.bf16.mxu0 0
        %364 = vmatpush1.bf16.msra.mxu0 0
        %365 = vmatprep.subr.bf16.mxu0 0
        %366 = vmatpush1.bf16.msra.mxu0 0
        %367 = vmatprep.subr.bf16.mxu0 0
        %368 = vmatpush1.bf16.msra.mxu0 0
        %369 = vmatprep.subr.bf16.mxu0 0
        %370 = vmatpush1.bf16.msra.mxu0 0
        %371 = vmatprep.subr.bf16.mxu0 0
        %372 = vmatpush1.bf16.msra.mxu0 0
        %373 = vmatprep.subr.bf16.mxu0 0
        %374 = vmatpush1.bf16.msra.mxu0 0
        %375 = vmatprep.subr.bf16.mxu0 0
        %376 = vmatpush1.bf16.msra.mxu0 0
        %377 = vmatprep.subr.bf16.mxu0 0
        %378 = vmatpush1.bf16.msra.mxu0 0
        %379 = vmatprep.subr.bf16.mxu0 0
        %380 = vmatpush1.bf16.msra.mxu0 0
        %381 = vmatprep.subr.bf16.mxu0 0
        %382 = vmatpush1.bf16.msra.mxu0 0
        %383 = vmatprep.subr.bf16.mxu0 0
        %384 = vmatpush1.bf16.msra.mxu0 0
        %385 = vmatprep.mubr.bf16.mxu0 0
        %386 = vmatmul.mubr.bf16.gmra.mrb[0].mxu0 %v342
        %v387 = vpop.f32.mrb[0].mxu0
        %v388 = vadd.f32 0.0, %v387
        %v389 = vpop.f32.mrb[0].mxu0
        %v390 = vpop.f32.mrb[0].mxu0
        %v391 = vadd.f32 0.0, %v390
        %v392 = vpop.f32.mrb[0].mxu0
        %393 = vmatprep.mubr.bf16.mxu0 0
        %394 = vmatmul.mubr.bf16.gmra.mrb[0].mxu0 %v345
        %v395 = vpop.f32.mrb[0].mxu0
        %v396 = vadd.f32 0.0, %v395
        %v397 = vpop.f32.mrb[0].mxu0
        %v398 = vpop.f32.mrb[0].mxu0
        %v399 = vadd.f32 0.0, %v398
        %v400 = vpop.f32.mrb[0].mxu0
        %401 = vmatprep.mubr.bf16.mxu0 0
        %402 = vmatmul.mubr.bf16.gmra.mrb[0].mxu0 %v348
        %v403 = vpop.f32.mrb[0].mxu0
        %v404 = vadd.f32 0.0, %v403
        %v405 = vpop.f32.mrb[0].mxu0
        %v406 = vpop.f32.mrb[0].mxu0
        %v407 = vadd.f32 0.0, %v406
        %v408 = vpop.f32.mrb[0].mxu0
        %409 = vmatprep.mubr.bf16.mxu0 0
        %410 = vmatmul.mubr.bf16.gmra.mrb[0].mxu0 %v351
        %v411 = vpop.f32.mrb[0].mxu0
        %v412 = vadd.f32 0.0, %v411
        %v413 = vpop.f32.mrb[0].mxu0
        %v414 = vpop.f32.mrb[0].mxu0
        %v415 = vadd.f32 0.0, %v414
        %v416 = vpop.f32.mrb[0].mxu0
        %417 = vdwg.mxu0
        %v419 = vsel %vm340, %v388, 0
        %v422 = vsel %vm340, %v391, 0
        %v425 = vsel %vm340, %v396, 0
        %v428 = vsel %vm340, %v399, 0
        %v431 = vsel %vm340, %v404, 0
        %v434 = vsel %vm340, %v407, 0
        %v437 = vsel %vm340, %v412, 0
        %v440 = vsel %vm340, %v415, 0
        %442 = vmatprep.subr.mxu0 0.0
        %443 = vmatpush1.msra.mxu0 %v279
        %444 = vmatprep.subr.mxu0 0.0
        %445 = vmatpush1.msra.mxu0 %v280
        %446 = vmatprep.subr.mxu0 0.0
        %447 = vmatpush1.msra.mxu0 %v281
        %448 = vmatprep.subr.mxu0 0.0
        %449 = vmatpush1.msra.mxu0 %v282
        %450 = vmatprep.subr.mxu0 0.0
        %451 = vmatpush1.msra.mxu0 %v283
        %452 = vmatprep.subr.mxu0 0.0
        %453 = vmatpush1.msra.mxu0 %v284
        %454 = vmatprep.subr.mxu0 0.0
        %455 = vmatpush1.msra.mxu0 %v285
        %456 = vmatprep.subr.mxu0 0.0
        %457 = vmatpush1.msra.mxu0 %v286
        %458 = vmatprep.subr.mxu0 0.0
        %459 = vmatpush1.msra.mxu0 0.0
        %460 = vmatprep.subr.mxu0 0.0
        %461 = vmatpush1.msra.mxu0 0.0
        %462 = vmatprep.subr.mxu0 0.0
        %463 = vmatpush1.msra.mxu0 0.0
        %464 = vmatprep.subr.mxu0 0.0
        %465 = vmatpush1.msra.mxu0 0.0
        %466 = vmatprep.subr.mxu0 0.0
        %467 = vmatpush1.msra.mxu0 0.0
        %468 = vmatprep.subr.mxu0 0.0
        %469 = vmatpush1.msra.mxu0 0.0
        %470 = vmatprep.subr.mxu0 0.0
        %471 = vmatpush1.msra.mxu0 0.0
        %472 = vmatprep.subr.mxu0 0.0
        %473 = vmatpush1.msra.mxu0 0.0
        %474 = vmatprep.subr.mxu0 0.0
        %475 = vmatpush1.msra.mxu0 0.0
        %476 = vmatprep.subr.mxu0 0.0
        %477 = vmatpush1.msra.mxu0 0.0
        %478 = vmatprep.subr.mxu0 0.0
        %479 = vmatpush1.msra.mxu0 0.0
        %480 = vmatprep.subr.mxu0 0.0
        %481 = vmatpush1.msra.mxu0 0.0
        %482 = vmatprep.subr.mxu0 0.0
        %483 = vmatpush1.msra.mxu0 0.0
        %484 = vmatprep.subr.mxu0 0.0
        %485 = vmatpush1.msra.mxu0 0.0
        %486 = vmatprep.subr.mxu0 0.0
        %487 = vmatpush1.msra.mxu0 0.0
        %488 = vmatprep.subr.mxu0 0.0
        %489 = vmatpush1.msra.mxu0 0.0
        %490 = vmatprep.subr.mxu0 0.0
        %491 = vmatpush1.msra.mxu0 0.0
        %492 = vmatprep.subr.mxu0 0.0
        %493 = vmatpush1.msra.mxu0 0.0
        %494 = vmatprep.subr.mxu0 0.0
        %495 = vmatpush1.msra.mxu0 0.0
        %496 = vmatprep.subr.mxu0 0.0
        %497 = vmatpush1.msra.mxu0 0.0
        %498 = vmatprep.subr.mxu0 0.0
        %499 = vmatpush1.msra.mxu0 0.0
        %500 = vmatprep.subr.mxu0 0.0
        %501 = vmatpush1.msra.mxu0 0.0
        %502 = vmatprep.subr.mxu0 0.0
        %503 = vmatpush1.msra.mxu0 0.0
        %504 = vmatprep.subr.mxu0 0.0
        %505 = vmatpush1.msra.mxu0 0.0
        %506 = vmatprep.mubr.f32.mxu0 0.0
        %507 = vmatmul.mubr.f32.gmra.mrb[0].mxu0 %v419
        %v508 = vpop.f32.mrb[0].mxu0
        %v509 = vadd.f32 0.0, %v508
        %v510 = vpop.f32.mrb[0].mxu0
        %511 = vmatprep.mubr.f32.mxu0 0.0
        %512 = vmatmul.mubr.f32.gmra.mrb[0].mxu0 %v422
        %v513 = vpop.f32.mrb[0].mxu0
        %v514 = vadd.f32 0.0, %v513
        %v515 = vpop.f32.mrb[0].mxu0
        %516 = vmatprep.mubr.f32.mxu0 0.0
        %517 = vmatmul.mubr.f32.gmra.mrb[0].mxu0 %v425
        %v518 = vpop.f32.mrb[0].mxu0
        %v519 = vadd.f32 0.0, %v518
        %v520 = vpop.f32.mrb[0].mxu0
        %521 = vmatprep.mubr.f32.mxu0 0.0
        %522 = vmatmul.mubr.f32.gmra.mrb[0].mxu0 %v428
        %v523 = vpop.f32.mrb[0].mxu0
        %v524 = vadd.f32 0.0, %v523
        %v525 = vpop.f32.mrb[0].mxu0
        %526 = vmatprep.mubr.f32.mxu0 0.0
        %527 = vmatmul.mubr.f32.gmra.mrb[0].mxu0 %v431
        %v528 = vpop.f32.mrb[0].mxu0
        %v529 = vadd.f32 0.0, %v528
        %v530 = vpop.f32.mrb[0].mxu0
        %531 = vmatprep.mubr.f32.mxu0 0.0
        %532 = vmatmul.mubr.f32.gmra.mrb[0].mxu0 %v434
        %v533 = vpop.f32.mrb[0].mxu0
        %v534 = vadd.f32 0.0, %v533
        %v535 = vpop.f32.mrb[0].mxu0
        %536 = vmatprep.mubr.f32.mxu0 0.0
        %537 = vmatmul.mubr.f32.gmra.mrb[0].mxu0 %v437
        %v538 = vpop.f32.mrb[0].mxu0
        %v539 = vadd.f32 0.0, %v538
        %v540 = vpop.f32.mrb[0].mxu0
        %541 = vmatprep.mubr.f32.mxu0 0.0
        %542 = vmatmul.mubr.f32.gmra.mrb[0].mxu0 %v440
        %v543 = vpop.f32.mrb[0].mxu0
        %v544 = vadd.f32 0.0, %v543
        %v545 = vpop.f32.mrb[0].mxu0
        %546 = vdwg.mxu0
        %v547 = vmul.f32 %v509, 0.03125
        %v548 = vmul.f32 %v514, 0.03125
        %v549 = vmul.f32 %v519, 0.03125
        %v550 = vmul.f32 %v524, 0.03125
        %v551 = vmul.f32 %v529, 0.03125
        %v552 = vmul.f32 %v534, 0.03125
        %v553 = vmul.f32 %v539, 0.03125
        %v554 = vmul.f32 %v544, 0.03125
        %vm555 = vcmask 15360
        %v557 = vsel %vm555, %v547, 0
        %v560 = vsel %vm555, %v548, 0
        %v563 = vsel %vm555, %v549, 0
        %v566 = vsel %vm555, %v550, 0
        %v569 = vsel %vm555, %v551, 0
        %v572 = vsel %vm555, %v552, 0
        %v575 = vsel %vm555, %v553, 0
        %v578 = vsel %vm555, %v554, 0
        %vm580 = vcmask 1041408
        %v582 = vsel %vm580, %v287, 0
        %584 = vmatprep.subr.mxu0 0.0
        %585 = vmatpush1.msra.mxu0 %v582
        %586 = vmatprep.subr.mxu0 0.0
        %587 = vmatpush1.msra.mxu0 0.0
        %588 = vmatprep.subr.mxu0 0.0
        %589 = vmatpush1.msra.mxu0 0.0
        %590 = vmatprep.subr.mxu0 0.0
        %591 = vmatpush1.msra.mxu0 0.0
        %592 = vmatprep.subr.mxu0 0.0
        %593 = vmatpush1.msra.mxu0 0.0
        %594 = vmatprep.subr.mxu0 0.0
        %595 = vmatpush1.msra.mxu0 0.0
        %596 = vmatprep.subr.mxu0 0.0
        %597 = vmatpush1.msra.mxu0 0.0
        %598 = vmatprep.subr.mxu0 0.0
        %599 = vmatpush1.msra.mxu0 0.0
        %600 = vmatprep.subr.mxu0 0.0
        %601 = vmatpush1.msra.mxu0 0.0
        %602 = vmatprep.subr.mxu0 0.0
        %603 = vmatpush1.msra.mxu0 0.0
        %604 = vmatprep.subr.mxu0 0.0
        %605 = vmatpush1.msra.mxu0 0.0
        %606 = vmatprep.subr.mxu0 0.0
        %607 = vmatpush1.msra.mxu0 0.0
        %608 = vmatprep.subr.mxu0 0.0
        %609 = vmatpush1.msra.mxu0 0.0
        %610 = vmatprep.subr.mxu0 0.0
        %611 = vmatpush1.msra.mxu0 0.0
        %612 = vmatprep.subr.mxu0 0.0
        %613 = vmatpush1.msra.mxu0 0.0
        %614 = vmatprep.subr.mxu0 0.0
        %615 = vmatpush1.msra.mxu0 0.0
        %616 = vmatprep.subr.mxu0 0.0
        %617 = vmatpush1.msra.mxu0 0.0
        %618 = vmatprep.subr.mxu0 0.0
        %619 = vmatpush1.msra.mxu0 0.0
        %620 = vmatprep.subr.mxu0 0.0
        %621 = vmatpush1.msra.mxu0 0.0
        %622 = vmatprep.subr.mxu0 0.0
        %623 = vmatpush1.msra.mxu0 0.0
        %624 = vmatprep.subr.mxu0 0.0
        %625 = vmatpush1.msra.mxu0 0.0
        %626 = vmatprep.subr.mxu0 0.0
        %627 = vmatpush1.msra.mxu0 0.0
        %628 = vmatprep.subr.mxu0 0.0
        %629 = vmatpush1.msra.mxu0 0.0
        %630 = vmatprep.subr.mxu0 0.0
        %631 = vmatpush1.msra.mxu0 0.0
        %632 = vmatprep.subr.mxu0 0.0
        %633 = vmatpush1.msra.mxu0 0.0
        %634 = vmatprep.subr.mxu0 0.0
        %635 = vmatpush1.msra.mxu0 0.0
        %636 = vmatprep.subr.mxu0 0.0
        %637 = vmatpush1.msra.mxu0 0.0
        %638 = vmatprep.subr.mxu0 0.0
        %639 = vmatpush1.msra.mxu0 0.0
        %640 = vmatprep.subr.mxu0 0.0
        %641 = vmatpush1.msra.mxu0 0.0
        %642 = vmatprep.subr.mxu0 0.0
        %643 = vmatpush1.msra.mxu0 0.0
        %644 = vmatprep.subr.mxu0 0.0
        %645 = vmatpush1.msra.mxu0 0.0
        %646 = vmatprep.subr.mxu0 0.0
        %647 = vmatpush1.msra.mxu0 0.0
        %648 = vmatprep.mubr.f32.mxu0 0.0
        %649 = vmatmul.mubr.f32.gmra.mrb[0].mxu0 %v557
        %v650 = vpop.f32.mrb[0].mxu0
        %v651 = vadd.f32 0.0, %v650
        %v652 = vpop.f32.mrb[0].mxu0
        %653 = vmatprep.mubr.f32.mxu0 0.0
        %654 = vmatmul.mubr.f32.gmra.mrb[0].mxu0 %v560
        %v655 = vpop.f32.mrb[0].mxu0
        %v656 = vadd.f32 0.0, %v655
        %v657 = vpop.f32.mrb[0].mxu0
        %658 = vmatprep.mubr.f32.mxu0 0.0
        %659 = vmatmul.mubr.f32.gmra.mrb[0].mxu0 %v563
        %v660 = vpop.f32.mrb[0].mxu0
        %v661 = vadd.f32 0.0, %v660
        %v662 = vpop.f32.mrb[0].mxu0
        %663 = vmatprep.mubr.f32.mxu0 0.0
        %664 = vmatmul.mubr.f32.gmra.mrb[0].mxu0 %v566
        %v665 = vpop.f32.mrb[0].mxu0
        %v666 = vadd.f32 0.0, %v665
        %v667 = vpop.f32.mrb[0].mxu0
        %668 = vmatprep.mubr.f32.mxu0 0.0
        %669 = vmatmul.mubr.f32.gmra.mrb[0].mxu0 %v569
        %v670 = vpop.f32.mrb[0].mxu0
        %v671 = vadd.f32 0.0, %v670
        %v672 = vpop.f32.mrb[0].mxu0
        %673 = vmatprep.mubr.f32.mxu0 0.0
        %674 = vmatmul.mubr.f32.gmra.mrb[0].mxu0 %v572
        %v675 = vpop.f32.mrb[0].mxu0
        %v676 = vadd.f32 0.0, %v675
        %v677 = vpop.f32.mrb[0].mxu0
        %678 = vmatprep.mubr.f32.mxu0 0.0
        %679 = vmatmul.mubr.f32.gmra.mrb[0].mxu0 %v575
        %v680 = vpop.f32.mrb[0].mxu0
        %v681 = vadd.f32 0.0, %v680
        %v682 = vpop.f32.mrb[0].mxu0
        %683 = vmatprep.mubr.f32.mxu0 0.0
        %684 = vmatmul.mubr.f32.gmra.mrb[0].mxu0 %v578
        %v685 = vpop.f32.mrb[0].mxu0
        %v686 = vadd.f32 0.0, %v685
        %v687 = vpop.f32.mrb[0].mxu0
        %688 = vdwg.mxu0
        %v689 = vsub.f32 %v388, %v651
        %v690 = vsub.f32 %v391, %v656
        %v691 = vsub.f32 %v396, %v661
        %v692 = vsub.f32 %v399, %v666
        %v693 = vsub.f32 %v404, %v671
        %v694 = vsub.f32 %v407, %v676
        %v695 = vsub.f32 %v412, %v681
        %v696 = vsub.f32 %v415, %v686
        %v697 = vmul.f32 %v689, %v689
        %v698 = vmul.f32 %v690, %v690
        %v699 = vmul.f32 %v691, %v691
        %v700 = vmul.f32 %v692, %v692
        %v701 = vmul.f32 %v693, %v693
        %v702 = vmul.f32 %v694, %v694
        %v703 = vmul.f32 %v695, %v695
        %v704 = vmul.f32 %v696, %v696
        %v706 = vsel %vm340, %v697, 0
        %v709 = vsel %vm340, %v698, 0
        %v712 = vsel %vm340, %v699, 0
        %v715 = vsel %vm340, %v700, 0
        %v718 = vsel %vm340, %v701, 0
        %v721 = vsel %vm340, %v702, 0
        %v724 = vsel %vm340, %v703, 0
        %v727 = vsel %vm340, %v704, 0
        %729 = vmatprep.subr.mxu0 0.0
        %730 = vmatpush1.msra.mxu0 %v279
        %731 = vmatprep.subr.mxu0 0.0
        %732 = vmatpush1.msra.mxu0 %v280
        %733 = vmatprep.subr.mxu0 0.0
        %734 = vmatpush1.msra.mxu0 %v281
        %735 = vmatprep.subr.mxu0 0.0
        %736 = vmatpush1.msra.mxu0 %v282
        %737 = vmatprep.subr.mxu0 0.0
        %738 = vmatpush1.msra.mxu0 %v283
        %739 = vmatprep.subr.mxu0 0.0
        %740 = vmatpush1.msra.mxu0 %v284
        %741 = vmatprep.subr.mxu0 0.0
        %742 = vmatpush1.msra.mxu0 %v285
        %743 = vmatprep.subr.mxu0 0.0
        %744 = vmatpush1.msra.mxu0 %v286
        %745 = vmatprep.subr.mxu0 0.0
        %746 = vmatpush1.msra.mxu0 0.0
        %747 = vmatprep.subr.mxu0 0.0
        %748 = vmatpush1.msra.mxu0 0.0
        %749 = vmatprep.subr.mxu0 0.0
        %750 = vmatpush1.msra.mxu0 0.0
        %751 = vmatprep.subr.mxu0 0.0
        %752 = vmatpush1.msra.mxu0 0.0
        %753 = vmatprep.subr.mxu0 0.0
        %754 = vmatpush1.msra.mxu0 0.0
        %755 = vmatprep.subr.mxu0 0.0
        %756 = vmatpush1.msra.mxu0 0.0
        %757 = vmatprep.subr.mxu0 0.0
        %758 = vmatpush1.msra.mxu0 0.0
        %759 = vmatprep.subr.mxu0 0.0
        %760 = vmatpush1.msra.mxu0 0.0
        %761 = vmatprep.subr.mxu0 0.0
        %762 = vmatpush1.msra.mxu0 0.0
        %763 = vmatprep.subr.mxu0 0.0
        %764 = vmatpush1.msra.mxu0 0.0
        %765 = vmatprep.subr.mxu0 0.0
        %766 = vmatpush1.msra.mxu0 0.0
        %767 = vmatprep.subr.mxu0 0.0
        %768 = vmatpush1.msra.mxu0 0.0
        %769 = vmatprep.subr.mxu0 0.0
        %770 = vmatpush1.msra.mxu0 0.0
        %771 = vmatprep.subr.mxu0 0.0
        %772 = vmatpush1.msra.mxu0 0.0
        %773 = vmatprep.subr.mxu0 0.0
        %774 = vmatpush1.msra.mxu0 0.0
        %775 = vmatprep.subr.mxu0 0.0
        %776 = vmatpush1.msra.mxu0 0.0
        %777 = vmatprep.subr.mxu0 0.0
        %778 = vmatpush1.msra.mxu0 0.0
        %779 = vmatprep.subr.mxu0 0.0
        %780 = vmatpush1.msra.mxu0 0.0
        %781 = vmatprep.subr.mxu0 0.0
        %782 = vmatpush1.msra.mxu0 0.0
        %783 = vmatprep.subr.mxu0 0.0
        %784 = vmatpush1.msra.mxu0 0.0
        %785 = vmatprep.subr.mxu0 0.0
        %786 = vmatpush1.msra.mxu0 0.0
        %787 = vmatprep.subr.mxu0 0.0
        %788 = vmatpush1.msra.mxu0 0.0
        %789 = vmatprep.subr.mxu0 0.0
        %790 = vmatpush1.msra.mxu0 0.0
        %791 = vmatprep.subr.mxu0 0.0
        %792 = vmatpush1.msra.mxu0 0.0
        %793 = vmatprep.mubr.f32.mxu0 0.0
        %794 = vmatmul.mubr.f32.gmra.mrb[0].mxu0 %v706
        %v795 = vpop.f32.mrb[0].mxu0
        %v796 = vadd.f32 0.0, %v795
        %v797 = vpop.f32.mrb[0].mxu0
        %798 = vmatprep.mubr.f32.mxu0 0.0
        %799 = vmatmul.mubr.f32.gmra.mrb[0].mxu0 %v709
        %v800 = vpop.f32.mrb[0].mxu0
        %v801 = vadd.f32 0.0, %v800
        %v802 = vpop.f32.mrb[0].mxu0
        %803 = vmatprep.mubr.f32.mxu0 0.0
        %804 = vmatmul.mubr.f32.gmra.mrb[0].mxu0 %v712
        %v805 = vpop.f32.mrb[0].mxu0
        %v806 = vadd.f32 0.0, %v805
        %v807 = vpop.f32.mrb[0].mxu0
        %808 = vmatprep.mubr.f32.mxu0 0.0
        %809 = vmatmul.mubr.f32.gmra.mrb[0].mxu0 %v715
        %v810 = vpop.f32.mrb[0].mxu0
        %v811 = vadd.f32 0.0, %v810
        %v812 = vpop.f32.mrb[0].mxu0
        %813 = vmatprep.mubr.f32.mxu0 0.0
        %814 = vmatmul.mubr.f32.gmra.mrb[0].mxu0 %v718
        %v815 = vpop.f32.mrb[0].mxu0
        %v816 = vadd.f32 0.0, %v815
        %v817 = vpop.f32.mrb[0].mxu0
        %818 = vmatprep.mubr.f32.mxu0 0.0
        %819 = vmatmul.mubr.f32.gmra.mrb[0].mxu0 %v721
        %v820 = vpop.f32.mrb[0].mxu0
        %v821 = vadd.f32 0.0, %v820
        %v822 = vpop.f32.mrb[0].mxu0
        %823 = vmatprep.mubr.f32.mxu0 0.0
        %824 = vmatmul.mubr.f32.gmra.mrb[0].mxu0 %v724
        %v825 = vpop.f32.mrb[0].mxu0
        %v826 = vadd.f32 0.0, %v825
        %v827 = vpop.f32.mrb[0].mxu0
        %828 = vmatprep.mubr.f32.mxu0 0.0
        %829 = vmatmul.mubr.f32.gmra.mrb[0].mxu0 %v727
        %v830 = vpop.f32.mrb[0].mxu0
        %v831 = vadd.f32 0.0, %v830
        %v832 = vpop.f32.mrb[0].mxu0
        %833 = vdwg.mxu0
        %v834 = vmul.f32 %v796, 0.03125
        %v835 = vmul.f32 %v801, 0.03125
        %v836 = vmul.f32 %v806, 0.03125
        %v837 = vmul.f32 %v811, 0.03125
        %v838 = vmul.f32 %v816, 0.03125
        %v839 = vmul.f32 %v821, 0.03125
        %v840 = vmul.f32 %v826, 0.03125
        %v841 = vmul.f32 %v831, 0.03125
        %v842 = vadd.f32 %v834, 1e-05
        %v843 = vadd.f32 %v835, 1e-05
        %v844 = vadd.f32 %v836, 1e-05
        %v845 = vadd.f32 %v837, 1e-05
        %v846 = vadd.f32 %v838, 1e-05
        %v847 = vadd.f32 %v839, 1e-05
        %v848 = vadd.f32 %v840, 1e-05
        %v849 = vadd.f32 %v841, 1e-05
        %v850 = vrsqrt.pop %v842
        %v851 = vrsqrt.pop %v843
        %v852 = vrsqrt.pop %v844
        %v853 = vrsqrt.pop %v845
        %v854 = vrsqrt.pop %v846
        %v855 = vrsqrt.pop %v847
        %v856 = vrsqrt.pop %v848
        %v857 = vrsqrt.pop %v849
        %v859 = vsel %vm555, %v850, 0
        %v862 = vsel %vm555, %v851, 0
        %v865 = vsel %vm555, %v852, 0
        %v868 = vsel %vm555, %v853, 0
        %v871 = vsel %vm555, %v854, 0
        %v874 = vsel %vm555, %v855, 0
        %v877 = vsel %vm555, %v856, 0
        %v880 = vsel %vm555, %v857, 0
        %882 = vmatprep.subr.mxu0 0.0
        %883 = vmatpush1.msra.mxu0 %v582
        %884 = vmatprep.subr.mxu0 0.0
        %885 = vmatpush1.msra.mxu0 0.0
        %886 = vmatprep.subr.mxu0 0.0
        %887 = vmatpush1.msra.mxu0 0.0
        %888 = vmatprep.subr.mxu0 0.0
        %889 = vmatpush1.msra.mxu0 0.0
        %890 = vmatprep.subr.mxu0 0.0
        %891 = vmatpush1.msra.mxu0 0.0
        %892 = vmatprep.subr.mxu0 0.0
        %893 = vmatpush1.msra.mxu0 0.0
        %894 = vmatprep.subr.mxu0 0.0
        %895 = vmatpush1.msra.mxu0 0.0
        %896 = vmatprep.subr.mxu0 0.0
        %897 = vmatpush1.msra.mxu0 0.0
        %898 = vmatprep.subr.mxu0 0.0
        %899 = vmatpush1.msra.mxu0 0.0
        %900 = vmatprep.subr.mxu0 0.0
        %901 = vmatpush1.msra.mxu0 0.0
        %902 = vmatprep.subr.mxu0 0.0
        %903 = vmatpush1.msra.mxu0 0.0
        %904 = vmatprep.subr.mxu0 0.0
        %905 = vmatpush1.msra.mxu0 0.0
        %906 = vmatprep.subr.mxu0 0.0
        %907 = vmatpush1.msra.mxu0 0.0
        %908 = vmatprep.subr.mxu0 0.0
        %909 = vmatpush1.msra.mxu0 0.0
        %910 = vmatprep.subr.mxu0 0.0
        %911 = vmatpush1.msra.mxu0 0.0
        %912 = vmatprep.subr.mxu0 0.0
        %913 = vmatpush1.msra.mxu0 0.0
        %914 = vmatprep.subr.mxu0 0.0
        %915 = vmatpush1.msra.mxu0 0.0
        %916 = vmatprep.subr.mxu0 0.0
        %917 = vmatpush1.msra.mxu0 0.0
        %918 = vmatprep.subr.mxu0 0.0
        %919 = vmatpush1.msra.mxu0 0.0
        %920 = vmatprep.subr.mxu0 0.0
        %921 = vmatpush1.msra.mxu0 0.0
        %922 = vmatprep.subr.mxu0 0.0
        %923 = vmatpush1.msra.mxu0 0.0
        %924 = vmatprep.subr.mxu0 0.0
        %925 = vmatpush1.msra.mxu0 0.0
        %926 = vmatprep.subr.mxu0 0.0
        %927 = vmatpush1.msra.mxu0 0.0
        %928 = vmatprep.subr.mxu0 0.0
        %929 = vmatpush1.msra.mxu0 0.0
        %930 = vmatprep.subr.mxu0 0.0
        %931 = vmatpush1.msra.mxu0 0.0
        %932 = vmatprep.subr.mxu0 0.0
        %933 = vmatpush1.msra.mxu0 0.0
        %934 = vmatprep.subr.mxu0 0.0
        %935 = vmatpush1.msra.mxu0 0.0
        %936 = vmatprep.subr.mxu0 0.0
        %937 = vmatpush1.msra.mxu0 0.0
        %938 = vmatprep.subr.mxu0 0.0
        %939 = vmatpush1.msra.mxu0 0.0
        %940 = vmatprep.subr.mxu0 0.0
        %941 = vmatpush1.msra.mxu0 0.0
        %942 = vmatprep.subr.mxu0 0.0
        %943 = vmatpush1.msra.mxu0 0.0
        %944 = vmatprep.subr.mxu0 0.0
        %945 = vmatpush1.msra.mxu0 0.0
        %946 = vmatprep.mubr.f32.mxu0 0.0
        %947 = vmatmul.mubr.f32.gmra.mrb[0].mxu0 %v859
        %v948 = vpop.f32.mrb[0].mxu0
        %v949 = vadd.f32 0.0, %v948
        %v950 = vpop.f32.mrb[0].mxu0
        %951 = vmatprep.mubr.f32.mxu0 0.0
        %952 = vmatmul.mubr.f32.gmra.mrb[0].mxu0 %v862
        %v953 = vpop.f32.mrb[0].mxu0
        %v954 = vadd.f32 0.0, %v953
        %v955 = vpop.f32.mrb[0].mxu0
        %956 = vmatprep.mubr.f32.mxu0 0.0
        %957 = vmatmul.mubr.f32.gmra.mrb[0].mxu0 %v865
        %v958 = vpop.f32.mrb[0].mxu0
        %v959 = vadd.f32 0.0, %v958
        %v960 = vpop.f32.mrb[0].mxu0
        %961 = vmatprep.mubr.f32.mxu0 0.0
        %962 = vmatmul.mubr.f32.gmra.mrb[0].mxu0 %v868
        %v963 = vpop.f32.mrb[0].mxu0
        %v964 = vadd.f32 0.0, %v963
        %v965 = vpop.f32.mrb[0].mxu0
        %966 = vmatprep.mubr.f32.mxu0 0.0
        %967 = vmatmul.mubr.f32.gmra.mrb[0].mxu0 %v871
        %v968 = vpop.f32.mrb[0].mxu0
        %v969 = vadd.f32 0.0, %v968
        %v970 = vpop.f32.mrb[0].mxu0
        %971 = vmatprep.mubr.f32.mxu0 0.0
        %972 = vmatmul.mubr.f32.gmra.mrb[0].mxu0 %v874
        %v973 = vpop.f32.mrb[0].mxu0
        %v974 = vadd.f32 0.0, %v973
        %v975 = vpop.f32.mrb[0].mxu0
        %976 = vmatprep.mubr.f32.mxu0 0.0
        %977 = vmatmul.mubr.f32.gmra.mrb[0].mxu0 %v877
        %v978 = vpop.f32.mrb[0].mxu0
        %v979 = vadd.f32 0.0, %v978
        %v980 = vpop.f32.mrb[0].mxu0
        %981 = vmatprep.mubr.f32.mxu0 0.0
        %982 = vmatmul.mubr.f32.gmra.mrb[0].mxu0 %v880
        %v983 = vpop.f32.mrb[0].mxu0
        %v984 = vadd.f32 0.0, %v983
        %v985 = vpop.f32.mrb[0].mxu0
        %986 = vdwg.mxu0
        %v987 = vmul.f32 %v689, %v949
        %v988 = vmul.f32 %v690, %v954
        %v989 = vmul.f32 %v691, %v959
        %v990 = vmul.f32 %v692, %v964
        %v991 = vmul.f32 %v693, %v969
        %v992 = vmul.f32 %v694, %v974
        %v993 = vmul.f32 %v695, %v979
        %v994 = vmul.f32 %v696, %v984
        %v996 = vlaneseq
        %v997 = vshrl.u32 %v996, 7
        %v998 = vsub.s32 0, %v997
        %v999 = vrot.slane %v277, %v998
        %v1001 = vmul.f32 %v987, %v999
        %v1002 = vmul.f32 %v988, %v999
        %v1003 = vmul.f32 %v989, %v999
        %v1004 = vmul.f32 %v990, %v999
        %v1005 = vmul.f32 %v991, %v999
        %v1006 = vmul.f32 %v992, %v999
        %v1007 = vmul.f32 %v993, %v999
        %v1008 = vmul.f32 %v994, %v999
        %v1010 = vlaneseq
        %v1011 = vshrl.u32 %v1010, 7
        %v1012 = vsub.s32 0, %v1011
        %v1013 = vrot.slane %v278, %v1012
        %v1015 = vadd.f32 %v1001, %v1013
        %v1016 = vadd.f32 %v1002, %v1013
        %v1017 = vadd.f32 %v1003, %v1013
        %v1018 = vadd.f32 %v1004, %v1013
        %v1019 = vadd.f32 %v1005, %v1013
        %v1020 = vadd.f32 %v1006, %v1013
        %v1021 = vadd.f32 %v1007, %v1013
        %v1022 = vadd.f32 %v1008, %v1013
        %s1023 = scalar_lea.vmem [#allocation2], 32
        %v1024 = vld [vmem:[%s1023] sm:$0xf]
        %v1025 = vld [vmem:[%s1023 + $0x4] sm:$0xf]
        %v1026 = vld [vmem:[%s1023 + $0x8] sm:$0xf]
        %v1027 = vld [vmem:[%s1023 + $0xc] sm:$0xf]
        %v1028 = vld [vmem:[%s1023 + $0x10] sm:$0xf]
        %v1029 = vld [vmem:[%s1023 + $0x14] sm:$0xf]
        %v1030 = vld [vmem:[%s1023 + $0x18] sm:$0xf]
        %v1031 = vld [vmem:[%s1023 + $0x1c] sm:$0xf]
        %v1040 = vunpack.c.l.b16 %v1024
        %v1041 = vunpack.c.l.b16 %v1025
        %v1042 = vunpack.c.l.b16 %v1026
        %v1043 = vunpack.c.l.b16 %v1027
        %v1044 = vunpack.c.l.b16 %v1028
        %v1045 = vunpack.c.l.b16 %v1029
        %v1046 = vunpack.c.l.b16 %v1030
        %v1047 = vunpack.c.l.b16 %v1031
        %v1048 = vpack.c.b16 %v1041, %v1040
        %v1049 = vpack.c.b16 %v1043, %v1042
        %v1050 = vpack.c.b16 %v1045, %v1044
        %v1051 = vpack.c.b16 %v1047, %v1046
        %1056 = vmatprep.subr.bf16.mxu0 0
        %1057 = vmatpush1.bf16.msra.mxu0 %v1048
        %1058 = vmatprep.subr.bf16.mxu0 0
        %1059 = vmatpush1.bf16.msra.mxu0 %v1049
        %1060 = vmatprep.subr.bf16.mxu0 0
        %1061 = vmatpush1.bf16.msra.mxu0 %v1050
        %1062 = vmatprep.subr.bf16.mxu0 0
        %1063 = vmatpush1.bf16.msra.mxu0 %v1051
        %1064 = vmatprep.subr.bf16.mxu0 0
        %1065 = vmatpush1.bf16.msra.mxu0 0
        %1066 = vmatprep.subr.bf16.mxu0 0
        %1067 = vmatpush1.bf16.msra.mxu0 0
        %1068 = vmatprep.subr.bf16.mxu0 0
        %1069 = vmatpush1.bf16.msra.mxu0 0
        %1070 = vmatprep.subr.bf16.mxu0 0
        %1071 = vmatpush1.bf16.msra.mxu0 0
        %1072 = vmatprep.subr.bf16.mxu0 0
        %1073 = vmatpush1.bf16.msra.mxu0 0
        %1074 = vmatprep.subr.bf16.mxu0 0
        %1075 = vmatpush1.bf16.msra.mxu0 0
        %1076 = vmatprep.subr.bf16.mxu0 0
        %1077 = vmatpush1.bf16.msra.mxu0 0
        %1078 = vmatprep.subr.bf16.mxu0 0
        %1079 = vmatpush1.bf16.msra.mxu0 0
        %1080 = vmatprep.subr.bf16.mxu0 0
        %1081 = vmatpush1.bf16.msra.mxu0 0
        %1082 = vmatprep.subr.bf16.mxu0 0
        %1083 = vmatpush1.bf16.msra.mxu0 0
        %1084 = vmatprep.subr.bf16.mxu0 0
        %1085 = vmatpush1.bf16.msra.mxu0 0
        %1086 = vmatprep.subr.bf16.mxu0 0
        %1087 = vmatpush1.bf16.msra.mxu0 0
        %1088 = vmatprep.mubr.bf16.mxu0 0
        %1089 = vmatmul.mubr.bf16.gmra.mrb[0].mxu0 %v342
        %v1090 = vpop.f32.mrb[0].mxu0
        %v1091 = vadd.f32 0.0, %v1090
        %v1092 = vpop.f32.mrb[0].mxu0
        %v1093 = vpop.f32.mrb[0].mxu0
        %v1094 = vadd.f32 0.0, %v1093
        %v1095 = vpop.f32.mrb[0].mxu0
        %1096 = vmatprep.mubr.bf16.mxu0 0
        %1097 = vmatmul.mubr.bf16.gmra.mrb[0].mxu0 %v345
        %v1098 = vpop.f32.mrb[0].mxu0
        %v1099 = vadd.f32 0.0, %v1098
        %v1100 = vpop.f32.mrb[0].mxu0
        %v1101 = vpop.f32.mrb[0].mxu0
        %v1102 = vadd.f32 0.0, %v1101
        %v1103 = vpop.f32.mrb[0].mxu0
        %1104 = vmatprep.mubr.bf16.mxu0 0
        %1105 = vmatmul.mubr.bf16.gmra.mrb[0].mxu0 %v348
        %v1106 = vpop.f32.mrb[0].mxu0
        %v1107 = vadd.f32 0.0, %v1106
        %v1108 = vpop.f32.mrb[0].mxu0
        %v1109 = vpop.f32.mrb[0].mxu0
        %v1110 = vadd.f32 0.0, %v1109
        %v1111 = vpop.f32.mrb[0].mxu0
        %1112 = vmatprep.mubr.bf16.mxu0 0
        %1113 = vmatmul.mubr.bf16.gmra.mrb[0].mxu0 %v351
        %v1114 = vpop.f32.mrb[0].mxu0
        %v1115 = vadd.f32 0.0, %v1114
        %v1116 = vpop.f32.mrb[0].mxu0
        %v1117 = vpop.f32.mrb[0].mxu0
        %v1118 = vadd.f32 0.0, %v1117
        %v1119 = vpop.f32.mrb[0].mxu0
        %1120 = vdwg.mxu0
        %v1122 = vsel %vm340, %v1091, 0
        %v1125 = vsel %vm340, %v1094, 0
        %v1128 = vsel %vm340, %v1099, 0
        %v1131 = vsel %vm340, %v1102, 0
        %v1134 = vsel %vm340, %v1107, 0
        %v1137 = vsel %vm340, %v1110, 0
        %v1140 = vsel %vm340, %v1115, 0
        %v1143 = vsel %vm340, %v1118, 0
        %1145 = vmatprep.subr.mxu0 0.0
        %1146 = vmatpush1.msra.mxu0 %v279
        %1147 = vmatprep.subr.mxu0 0.0
        %1148 = vmatpush1.msra.mxu0 %v280
        %1149 = vmatprep.subr.mxu0 0.0
        %1150 = vmatpush1.msra.mxu0 %v281
        %1151 = vmatprep.subr.mxu0 0.0
        %1152 = vmatpush1.msra.mxu0 %v282
        %1153 = vmatprep.subr.mxu0 0.0
        %1154 = vmatpush1.msra.mxu0 %v283
        %1155 = vmatprep.subr.mxu0 0.0
        %1156 = vmatpush1.msra.mxu0 %v284
        %1157 = vmatprep.subr.mxu0 0.0
        %1158 = vmatpush1.msra.mxu0 %v285
        %1159 = vmatprep.subr.mxu0 0.0
        %1160 = vmatpush1.msra.mxu0 %v286
        %1161 = vmatprep.subr.mxu0 0.0
        %1162 = vmatpush1.msra.mxu0 0.0
        %1163 = vmatprep.subr.mxu0 0.0
        %1164 = vmatpush1.msra.mxu0 0.0
        %1165 = vmatprep.subr.mxu0 0.0
        %1166 = vmatpush1.msra.mxu0 0.0
        %1167 = vmatprep.subr.mxu0 0.0
        %1168 = vmatpush1.msra.mxu0 0.0
        %1169 = vmatprep.subr.mxu0 0.0
        %1170 = vmatpush1.msra.mxu0 0.0
        %1171 = vmatprep.subr.mxu0 0.0
        %1172 = vmatpush1.msra.mxu0 0.0
        %1173 = vmatprep.subr.mxu0 0.0
        %1174 = vmatpush1.msra.mxu0 0.0
        %1175 = vmatprep.subr.mxu0 0.0
        %1176 = vmatpush1.msra.mxu0 0.0
        %1177 = vmatprep.subr.mxu0 0.0
        %1178 = vmatpush1.msra.mxu0 0.0
        %1179 = vmatprep.subr.mxu0 0.0
        %1180 = vmatpush1.msra.mxu0 0.0
        %1181 = vmatprep.subr.mxu0 0.0
        %1182 = vmatpush1.msra.mxu0 0.0
        %1183 = vmatprep.subr.mxu0 0.0
        %1184 = vmatpush1.msra.mxu0 0.0
        %1185 = vmatprep.subr.mxu0 0.0
        %1186 = vmatpush1.msra.mxu0 0.0
        %1187 = vmatprep.subr.mxu0 0.0
        %1188 = vmatpush1.msra.mxu0 0.0
        %1189 = vmatprep.subr.mxu0 0.0
        %1190 = vmatpush1.msra.mxu0 0.0
        %1191 = vmatprep.subr.mxu0 0.0
        %1192 = vmatpush1.msra.mxu0 0.0
        %1193 = vmatprep.subr.mxu0 0.0
        %1194 = vmatpush1.msra.mxu0 0.0
        %1195 = vmatprep.subr.mxu0 0.0
        %1196 = vmatpush1.msra.mxu0 0.0
        %1197 = vmatprep.subr.mxu0 0.0
        %1198 = vmatpush1.msra.mxu0 0.0
        %1199 = vmatprep.subr.mxu0 0.0
        %1200 = vmatpush1.msra.mxu0 0.0
        %1201 = vmatprep.subr.mxu0 0.0
        %1202 = vmatpush1.msra.mxu0 0.0
        %1203 = vmatprep.subr.mxu0 0.0
        %1204 = vmatpush1.msra.mxu0 0.0
        %1205 = vmatprep.subr.mxu0 0.0
        %1206 = vmatpush1.msra.mxu0 0.0
        %1207 = vmatprep.subr.mxu0 0.0
        %1208 = vmatpush1.msra.mxu0 0.0
        %1209 = vmatprep.mubr.f32.mxu0 0.0
        %1210 = vmatmul.mubr.f32.gmra.mrb[0].mxu0 %v1122
        %v1211 = vpop.f32.mrb[0].mxu0
        %v1212 = vadd.f32 0.0, %v1211
        %v1213 = vpop.f32.mrb[0].mxu0
        %1214 = vmatprep.mubr.f32.mxu0 0.0
        %1215 = vmatmul.mubr.f32.gmra.mrb[0].mxu0 %v1125
        %v1216 = vpop.f32.mrb[0].mxu0
        %v1217 = vadd.f32 0.0, %v1216
        %v1218 = vpop.f32.mrb[0].mxu0
        %1219 = vmatprep.mubr.f32.mxu0 0.0
        %1220 = vmatmul.mubr.f32.gmra.mrb[0].mxu0 %v1128
        %v1221 = vpop.f32.mrb[0].mxu0
        %v1222 = vadd.f32 0.0, %v1221
        %v1223 = vpop.f32.mrb[0].mxu0
        %1224 = vmatprep.mubr.f32.mxu0 0.0
        %1225 = vmatmul.mubr.f32.gmra.mrb[0].mxu0 %v1131
        %v1226 = vpop.f32.mrb[0].mxu0
        %v1227 = vadd.f32 0.0, %v1226
        %v1228 = vpop.f32.mrb[0].mxu0
        %1229 = vmatprep.mubr.f32.mxu0 0.0
        %1230 = vmatmul.mubr.f32.gmra.mrb[0].mxu0 %v1134
        %v1231 = vpop.f32.mrb[0].mxu0
        %v1232 = vadd.f32 0.0, %v1231
        %v1233 = vpop.f32.mrb[0].mxu0
        %1234 = vmatprep.mubr.f32.mxu0 0.0
        %1235 = vmatmul.mubr.f32.gmra.mrb[0].mxu0 %v1137
        %v1236 = vpop.f32.mrb[0].mxu0
        %v1237 = vadd.f32 0.0, %v1236
        %v1238 = vpop.f32.mrb[0].mxu0
        %1239 = vmatprep.mubr.f32.mxu0 0.0
        %1240 = vmatmul.mubr.f32.gmra.mrb[0].mxu0 %v1140
        %v1241 = vpop.f32.mrb[0].mxu0
        %v1242 = vadd.f32 0.0, %v1241
        %v1243 = vpop.f32.mrb[0].mxu0
        %1244 = vmatprep.mubr.f32.mxu0 0.0
        %1245 = vmatmul.mubr.f32.gmra.mrb[0].mxu0 %v1143
        %v1246 = vpop.f32.mrb[0].mxu0
        %v1247 = vadd.f32 0.0, %v1246
        %v1248 = vpop.f32.mrb[0].mxu0
        %1249 = vdwg.mxu0
        %v1250 = vmul.f32 %v1212, 0.03125
        %v1251 = vmul.f32 %v1217, 0.03125
        %v1252 = vmul.f32 %v1222, 0.03125
        %v1253 = vmul.f32 %v1227, 0.03125
        %v1254 = vmul.f32 %v1232, 0.03125
        %v1255 = vmul.f32 %v1237, 0.03125
        %v1256 = vmul.f32 %v1242, 0.03125
        %v1257 = vmul.f32 %v1247, 0.03125
        %v1259 = vsel %vm555, %v1250, 0
        %v1262 = vsel %vm555, %v1251, 0
        %v1265 = vsel %vm555, %v1252, 0
        %v1268 = vsel %vm555, %v1253, 0
        %v1271 = vsel %vm555, %v1254, 0
        %v1274 = vsel %vm555, %v1255, 0
        %v1277 = vsel %vm555, %v1256, 0
        %v1280 = vsel %vm555, %v1257, 0
        %1282 = vmatprep.subr.mxu0 0.0
        %1283 = vmatpush1.msra.mxu0 %v582
        %1284 = vmatprep.subr.mxu0 0.0
        %1285 = vmatpush1.msra.mxu0 0.0
        %1286 = vmatprep.subr.mxu0 0.0
        %1287 = vmatpush1.msra.mxu0 0.0
        %1288 = vmatprep.subr.mxu0 0.0
        %1289 = vmatpush1.msra.mxu0 0.0
        %1290 = vmatprep.subr.mxu0 0.0
        %1291 = vmatpush1.msra.mxu0 0.0
        %1292 = vmatprep.subr.mxu0 0.0
        %1293 = vmatpush1.msra.mxu0 0.0
        %1294 = vmatprep.subr.mxu0 0.0
        %1295 = vmatpush1.msra.mxu0 0.0
        %1296 = vmatprep.subr.mxu0 0.0
        %1297 = vmatpush1.msra.mxu0 0.0
        %1298 = vmatprep.subr.mxu0 0.0
        %1299 = vmatpush1.msra.mxu0 0.0
        %1300 = vmatprep.subr.mxu0 0.0
        %1301 = vmatpush1.msra.mxu0 0.0
        %1302 = vmatprep.subr.mxu0 0.0
        %1303 = vmatpush1.msra.mxu0 0.0
        %1304 = vmatprep.subr.mxu0 0.0
        %1305 = vmatpush1.msra.mxu0 0.0
        %1306 = vmatprep.subr.mxu0 0.0
        %1307 = vmatpush1.msra.mxu0 0.0
        %1308 = vmatprep.subr.mxu0 0.0
        %1309 = vmatpush1.msra.mxu0 0.0
        %1310 = vmatprep.subr.mxu0 0.0
        %1311 = vmatpush1.msra.mxu0 0.0
        %1312 = vmatprep.subr.mxu0 0.0
        %1313 = vmatpush1.msra.mxu0 0.0
        %1314 = vmatprep.subr.mxu0 0.0
        %1315 = vmatpush1.msra.mxu0 0.0
        %1316 = vmatprep.subr.mxu0 0.0
        %1317 = vmatpush1.msra.mxu0 0.0
        %1318 = vmatprep.subr.mxu0 0.0
        %1319 = vmatpush1.msra.mxu0 0.0
        %1320 = vmatprep.subr.mxu0 0.0
        %1321 = vmatpush1.msra.mxu0 0.0
        %1322 = vmatprep.subr.mxu0 0.0
        %1323 = vmatpush1.msra.mxu0 0.0
        %1324 = vmatprep.subr.mxu0 0.0
        %1325 = vmatpush1.msra.mxu0 0.0
        %1326 = vmatprep.subr.mxu0 0.0
        %1327 = vmatpush1.msra.mxu0 0.0
        %1328 = vmatprep.subr.mxu0 0.0
        %1329 = vmatpush1.msra.mxu0 0.0
        %1330 = vmatprep.subr.mxu0 0.0
        %1331 = vmatpush1.msra.mxu0 0.0
        %1332 = vmatprep.subr.mxu0 0.0
        %1333 = vmatpush1.msra.mxu0 0.0
        %1334 = vmatprep.subr.mxu0 0.0
        %1335 = vmatpush1.msra.mxu0 0.0
        %1336 = vmatprep.subr.mxu0 0.0
        %1337 = vmatpush1.msra.mxu0 0.0
        %1338 = vmatprep.subr.mxu0 0.0
        %1339 = vmatpush1.msra.mxu0 0.0
        %1340 = vmatprep.subr.mxu0 0.0
        %1341 = vmatpush1.msra.mxu0 0.0
        %1342 = vmatprep.subr.mxu0 0.0
        %1343 = vmatpush1.msra.mxu0 0.0
        %1344 = vmatprep.subr.mxu0 0.0
        %1345 = vmatpush1.msra.mxu0 0.0
        %1346 = vmatprep.mubr.f32.mxu0 0.0
        %1347 = vmatmul.mubr.f32.gmra.mrb[0].mxu0 %v1259
        %v1348 = vpop.f32.mrb[0].mxu0
        %v1349 = vadd.f32 0.0, %v1348
        %v1350 = vpop.f32.mrb[0].mxu0
        %1351 = vmatprep.mubr.f32.mxu0 0.0
        %1352 = vmatmul.mubr.f32.gmra.mrb[0].mxu0 %v1262
        %v1353 = vpop.f32.mrb[0].mxu0
        %v1354 = vadd.f32 0.0, %v1353
        %v1355 = vpop.f32.mrb[0].mxu0
        %1356 = vmatprep.mubr.f32.mxu0 0.0
        %1357 = vmatmul.mubr.f32.gmra.mrb[0].mxu0 %v1265
        %v1358 = vpop.f32.mrb[0].mxu0
        %v1359 = vadd.f32 0.0, %v1358
        %v1360 = vpop.f32.mrb[0].mxu0
        %1361 = vmatprep.mubr.f32.mxu0 0.0
        %1362 = vmatmul.mubr.f32.gmra.mrb[0].mxu0 %v1268
        %v1363 = vpop.f32.mrb[0].mxu0
        %v1364 = vadd.f32 0.0, %v1363
        %v1365 = vpop.f32.mrb[0].mxu0
        %1366 = vmatprep.mubr.f32.mxu0 0.0
        %1367 = vmatmul.mubr.f32.gmra.mrb[0].mxu0 %v1271
        %v1368 = vpop.f32.mrb[0].mxu0
        %v1369 = vadd.f32 0.0, %v1368
        %v1370 = vpop.f32.mrb[0].mxu0
        %1371 = vmatprep.mubr.f32.mxu0 0.0
        %1372 = vmatmul.mubr.f32.gmra.mrb[0].mxu0 %v1274
        %v1373 = vpop.f32.mrb[0].mxu0
        %v1374 = vadd.f32 0.0, %v1373
        %v1375 = vpop.f32.mrb[0].mxu0
        %1376 = vmatprep.mubr.f32.mxu0 0.0
        %1377 = vmatmul.mubr.f32.gmra.mrb[0].mxu0 %v1277
        %v1378 = vpop.f32.mrb[0].mxu0
        %v1379 = vadd.f32 0.0, %v1378
        %v1380 = vpop.f32.mrb[0].mxu0
        %1381 = vmatprep.mubr.f32.mxu0 0.0
        %1382 = vmatmul.mubr.f32.gmra.mrb[0].mxu0 %v1280
        %v1383 = vpop.f32.mrb[0].mxu0
        %v1384 = vadd.f32 0.0, %v1383
        %v1385 = vpop.f32.mrb[0].mxu0
        %1386 = vdwg.mxu0
        %v1387 = vsub.f32 %v1091, %v1349
        %v1388 = vsub.f32 %v1094, %v1354
        %v1389 = vsub.f32 %v1099, %v1359
        %v1390 = vsub.f32 %v1102, %v1364
        %v1391 = vsub.f32 %v1107, %v1369
        %v1392 = vsub.f32 %v1110, %v1374
        %v1393 = vsub.f32 %v1115, %v1379
        %v1394 = vsub.f32 %v1118, %v1384
        %v1395 = vmul.f32 %v1387, %v1387
        %v1396 = vmul.f32 %v1388, %v1388
        %v1397 = vmul.f32 %v1389, %v1389
        %v1398 = vmul.f32 %v1390, %v1390
        %v1399 = vmul.f32 %v1391, %v1391
        %v1400 = vmul.f32 %v1392, %v1392
        %v1401 = vmul.f32 %v1393, %v1393
        %v1402 = vmul.f32 %v1394, %v1394
        %v1404 = vsel %vm340, %v1395, 0
        %v1407 = vsel %vm340, %v1396, 0
        %v1410 = vsel %vm340, %v1397, 0
        %v1413 = vsel %vm340, %v1398, 0
        %v1416 = vsel %vm340, %v1399, 0
        %v1419 = vsel %vm340, %v1400, 0
        %v1422 = vsel %vm340, %v1401, 0
        %v1425 = vsel %vm340, %v1402, 0
        %1427 = vmatprep.subr.mxu0 0.0
        %1428 = vmatpush1.msra.mxu0 %v279
        %1429 = vmatprep.subr.mxu0 0.0
        %1430 = vmatpush1.msra.mxu0 %v280
        %1431 = vmatprep.subr.mxu0 0.0
        %1432 = vmatpush1.msra.mxu0 %v281
        %1433 = vmatprep.subr.mxu0 0.0
        %1434 = vmatpush1.msra.mxu0 %v282
        %1435 = vmatprep.subr.mxu0 0.0
        %1436 = vmatpush1.msra.mxu0 %v283
        %1437 = vmatprep.subr.mxu0 0.0
        %1438 = vmatpush1.msra.mxu0 %v284
        %1439 = vmatprep.subr.mxu0 0.0
        %1440 = vmatpush1.msra.mxu0 %v285
        %1441 = vmatprep.subr.mxu0 0.0
        %1442 = vmatpush1.msra.mxu0 %v286
        %1443 = vmatprep.subr.mxu0 0.0
        %1444 = vmatpush1.msra.mxu0 0.0
        %1445 = vmatprep.subr.mxu0 0.0
        %1446 = vmatpush1.msra.mxu0 0.0
        %1447 = vmatprep.subr.mxu0 0.0
        %1448 = vmatpush1.msra.mxu0 0.0
        %1449 = vmatprep.subr.mxu0 0.0
        %1450 = vmatpush1.msra.mxu0 0.0
        %1451 = vmatprep.subr.mxu0 0.0
        %1452 = vmatpush1.msra.mxu0 0.0
        %1453 = vmatprep.subr.mxu0 0.0
        %1454 = vmatpush1.msra.mxu0 0.0
        %1455 = vmatprep.subr.mxu0 0.0
        %1456 = vmatpush1.msra.mxu0 0.0
        %1457 = vmatprep.subr.mxu0 0.0
        %1458 = vmatpush1.msra.mxu0 0.0
        %1459 = vmatprep.subr.mxu0 0.0
        %1460 = vmatpush1.msra.mxu0 0.0
        %1461 = vmatprep.subr.mxu0 0.0
        %1462 = vmatpush1.msra.mxu0 0.0
        %1463 = vmatprep.subr.mxu0 0.0
        %1464 = vmatpush1.msra.mxu0 0.0
        %1465 = vmatprep.subr.mxu0 0.0
        %1466 = vmatpush1.msra.mxu0 0.0
        %1467 = vmatprep.subr.mxu0 0.0
        %1468 = vmatpush1.msra.mxu0 0.0
        %1469 = vmatprep.subr.mxu0 0.0
        %1470 = vmatpush1.msra.mxu0 0.0
        %1471 = vmatprep.subr.mxu0 0.0
        %1472 = vmatpush1.msra.mxu0 0.0
        %1473 = vmatprep.subr.mxu0 0.0
        %1474 = vmatpush1.msra.mxu0 0.0
        %1475 = vmatprep.subr.mxu0 0.0
        %1476 = vmatpush1.msra.mxu0 0.0
        %1477 = vmatprep.subr.mxu0 0.0
        %1478 = vmatpush1.msra.mxu0 0.0
        %1479 = vmatprep.subr.mxu0 0.0
        %1480 = vmatpush1.msra.mxu0 0.0
        %1481 = vmatprep.subr.mxu0 0.0
        %1482 = vmatpush1.msra.mxu0 0.0
        %1483 = vmatprep.subr.mxu0 0.0
        %1484 = vmatpush1.msra.mxu0 0.0
        %1485 = vmatprep.subr.mxu0 0.0
        %1486 = vmatpush1.msra.mxu0 0.0
        %1487 = vmatprep.subr.mxu0 0.0
        %1488 = vmatpush1.msra.mxu0 0.0
        %1489 = vmatprep.subr.mxu0 0.0
        %1490 = vmatpush1.msra.mxu0 0.0
        %1491 = vmatprep.mubr.f32.mxu0 0.0
        %1492 = vmatmul.mubr.f32.gmra.mrb[0].mxu0 %v1404
        %v1493 = vpop.f32.mrb[0].mxu0
        %v1494 = vadd.f32 0.0, %v1493
        %v1495 = vpop.f32.mrb[0].mxu0
        %1496 = vmatprep.mubr.f32.mxu0 0.0
        %1497 = vmatmul.mubr.f32.gmra.mrb[0].mxu0 %v1407
        %v1498 = vpop.f32.mrb[0].mxu0
        %v1499 = vadd.f32 0.0, %v1498
        %v1500 = vpop.f32.mrb[0].mxu0
        %1501 = vmatprep.mubr.f32.mxu0 0.0
        %1502 = vmatmul.mubr.f32.gmra.mrb[0].mxu0 %v1410
        %v1503 = vpop.f32.mrb[0].mxu0
        %v1504 = vadd.f32 0.0, %v1503
        %v1505 = vpop.f32.mrb[0].mxu0
        %1506 = vmatprep.mubr.f32.mxu0 0.0
        %1507 = vmatmul.mubr.f32.gmra.mrb[0].mxu0 %v1413
        %v1508 = vpop.f32.mrb[0].mxu0
        %v1509 = vadd.f32 0.0, %v1508
        %v1510 = vpop.f32.mrb[0].mxu0
        %1511 = vmatprep.mubr.f32.mxu0 0.0
        %1512 = vmatmul.mubr.f32.gmra.mrb[0].mxu0 %v1416
        %v1513 = vpop.f32.mrb[0].mxu0
        %v1514 = vadd.f32 0.0, %v1513
        %v1515 = vpop.f32.mrb[0].mxu0
        %1516 = vmatprep.mubr.f32.mxu0 0.0
        %1517 = vmatmul.mubr.f32.gmra.mrb[0].mxu0 %v1419
        %v1518 = vpop.f32.mrb[0].mxu0
        %v1519 = vadd.f32 0.0, %v1518
        %v1520 = vpop.f32.mrb[0].mxu0
        %1521 = vmatprep.mubr.f32.mxu0 0.0
        %1522 = vmatmul.mubr.f32.gmra.mrb[0].mxu0 %v1422
        %v1523 = vpop.f32.mrb[0].mxu0
        %v1524 = vadd.f32 0.0, %v1523
        %v1525 = vpop.f32.mrb[0].mxu0
        %1526 = vmatprep.mubr.f32.mxu0 0.0
        %1527 = vmatmul.mubr.f32.gmra.mrb[0].mxu0 %v1425
        %v1528 = vpop.f32.mrb[0].mxu0
        %v1529 = vadd.f32 0.0, %v1528
        %v1530 = vpop.f32.mrb[0].mxu0
        %1531 = vdwg.mxu0
        %v1532 = vmul.f32 %v1494, 0.03125
        %v1533 = vmul.f32 %v1499, 0.03125
        %v1534 = vmul.f32 %v1504, 0.03125
        %v1535 = vmul.f32 %v1509, 0.03125
        %v1536 = vmul.f32 %v1514, 0.03125
        %v1537 = vmul.f32 %v1519, 0.03125
        %v1538 = vmul.f32 %v1524, 0.03125
        %v1539 = vmul.f32 %v1529, 0.03125
        %v1540 = vadd.f32 %v1532, 1e-05
        %v1541 = vadd.f32 %v1533, 1e-05
        %v1542 = vadd.f32 %v1534, 1e-05
        %v1543 = vadd.f32 %v1535, 1e-05
        %v1544 = vadd.f32 %v1536, 1e-05
        %v1545 = vadd.f32 %v1537, 1e-05
        %v1546 = vadd.f32 %v1538, 1e-05
        %v1547 = vadd.f32 %v1539, 1e-05
        %v1548 = vrsqrt.pop %v1540
        %v1549 = vrsqrt.pop %v1541
        %v1550 = vrsqrt.pop %v1542
        %v1551 = vrsqrt.pop %v1543
        %v1552 = vrsqrt.pop %v1544
        %v1553 = vrsqrt.pop %v1545
        %v1554 = vrsqrt.pop %v1546
        %v1555 = vrsqrt.pop %v1547
        %v1557 = vsel %vm555, %v1548, 0
        %v1560 = vsel %vm555, %v1549, 0
        %v1563 = vsel %vm555, %v1550, 0
        %v1566 = vsel %vm555, %v1551, 0
        %v1569 = vsel %vm555, %v1552, 0
        %v1572 = vsel %vm555, %v1553, 0
        %v1575 = vsel %vm555, %v1554, 0
        %v1578 = vsel %vm555, %v1555, 0
        %1580 = vmatprep.subr.mxu0 0.0
        %1581 = vmatpush1.msra.mxu0 %v582
        %1582 = vmatprep.subr.mxu0 0.0
        %1583 = vmatpush1.msra.mxu0 0.0
        %1584 = vmatprep.subr.mxu0 0.0
        %1585 = vmatpush1.msra.mxu0 0.0
        %1586 = vmatprep.subr.mxu0 0.0
        %1587 = vmatpush1.msra.mxu0 0.0
        %1588 = vmatprep.subr.mxu0 0.0
        %1589 = vmatpush1.msra.mxu0 0.0
        %1590 = vmatprep.subr.mxu0 0.0
        %1591 = vmatpush1.msra.mxu0 0.0
        %1592 = vmatprep.subr.mxu0 0.0
        %1593 = vmatpush1.msra.mxu0 0.0
        %1594 = vmatprep.subr.mxu0 0.0
        %1595 = vmatpush1.msra.mxu0 0.0
        %1596 = vmatprep.subr.mxu0 0.0
        %1597 = vmatpush1.msra.mxu0 0.0
        %1598 = vmatprep.subr.mxu0 0.0
        %1599 = vmatpush1.msra.mxu0 0.0
        %1600 = vmatprep.subr.mxu0 0.0
        %1601 = vmatpush1.msra.mxu0 0.0
        %1602 = vmatprep.subr.mxu0 0.0
        %1603 = vmatpush1.msra.mxu0 0.0
        %1604 = vmatprep.subr.mxu0 0.0
        %1605 = vmatpush1.msra.mxu0 0.0
        %1606 = vmatprep.subr.mxu0 0.0
        %1607 = vmatpush1.msra.mxu0 0.0
        %1608 = vmatprep.subr.mxu0 0.0
        %1609 = vmatpush1.msra.mxu0 0.0
        %1610 = vmatprep.subr.mxu0 0.0
        %1611 = vmatpush1.msra.mxu0 0.0
        %1612 = vmatprep.subr.mxu0 0.0
        %1613 = vmatpush1.msra.mxu0 0.0
        %1614 = vmatprep.subr.mxu0 0.0
        %1615 = vmatpush1.msra.mxu0 0.0
        %1616 = vmatprep.subr.mxu0 0.0
        %1617 = vmatpush1.msra.mxu0 0.0
        %1618 = vmatprep.subr.mxu0 0.0
        %1619 = vmatpush1.msra.mxu0 0.0
        %1620 = vmatprep.subr.mxu0 0.0
        %1621 = vmatpush1.msra.mxu0 0.0
        %1622 = vmatprep.subr.mxu0 0.0
        %1623 = vmatpush1.msra.mxu0 0.0
        %1624 = vmatprep.subr.mxu0 0.0
        %1625 = vmatpush1.msra.mxu0 0.0
        %1626 = vmatprep.subr.mxu0 0.0
        %1627 = vmatpush1.msra.mxu0 0.0
        %1628 = vmatprep.subr.mxu0 0.0
        %1629 = vmatpush1.msra.mxu0 0.0
        %1630 = vmatprep.subr.mxu0 0.0
        %1631 = vmatpush1.msra.mxu0 0.0
        %1632 = vmatprep.subr.mxu0 0.0
        %1633 = vmatpush1.msra.mxu0 0.0
        %1634 = vmatprep.subr.mxu0 0.0
        %1635 = vmatpush1.msra.mxu0 0.0
        %1636 = vmatprep.subr.mxu0 0.0
        %1637 = vmatpush1.msra.mxu0 0.0
        %1638 = vmatprep.subr.mxu0 0.0
        %1639 = vmatpush1.msra.mxu0 0.0
        %1640 = vmatprep.subr.mxu0 0.0
        %1641 = vmatpush1.msra.mxu0 0.0
        %1642 = vmatprep.subr.mxu0 0.0
        %1643 = vmatpush1.msra.mxu0 0.0
        %1644 = vmatprep.mubr.f32.mxu0 0.0
        %1645 = vmatmul.mubr.f32.gmra.mrb[0].mxu0 %v1557
        %v1646 = vpop.f32.mrb[0].mxu0
        %v1647 = vadd.f32 0.0, %v1646
        %v1648 = vpop.f32.mrb[0].mxu0
        %1649 = vmatprep.mubr.f32.mxu0 0.0
        %1650 = vmatmul.mubr.f32.gmra.mrb[0].mxu0 %v1560
        %v1651 = vpop.f32.mrb[0].mxu0
        %v1652 = vadd.f32 0.0, %v1651
        %v1653 = vpop.f32.mrb[0].mxu0
        %1654 = vmatprep.mubr.f32.mxu0 0.0
        %1655 = vmatmul.mubr.f32.gmra.mrb[0].mxu0 %v1563
        %v1656 = vpop.f32.mrb[0].mxu0
        %v1657 = vadd.f32 0.0, %v1656
        %v1658 = vpop.f32.mrb[0].mxu0
        %1659 = vmatprep.mubr.f32.mxu0 0.0
        %1660 = vmatmul.mubr.f32.gmra.mrb[0].mxu0 %v1566
        %v1661 = vpop.f32.mrb[0].mxu0
        %v1662 = vadd.f32 0.0, %v1661
        %v1663 = vpop.f32.mrb[0].mxu0
        %1664 = vmatprep.mubr.f32.mxu0 0.0
        %1665 = vmatmul.mubr.f32.gmra.mrb[0].mxu0 %v1569
        %v1666 = vpop.f32.mrb[0].mxu0
        %v1667 = vadd.f32 0.0, %v1666
        %v1668 = vpop.f32.mrb[0].mxu0
        %1669 = vmatprep.mubr.f32.mxu0 0.0
        %1670 = vmatmul.mubr.f32.gmra.mrb[0].mxu0 %v1572
        %v1671 = vpop.f32.mrb[0].mxu0
        %v1672 = vadd.f32 0.0, %v1671
        %v1673 = vpop.f32.mrb[0].mxu0
        %1674 = vmatprep.mubr.f32.mxu0 0.0
        %1675 = vmatmul.mubr.f32.gmra.mrb[0].mxu0 %v1575
        %v1676 = vpop.f32.mrb[0].mxu0
        %v1677 = vadd.f32 0.0, %v1676
        %v1678 = vpop.f32.mrb[0].mxu0
        %1679 = vmatprep.mubr.f32.mxu0 0.0
        %1680 = vmatmul.mubr.f32.gmra.mrb[0].mxu0 %v1578
        %v1681 = vpop.f32.mrb[0].mxu0
        %v1682 = vadd.f32 0.0, %v1681
        %v1683 = vpop.f32.mrb[0].mxu0
        %1684 = vdwg.mxu0
        %v1685 = vmul.f32 %v1387, %v1647
        %v1686 = vmul.f32 %v1388, %v1652
        %v1687 = vmul.f32 %v1389, %v1657
        %v1688 = vmul.f32 %v1390, %v1662
        %v1689 = vmul.f32 %v1391, %v1667
        %v1690 = vmul.f32 %v1392, %v1672
        %v1691 = vmul.f32 %v1393, %v1677
        %v1692 = vmul.f32 %v1394, %v1682
        %v1693 = vmul.f32 %v1685, %v999
        %v1694 = vmul.f32 %v1686, %v999
        %v1695 = vmul.f32 %v1687, %v999
        %v1696 = vmul.f32 %v1688, %v999
        %v1697 = vmul.f32 %v1689, %v999
        %v1698 = vmul.f32 %v1690, %v999
        %v1699 = vmul.f32 %v1691, %v999
        %v1700 = vmul.f32 %v1692, %v999
        %v1701 = vadd.f32 %v1693, %v1013
        %v1702 = vadd.f32 %v1694, %v1013
        %v1703 = vadd.f32 %v1695, %v1013
        %v1704 = vadd.f32 %v1696, %v1013
        %v1705 = vadd.f32 %v1697, %v1013
        %v1706 = vadd.f32 %v1698, %v1013
        %v1707 = vadd.f32 %v1699, %v1013
        %v1708 = vadd.f32 %v1700, %v1013
        %1709 = vst.msk [vmem:[%s260] sm:$0xff] %vm340, %v1015
        %1710 = vst.msk [vmem:[%s260 + $0x8] sm:$0xff] %vm340, %v1701
        %1711 = vst.msk [vmem:[%s260 + $0x10] sm:$0xff] %vm340, %v1016
        %1712 = vst.msk [vmem:[%s260 + $0x18] sm:$0xff] %vm340, %v1702
        %1713 = vst.msk [vmem:[%s260 + $0x20] sm:$0xff] %vm340, %v1017
        %1714 = vst.msk [vmem:[%s260 + $0x28] sm:$0xff] %vm340, %v1703
        %1715 = vst.msk [vmem:[%s260 + $0x30] sm:$0xff] %vm340, %v1018
        %1716 = vst.msk [vmem:[%s260 + $0x38] sm:$0xff] %vm340, %v1704
        %1717 = vst.msk [vmem:[%s260 + $0x40] sm:$0xff] %vm340, %v1019
        %1718 = vst.msk [vmem:[%s260 + $0x48] sm:$0xff] %vm340, %v1705
        %1719 = vst.msk [vmem:[%s260 + $0x50] sm:$0xff] %vm340, %v1020
        %1720 = vst.msk [vmem:[%s260 + $0x58] sm:$0xff] %vm340, %v1706
        %1721 = vst.msk [vmem:[%s260 + $0x60] sm:$0xff] %vm340, %v1021
        %1722 = vst.msk [vmem:[%s260 + $0x68] sm:$0xff] %vm340, %v1707
        %1723 = vst.msk [vmem:[%s260 + $0x70] sm:$0xff] %vm340, %v1022
        %1724 = vst.msk [vmem:[%s260 + $0x78] sm:$0xff] %vm340, %v1708
        %s1725 = sand.u32 %s160, 1
        %s1726 = scalar_lea.sflag [#allocation4], %s1725
        %s1727 = sand.u32 %s160, 1
        %s1728 = smul.addr %s1727, 128
        %s1729 = scalar_lea.vmem [#allocation5], %s1728
        // Predicated region
        $region49: #{tpu_custom_call.1} parent=43 // pred_check
          %p1730 = pneg %p170
        $region50: #{tpu_custom_call.1} parent=43 // pred_check_branch
          %1732 = sbr.rel (%p1730) target = $region52
        $region51: #{tpu_custom_call.1} parent=43 // pred_region
          %s1733 = smul.u32 8, %s21
          %s1735 = ssub.s32 2048, 2048
          %1736 = vsyncadd %s1726, %s1735
          %s1737 = smul.addr %s1733, 2
          %s1738 = smul.addr %s1737, 128
          %s1739 = scalar_lea.hbm %s6, %s1738
          %s1740 = sshll.u32 %s1729, 4
          %s1741 = int_to_ptr.vmem [resolvable:$true] %s1740
          %1746 = dma.vmem_to_hbm [thread:$0]  %s1741, 2048, %s1739, %s1726, 128, 128, 8
        $region52: #{tpu_custom_call.1} parent=43 // pred_fallthru
          _
      $region44: #{tpu_custom_call.1} parent=5 // pred_fallthru
        _
      %p1747 = scmp.le.s32.totalorder 2, %s16
      // Predicated region
      $region53: #{tpu_custom_call.1} parent=5 // pred_check
        %p1748 = pneg %p1747
      $region54: #{tpu_custom_call.1} parent=5 // pred_check_branch
        %1750 = sbr.rel (%p1748) target = $region56
      $region55: #{tpu_custom_call.1} parent=5 // pred_region
        %s1751 = ssub.s32 %s16, 2
        // Predicated region
        $region57: #{tpu_custom_call.1} parent=55 // pred_check
          %p1752 = pneg %p176
        $region58: #{tpu_custom_call.1} parent=55 // pred_check_branch
          %1754 = sbr.rel (%p1752) target = $region60
        $region59: #{tpu_custom_call.1} parent=55 // pred_region
          %s1755 = sand.u32 %s161, 1
          %s1756 = scalar_lea.sflag [#allocation4], %s1755
          %s1757 = sand.u32 %s161, 1
          %s1758 = smul.addr %s1757, 128
          %s1759 = scalar_lea.vmem [#allocation5], %s1758
          %1760 = dma.done %s1756, 2048
        $region60: #{tpu_custom_call.1} parent=55 // pred_fallthru
          _
      $region56: #{tpu_custom_call.1} parent=5 // pred_fallthru
        _
    $region6: #{tpu_custom_call.1} parent=1 // loop_footer
      %s20 = sadd.s32 1, %s16
    $region7: #{tpu_custom_call.1} parent=1 // loop_footer_branch
      %15 = sbr.rel target = $region3
    $region8: #{tpu_custom_call.1} parent=1 // loop_exit
      _
    %1761 = vsyncpa [#allocation3], 1
    %s1762 = scalar_lea.sflag [#allocation3], 1
    %1763 = vsyncpa %s1762, 1
    %1764 = vsyncpa [#allocation4], 1
    %s1765 = scalar_lea.sflag [#allocation4], 1
    %1766 = vsyncpa %s1765, 1

</llo_original>
